<compile_context>
chip_gen: v7x
topology: tpu7x:2x2x1
jax: 0.10.0
libtpu: 0.0.40
codegen_flags: <defaults>
</compile_context>

<pallas_src>
import functools

import numpy as np
import jax
import jax.numpy as jnp
from jax import lax
from jax.experimental import pallas as pl
from jax.experimental.pallas import tpu as pltpu


def _cd_kernel(s_ref, t_ref, tgt_ref, out_ref, *, mxu_dtype):
    """Blocks: s_ref/t_ref (N, CB, L) in the original layout, tgt_ref (N, CB, 1),
    out_ref (1, 1, 1) = sum of the CB per-class losses of this grid step."""
    f32 = jnp.float32
    n = s_ref.shape[0]
    cb = s_ref.shape[1]
    el = s_ref.shape[2]

    mask = tgt_ref[...].astype(f32)                                   # (N, CB, 1)

    # Diagonal mask: boolean, built once, shared by both branches.
    not_eye = (lax.broadcasted_iota(jnp.int32, (n, n), 0)
               != lax.broadcasted_iota(jnp.int32, (n, n), 1))         # (N, N)
    # Ones row: lane-oriented squared norms via a batched MXU contraction
    # (avoids an in-kernel transpose and the old gram-diagonal extraction).
    ones_row = jnp.ones((cb, 1, el), f32)                             # (CB, 1, L)

    # TODO(synk): the torch-side dynamic row compaction x[~(x==0).all(1)] and its
    # shape-mismatch error when student/teacher row sets differ have no
    # static-shape Pallas equivalent; they are approximated with validity masks.
    def normalized_pdist(x_ref):
        # Mask positives in the original (N, CB, L) layout, then relayout the
        # tile to class-major (CB, N, L) in VMEM (no wrapper HBM transpose).
        xm = x_ref[...].astype(f32) * mask                            # (N, CB, L)
        x = pltpu.einshape("ncl->cnl", xm)                            # (CB, N, L)
        xq = x.astype(mxu_dtype)
        gram = lax.dot_general(xq, xq, (((2,), (2,)), ((0,), (0,))),
                               preferred_element_type=f32)            # (CB, N, N)
        x2 = x * x                                                    # f32
        sq_sub = jnp.sum(x2, axis=2, keepdims=True)                   # (CB, N, 1)
        sq_lane = lax.dot_general(ones_row, x2, (((2,), (2,)), ((0,), (0,))),
                                  preferred_element_type=f32)         # (CB, 1, N)
        d2 = jnp.maximum(sq_sub + sq_lane - 2.0 * gram, 0.0)

        # Rows surviving `x[~(x == 0).all(1)]`: positive AND not all-zero, i.e.
        # nonzero f32 squared norm of the masked row (matches the reference).
        valid_sub = sq_sub > 0.0                                      # (CB, N, 1)
        valid_lane = sq_lane > 0.0                                    # (CB, 1, N)
        keep = valid_sub & valid_lane & not_eye                       # (CB, N, N)
        d = jnp.where(keep, jnp.sqrt(d2), 0.0)

        # d / d[d > 0].mean(); invalid pairs are zero and excluded from the mean.
        pos = (d > 0.0).astype(f32)
        tot = jnp.sum(jnp.sum(d, axis=2, keepdims=True), axis=1, keepdims=True)
        cnt = jnp.sum(jnp.sum(pos, axis=2, keepdims=True), axis=1, keepdims=True)
        inv_mean = cnt / jnp.where(tot > 0.0, tot, 1.0)               # (CB, 1, 1)
        return d * inv_mean, valid_sub

    d_s, valid_s = normalized_pdist(s_ref)
    d_t, valid_t = normalized_pdist(t_ref)

    # smooth_l1_loss(d_s, d_t, reduction='mean') over the k x k valid-pair
    # matrix.  Invalid / diagonal entries are 0 - 0 = 0 and contribute nothing.
    diff = d_s - d_t
    adiff = jnp.abs(diff)
    huber = jnp.where(adiff < 1.0, 0.5 * diff * diff, adiff - 0.5)
    hsum = jnp.sum(jnp.sum(huber, axis=2, keepdims=True), axis=1, keepdims=True)
    k = jnp.sum((valid_s & valid_t).astype(f32), axis=1, keepdims=True)  # (CB,1,1)
    per_class = hsum / jnp.maximum(k * k, 1.0)                        # (CB, 1, 1)

    # Classes with < 2 positives (and padded classes) have no valid pair, so
    # per_class is already exactly 0: the torch `n_pos > 1` gate is implicit.
    out_ref[...] = jnp.sum(per_class, axis=0, keepdims=True)          # (1, 1, 1)


def _vmem_capacity_bytes():
    try:
        info = pltpu.get_tpu_info()
    except Exception:
        return 64 << 20
    for name in ("vmem_capacity_bytes", "vmem_size_bytes", "vmem_bytes"):
        v = getattr(info, name, None)
        try:
            v = int(v)
        except (TypeError, ValueError):
            continue
        if v > 0:
            return v
    return 64 << 20


def _plan(N, C, L, class_block):
    """Pick (class_block, num_blocks, padded_C, vmem_limit_bytes) per chip."""
    cap = _vmem_capacity_bytes()
    if cap <= (64 << 20):
        # v7x-like: 64 MiB physical VMEM, 2 TensorCores -> leave headroom and
        # keep at least 2 grid steps so the "parallel" axis feeds both TCs.
        vmem_limit = min(cap - (12 << 20), 52 << 20)
        min_blocks = 2
    else:
        # v5e / v6e: 128 MiB physical, single TensorCore -> raise the scoped
        # limit well above the default and use the largest block that fits.
        vmem_limit = min(int(cap * 0.78), 100 << 20)
        min_blocks = 1
    vmem_limit = max(int(vmem_limit), 16 << 20)

    c8 = ((C + 7) // 8) * 8
    if class_block is not None:
        cb = max(8, ((int(class_block) + 7) // 8) * 8)
    else:
        # Conservative per-class VMEM estimate using padded (8, 128) tiles.
        n_p = max(8, ((N + 7) // 8) * 8)
        l_p = ((L + 127) // 128) * 128
        nn_p = ((N + 127) // 128) * 128
        bytes_per_class = (
            2 * 2 * n_p * l_p * 4      # student+teacher input blocks, double-buffered
            + 2 * n_p * 128 * 4        # targets block (lane dim 1 pads to 128), x2 buffers
            + 4 * n_p * l_p * 4        # masked / relayouted / squared / bf16 copies
            + 8 * n_p * nn_p * 4       # live (N, N) f32 temporaries across both branches
            + 16 * 8 * 128 * 4         # per-class small statistics (padded vregs)
        )
        budget = int(vmem_limit * 0.7)
        cb = max(8, (budget // bytes_per_class) // 8 * 8)
        if min_blocks > 1 and c8 >= 8 * min_blocks:
            cb = min(cb, max(8, ((c8 // min_blocks) // 8) * 8))
    cb = int(min(cb, c8))
    num_blocks = -(-C // cb)
    return cb, num_blocks, num_blocks * cb, int(vmem_limit)


def cd_loss(le_student, le_teacher, targets, *, class_block=None,
            mxu_dtype=jnp.bfloat16, interpret=False):
    """le_student, le_teacher: (N, C, L); targets: (N, C) 0/1.  Returns scalar."""
    N, C, L = le_student.shape
    cb, num_blocks, c_pad, vmem_limit = _plan(N, C, L, class_block)

    s = le_student
    t = le_teacher
    tg = targets.astype(jnp.float32)[..., None]                       # (N, C, 1)
    if c_pad != C:
        pad = ((0, 0), (0, c_pad - C), (0, 0))
        s = jnp.pad(s, pad)
        t = jnp.pad(t, pad)
        tg = jnp.pad(tg, pad)   # padded classes: zero targets -> exactly zero loss

    kernel = functools.partial(_cd_kernel, mxu_dtype=mxu_dtype)
    per_block = pl.pallas_call(
        kernel,
        out_shape=jax.ShapeDtypeStruct((num_blocks, 1, 1), jnp.float32),
        grid_spec=pltpu.PrefetchScalarGridSpec(
            num_scalar_prefetch=0,
            grid=(num_blocks,),
            in_specs=[
                pl.BlockSpec((N, cb, L), lambda c: (0, c, 0)),
                pl.BlockSpec((N, cb, L), lambda c: (0, c, 0)),
                pl.BlockSpec((N, cb, 1), lambda c: (0, c, 0)),
            ],
            out_specs=pl.BlockSpec((1, 1, 1), lambda c: (c, 0, 0)),
        ),
        compiler_params=pltpu.CompilerParams(
            dimension_semantics=("parallel",),
            vmem_limit_bytes=vmem_limit),
        interpret=interpret,
    )(s, t, tg)
    return jnp.sum(per_block)


def _numpy_reference(le_student, le_teacher, targets):
    s = np.asarray(le_student, np.float32)
    t = np.asarray(le_teacher, np.float32)
    tg = np.asarray(targets, np.float32)
    N, C, L = s.shape

    def pdist(x):
        sq = (x * x).sum(1)
        d2 = np.maximum(sq[:, None] + sq[None, :] - 2.0 * x @ x.T, 0.0)
        d = np.sqrt(d2)
        np.fill_diagonal(d, 0.0)
        return d

    loss = 0.0
    for c in range(C):
        if tg[:, c].sum() > 1:
            sc = s[:, c, :] * tg[:, c:c + 1]
            tc = t[:, c, :] * tg[:, c:c + 1]
            sc = sc[~(sc == 0).all(1)]
            tc = tc[~(tc == 0).all(1)]
            ds, dt = pdist(sc), pdist(tc)
            ds = ds / ds[ds > 0].mean()
            dt = dt / dt[dt > 0].mean()
            diff = ds - dt
            ad = np.abs(diff)
            loss += np.where(ad < 1.0, 0.5 * diff * diff, ad - 0.5).mean()
    return float(loss)


if __name__ == "__main__":
    # Case 1: single class block (exercises class padding 6 -> 8).
    k1, k2, k3 = jax.random.split(jax.random.PRNGKey(0), 3)
    N, C, L = 8, 6, 16                          # batch, classes, embedding length
    s1 = jax.random.normal(k1, (N, C, L), jnp.float32)
    t1 = jax.random.normal(k2, (N, C, L), jnp.float32)
    y1 = (jax.random.uniform(k3, (N, C)) > 0.5).astype(jnp.float32)
    out1 = jax.block_until_ready(cd_loss(s1, t1, y1))
    ref1 = _numpy_reference(s1, t1, y1)
    # Tolerance is loose on purpose: the gram uses bf16 MXU inputs (f32 accum);
    # the reference is exact f32.
    assert np.isfinite(float(out1)), out1
    assert abs(float(out1) - ref1) <= 3e-2 * max(1.0, abs(ref1)), (float(out1), ref1)

    # Case 2: several class blocks (exercises the parallel grid + per-block sums).
    k4, k5, k6 = jax.random.split(jax.random.PRNGKey(1), 3)
    N2, C2, L2 = 8, 20, 16
    s2 = jax.random.normal(k4, (N2, C2, L2), jnp.float32)
    t2 = jax.random.normal(k5, (N2, C2, L2), jnp.float32)
    y2 = (jax.random.uniform(k6, (N2, C2)) > 0.5).astype(jnp.float32)
    out2 = jax.block_until_ready(cd_loss(s2, t2, y2, class_block=8))
    ref2 = _numpy_reference(s2, t2, y2)
    assert np.isfinite(float(out2)), out2
    assert abs(float(out2) - ref2) <= 3e-2 * max(1.0, abs(ref2)), (float(out2), ref2)

    print("KERNEL_OK")
</pallas_src>

<mosaic_0001>
module attributes {stable_mosaic.version = 11 : i64} {
  func.func @_cd_kernel(%arg0: i32, %arg1: memref<8x8x16xf32, #tpu.memory_space<vmem>>, %arg2: memref<8x8x16xf32, #tpu.memory_space<vmem>>, %arg3: memref<8x8x1xf32, #tpu.memory_space<vmem>>, %arg4: memref<1x1x1xf32, #tpu.memory_space<vmem>>) attributes {dimension_semantics = [#tpu.dimension_semantics<parallel>], iteration_bounds = array<i64: 1>, scalar_prefetch = 0 : i64, scratch_operands = 0 : i64, tpu.core_type = #tpu.core_type<tc>, window_params = [{transform_indices = @transform_0, window_bounds = array<i64: 8, 8, 16>}, {transform_indices = @transform_1, window_bounds = array<i64: 8, 8, 16>}, {transform_indices = @transform_2, window_bounds = array<i64: 8, 8, 1>}, {transform_indices = @transform_3, window_bounds = array<i64: 1, 1, 1>}]} {
    %c0 = arith.constant 0 : index
    %c0_0 = arith.constant 0 : index
    %c0_1 = arith.constant 0 : index
    %0 = vector.load %arg3[%c0, %c0_0, %c0_1] : memref<8x8x1xf32, #tpu.memory_space<vmem>>, vector<8x8x1xf32>
    %1 = tpu.iota {dimensions = array<i32: 0>} : vector<8x8xi32>
    %2 = tpu.iota {dimensions = array<i32: 1>} : vector<8x8xi32>
    %3 = arith.cmpi ne, %1, %2 : vector<8x8xi32>
    %cst = arith.constant 1.000000e+00 : f32
    %4 = vector.broadcast %cst : f32 to vector<8x1x16xf32>
    %c0_2 = arith.constant 0 : index
    %c0_3 = arith.constant 0 : index
    %c0_4 = arith.constant 0 : index
    %5 = vector.load %arg1[%c0_2, %c0_3, %c0_4] : memref<8x8x16xf32, #tpu.memory_space<vmem>>, vector<8x8x16xf32>
    %6 = vector.broadcast %0 : vector<8x8x1xf32> to vector<8x8x16xf32>
    %7 = arith.mulf %5, %6 : vector<8x8x16xf32>
    %8 = tpu.transpose %7, [1, 0, 2] : vector<8x8x16xf32> -> vector<8x8x16xf32>
    %9 = arith.truncf %8 : vector<8x8x16xf32> to vector<8x8x16xbf16>
    %cst_5 = arith.constant dense<0.000000e+00> : vector<8x8x8xf32>
    %10 = tpu.matmul %9, %9, %cst_5 {dimension_numbers = #tpu.dot_dimension_numbers<[2], [2], [1], [1], [0, 0, 0, 1, 1, 1], [0], [0]>} : vector<8x8x16xbf16>, vector<8x8x16xbf16>, vector<8x8x8xf32> -> vector<8x8x8xf32>
    %11 = arith.mulf %8, %8 : vector<8x8x16xf32>
    %cst_6 = arith.constant dense<0.000000e+00> : vector<8x8xf32>
    %12 = vector.multi_reduction <add>, %11, %cst_6 [2] : vector<8x8x16xf32> to vector<8x8xf32>
    %13 = vector.shape_cast %12 : vector<8x8xf32> to vector<8x8x1xf32>
    %cst_7 = arith.constant dense<0.000000e+00> : vector<8x1x8xf32>
    %14 = tpu.matmul %4, %11, %cst_7 {dimension_numbers = #tpu.dot_dimension_numbers<[2], [2], [1], [1], [0, 0, 0, 1, 1, 1], [0], [0]>} : vector<8x1x16xf32>, vector<8x8x16xf32>, vector<8x1x8xf32> -> vector<8x1x8xf32>
    %15 = vector.broadcast %13 : vector<8x8x1xf32> to vector<8x8x8xf32>
    %16 = vector.broadcast %14 : vector<8x1x8xf32> to vector<8x8x8xf32>
    %17 = arith.addf %15, %16 : vector<8x8x8xf32>
    %cst_8 = arith.constant 2.000000e+00 : f32
    %18 = vector.broadcast %cst_8 : f32 to vector<8x8x8xf32>
    %19 = arith.mulf %18, %10 : vector<8x8x8xf32>
    %20 = arith.subf %17, %19 : vector<8x8x8xf32>
    %cst_9 = arith.constant 0.000000e+00 : f32
    %21 = vector.broadcast %cst_9 : f32 to vector<8x8x8xf32>
    %22 = arith.maximumf %20, %21 : vector<8x8x8xf32>
    %cst_10 = arith.constant 0.000000e+00 : f32
    %23 = vector.broadcast %cst_10 : f32 to vector<8x8x1xf32>
    %24 = arith.cmpf ogt, %13, %23 : vector<8x8x1xf32>
    %cst_11 = arith.constant 0.000000e+00 : f32
    %25 = vector.broadcast %cst_11 : f32 to vector<8x1x8xf32>
    %26 = arith.cmpf ogt, %14, %25 : vector<8x1x8xf32>
    %27 = vector.broadcast %24 : vector<8x8x1xi1> to vector<8x8x8xi1>
    %28 = vector.broadcast %26 : vector<8x1x8xi1> to vector<8x8x8xi1>
    %29 = arith.andi %27, %28 : vector<8x8x8xi1>
    %30 = vector.shape_cast %3 : vector<8x8xi1> to vector<1x8x8xi1>
    %31 = vector.broadcast %30 : vector<1x8x8xi1> to vector<8x8x8xi1>
    %32 = arith.andi %29, %31 : vector<8x8x8xi1>
    %33 = math.sqrt %22 : vector<8x8x8xf32>
    %cst_12 = arith.constant 0.000000e+00 : f32
    %34 = vector.broadcast %cst_12 : f32 to vector<8x8x8xf32>
    %35 = arith.select %32, %33, %34 : vector<8x8x8xi1>, vector<8x8x8xf32>
    %cst_13 = arith.constant 0.000000e+00 : f32
    %36 = vector.broadcast %cst_13 : f32 to vector<8x8x8xf32>
    %37 = arith.cmpf ogt, %35, %36 : vector<8x8x8xf32>
    %38 = arith.extui %37 : vector<8x8x8xi1> to vector<8x8x8xi32>
    %39 = arith.sitofp %38 : vector<8x8x8xi32> to vector<8x8x8xf32>
    %cst_14 = arith.constant dense<0.000000e+00> : vector<8x8xf32>
    %40 = vector.multi_reduction <add>, %35, %cst_14 [2] : vector<8x8x8xf32> to vector<8x8xf32>
    %41 = vector.shape_cast %40 : vector<8x8xf32> to vector<8x8x1xf32>
    %cst_15 = arith.constant dense<0.000000e+00> : vector<8x1xf32>
    %42 = vector.multi_reduction <add>, %41, %cst_15 [1] : vector<8x8x1xf32> to vector<8x1xf32>
    %43 = vector.shape_cast %42 : vector<8x1xf32> to vector<8x1x1xf32>
    %cst_16 = arith.constant dense<0.000000e+00> : vector<8x8xf32>
    %44 = vector.multi_reduction <add>, %39, %cst_16 [2] : vector<8x8x8xf32> to vector<8x8xf32>
    %45 = vector.shape_cast %44 : vector<8x8xf32> to vector<8x8x1xf32>
    %cst_17 = arith.constant dense<0.000000e+00> : vector<8x1xf32>
    %46 = vector.multi_reduction <add>, %45, %cst_17 [1] : vector<8x8x1xf32> to vector<8x1xf32>
    %47 = vector.shape_cast %46 : vector<8x1xf32> to vector<8x1x1xf32>
    %cst_18 = arith.constant 0.000000e+00 : f32
    %48 = vector.broadcast %cst_18 : f32 to vector<8x1x1xf32>
    %49 = arith.cmpf ogt, %43, %48 : vector<8x1x1xf32>
    %cst_19 = arith.constant 1.000000e+00 : f32
    %50 = vector.broadcast %cst_19 : f32 to vector<8x1x1xf32>
    %51 = arith.select %49, %43, %50 : vector<8x1x1xi1>, vector<8x1x1xf32>
    %52 = arith.divf %47, %51 : vector<8x1x1xf32>
    %53 = vector.broadcast %52 : vector<8x1x1xf32> to vector<8x8x8xf32>
    %54 = arith.mulf %35, %53 : vector<8x8x8xf32>
    %c0_20 = arith.constant 0 : index
    %c0_21 = arith.constant 0 : index
    %c0_22 = arith.constant 0 : index
    %55 = vector.load %arg2[%c0_20, %c0_21, %c0_22] : memref<8x8x16xf32, #tpu.memory_space<vmem>>, vector<8x8x16xf32>
    %56 = vector.broadcast %0 : vector<8x8x1xf32> to vector<8x8x16xf32>
    %57 = arith.mulf %55, %56 : vector<8x8x16xf32>
    %58 = tpu.transpose %57, [1, 0, 2] : vector<8x8x16xf32> -> vector<8x8x16xf32>
    %59 = arith.truncf %58 : vector<8x8x16xf32> to vector<8x8x16xbf16>
    %cst_23 = arith.constant dense<0.000000e+00> : vector<8x8x8xf32>
    %60 = tpu.matmul %59, %59, %cst_23 {dimension_numbers = #tpu.dot_dimension_numbers<[2], [2], [1], [1], [0, 0, 0, 1, 1, 1], [0], [0]>} : vector<8x8x16xbf16>, vector<8x8x16xbf16>, vector<8x8x8xf32> -> vector<8x8x8xf32>
    %61 = arith.mulf %58, %58 : vector<8x8x16xf32>
    %cst_24 = arith.constant dense<0.000000e+00> : vector<8x8xf32>
    %62 = vector.multi_reduction <add>, %61, %cst_24 [2] : vector<8x8x16xf32> to vector<8x8xf32>
    %63 = vector.shape_cast %62 : vector<8x8xf32> to vector<8x8x1xf32>
    %cst_25 = arith.constant dense<0.000000e+00> : vector<8x1x8xf32>
    %64 = tpu.matmul %4, %61, %cst_25 {dimension_numbers = #tpu.dot_dimension_numbers<[2], [2], [1], [1], [0, 0, 0, 1, 1, 1], [0], [0]>} : vector<8x1x16xf32>, vector<8x8x16xf32>, vector<8x1x8xf32> -> vector<8x1x8xf32>
    %65 = vector.broadcast %63 : vector<8x8x1xf32> to vector<8x8x8xf32>
    %66 = vector.broadcast %64 : vector<8x1x8xf32> to vector<8x8x8xf32>
    %67 = arith.addf %65, %66 : vector<8x8x8xf32>
    %cst_26 = arith.constant 2.000000e+00 : f32
    %68 = vector.broadcast %cst_26 : f32 to vector<8x8x8xf32>
    %69 = arith.mulf %68, %60 : vector<8x8x8xf32>
    %70 = arith.subf %67, %69 : vector<8x8x8xf32>
    %cst_27 = arith.constant 0.000000e+00 : f32
    %71 = vector.broadcast %cst_27 : f32 to vector<8x8x8xf32>
    %72 = arith.maximumf %70, %71 : vector<8x8x8xf32>
    %cst_28 = arith.constant 0.000000e+00 : f32
    %73 = vector.broadcast %cst_28 : f32 to vector<8x8x1xf32>
    %74 = arith.cmpf ogt, %63, %73 : vector<8x8x1xf32>
    %cst_29 = arith.constant 0.000000e+00 : f32
    %75 = vector.broadcast %cst_29 : f32 to vector<8x1x8xf32>
    %76 = arith.cmpf ogt, %64, %75 : vector<8x1x8xf32>
    %77 = vector.broadcast %74 : vector<8x8x1xi1> to vector<8x8x8xi1>
    %78 = vector.broadcast %76 : vector<8x1x8xi1> to vector<8x8x8xi1>
    %79 = arith.andi %77, %78 : vector<8x8x8xi1>
    %80 = vector.shape_cast %3 : vector<8x8xi1> to vector<1x8x8xi1>
    %81 = vector.broadcast %80 : vector<1x8x8xi1> to vector<8x8x8xi1>
    %82 = arith.andi %79, %81 : vector<8x8x8xi1>
    %83 = math.sqrt %72 : vector<8x8x8xf32>
    %cst_30 = arith.constant 0.000000e+00 : f32
    %84 = vector.broadcast %cst_30 : f32 to vector<8x8x8xf32>
    %85 = arith.select %82, %83, %84 : vector<8x8x8xi1>, vector<8x8x8xf32>
    %cst_31 = arith.constant 0.000000e+00 : f32
    %86 = vector.broadcast %cst_31 : f32 to vector<8x8x8xf32>
    %87 = arith.cmpf ogt, %85, %86 : vector<8x8x8xf32>
    %88 = arith.extui %87 : vector<8x8x8xi1> to vector<8x8x8xi32>
    %89 = arith.sitofp %88 : vector<8x8x8xi32> to vector<8x8x8xf32>
    %cst_32 = arith.constant dense<0.000000e+00> : vector<8x8xf32>
    %90 = vector.multi_reduction <add>, %85, %cst_32 [2] : vector<8x8x8xf32> to vector<8x8xf32>
    %91 = vector.shape_cast %90 : vector<8x8xf32> to vector<8x8x1xf32>
    %cst_33 = arith.constant dense<0.000000e+00> : vector<8x1xf32>
    %92 = vector.multi_reduction <add>, %91, %cst_33 [1] : vector<8x8x1xf32> to vector<8x1xf32>
    %93 = vector.shape_cast %92 : vector<8x1xf32> to vector<8x1x1xf32>
    %cst_34 = arith.constant dense<0.000000e+00> : vector<8x8xf32>
    %94 = vector.multi_reduction <add>, %89, %cst_34 [2] : vector<8x8x8xf32> to vector<8x8xf32>
    %95 = vector.shape_cast %94 : vector<8x8xf32> to vector<8x8x1xf32>
    %cst_35 = arith.constant dense<0.000000e+00> : vector<8x1xf32>
    %96 = vector.multi_reduction <add>, %95, %cst_35 [1] : vector<8x8x1xf32> to vector<8x1xf32>
    %97 = vector.shape_cast %96 : vector<8x1xf32> to vector<8x1x1xf32>
    %cst_36 = arith.constant 0.000000e+00 : f32
    %98 = vector.broadcast %cst_36 : f32 to vector<8x1x1xf32>
    %99 = arith.cmpf ogt, %93, %98 : vector<8x1x1xf32>
    %cst_37 = arith.constant 1.000000e+00 : f32
    %100 = vector.broadcast %cst_37 : f32 to vector<8x1x1xf32>
    %101 = arith.select %99, %93, %100 : vector<8x1x1xi1>, vector<8x1x1xf32>
    %102 = arith.divf %97, %101 : vector<8x1x1xf32>
    %103 = vector.broadcast %102 : vector<8x1x1xf32> to vector<8x8x8xf32>
    %104 = arith.mulf %85, %103 : vector<8x8x8xf32>
    %105 = arith.subf %54, %104 : vector<8x8x8xf32>
    %106 = math.absf %105 : vector<8x8x8xf32>
    %cst_38 = arith.constant 1.000000e+00 : f32
    %107 = vector.broadcast %cst_38 : f32 to vector<8x8x8xf32>
    %108 = arith.cmpf olt, %106, %107 : vector<8x8x8xf32>
    %cst_39 = arith.constant 5.000000e-01 : f32
    %109 = vector.broadcast %cst_39 : f32 to vector<8x8x8xf32>
    %110 = arith.mulf %109, %105 : vector<8x8x8xf32>
    %111 = arith.mulf %110, %105 : vector<8x8x8xf32>
    %cst_40 = arith.constant 5.000000e-01 : f32
    %112 = vector.broadcast %cst_40 : f32 to vector<8x8x8xf32>
    %113 = arith.subf %106, %112 : vector<8x8x8xf32>
    %114 = arith.select %108, %111, %113 : vector<8x8x8xi1>, vector<8x8x8xf32>
    %cst_41 = arith.constant dense<0.000000e+00> : vector<8x8xf32>
    %115 = vector.multi_reduction <add>, %114, %cst_41 [2] : vector<8x8x8xf32> to vector<8x8xf32>
    %116 = vector.shape_cast %115 : vector<8x8xf32> to vector<8x8x1xf32>
    %cst_42 = arith.constant dense<0.000000e+00> : vector<8x1xf32>
    %117 = vector.multi_reduction <add>, %116, %cst_42 [1] : vector<8x8x1xf32> to vector<8x1xf32>
    %118 = vector.shape_cast %117 : vector<8x1xf32> to vector<8x1x1xf32>
    %119 = arith.andi %24, %74 : vector<8x8x1xi1>
    %120 = arith.extui %119 : vector<8x8x1xi1> to vector<8x8x1xi32>
    %121 = arith.sitofp %120 : vector<8x8x1xi32> to vector<8x8x1xf32>
    %cst_43 = arith.constant dense<0.000000e+00> : vector<8x1xf32>
    %122 = vector.multi_reduction <add>, %121, %cst_43 [1] : vector<8x8x1xf32> to vector<8x1xf32>
    %123 = vector.shape_cast %122 : vector<8x1xf32> to vector<8x1x1xf32>
    %124 = arith.mulf %123, %123 : vector<8x1x1xf32>
    %cst_44 = arith.constant 1.000000e+00 : f32
    %125 = vector.broadcast %cst_44 : f32 to vector<8x1x1xf32>
    %126 = arith.maximumf %124, %125 : vector<8x1x1xf32>
    %127 = arith.divf %118, %126 : vector<8x1x1xf32>
    %cst_45 = arith.constant dense<0.000000e+00> : vector<1x1xf32>
    %128 = vector.multi_reduction <add>, %127, %cst_45 [0] : vector<8x1x1xf32> to vector<1x1xf32>
    %129 = vector.shape_cast %128 : vector<1x1xf32> to vector<1x1x1xf32>
    %c0_46 = arith.constant 0 : index
    %c0_47 = arith.constant 0 : index
    %c0_48 = arith.constant 0 : index
    %130 = vector.load %arg4[%c0_46, %c0_47, %c0_48] : memref<1x1x1xf32, #tpu.memory_space<vmem>>, vector<1x1x1xf32>
    tpu.vector_store %arg4[%c0_46, %c0_47, %c0_48], %129 {strides = array<i32>} : memref<1x1x1xf32, #tpu.memory_space<vmem>>, vector<1x1x1xf32>,
    return
  }
  func.func @transform_0(%arg0: i32) -> (i32, i32, i32) {
    %c0_i32 = arith.constant 0 : i32
    %c0_i32_0 = arith.constant 0 : i32
    %c0_i32_1 = arith.constant 0 : i32
    return %c0_i32, %arg0, %c0_i32_0 : i32, i32, i32
  }
  func.func @transform_1(%arg0: i32) -> (i32, i32, i32) {
    %c0_i32 = arith.constant 0 : i32
    %c0_i32_0 = arith.constant 0 : i32
    %c0_i32_1 = arith.constant 0 : i32
    return %c0_i32, %arg0, %c0_i32_0 : i32, i32, i32
  }
  func.func @transform_2(%arg0: i32) -> (i32, i32, i32) {
    %c0_i32 = arith.constant 0 : i32
    %c0_i32_0 = arith.constant 0 : i32
    %c0_i32_1 = arith.constant 0 : i32
    return %c0_i32, %arg0, %c0_i32_0 : i32, i32, i32
  }
  func.func @transform_3(%arg0: i32) -> (i32, i32, i32) {
    %c0_i32 = arith.constant 0 : i32
    %c0_i32_0 = arith.constant 0 : i32
    %c0_i32_1 = arith.constant 0 : i32
    return %arg0, %c0_i32, %c0_i32_0 : i32, i32, i32
  }
}

</mosaic_0001>

<llo_original>
// kernel: tpu_custom_call.1
$region0: #{tpu_custom_call.1}
  #allocation0 [shape = 'u32[]', space=smem, size = 0x4, offset = 0x4, fixed_abs, tag = 'smem constant byte address 0x4 - core index']
  #allocation1 [shape = 'u32[144,128]{1,0:T(1,128)}', space=vmem, size = 0x12000, scoped, tag = 'internal scratch']
  %s0 = inlined_call_operand.vmem [shape: f32[8,8,16], index: 0, kind: input, shape index: {}]
  %s1 = inlined_call_operand.hbm [shape: f32[8,8,16], index: 1, kind: input, shape index: {}]
  %s2 = inlined_call_operand.vmem [shape: f32[8,8,1], index: 2, kind: input, shape index: {}]
  %s3 = inlined_call_operand.hbm [shape: f32[1,1,1], index: 3, kind: output, shape index: {}]
  %s4 = sld [smem:[#allocation0]]
  $region26: #{tpu_custom_call.1} parent=0
    _
  %s6 = ssub.s32 1, %s4
  %s7 = scalar_select 0, %s6, %s4
  $region1: #{tpu_custom_call.1} parent=0
    #allocation2 [shape = 'u8[32768]{0}', space=vmem, size = 0x8000, scoped, tag = 'input window, operand 1, single buffered']
    #allocation3 [shape = 's32[1]{0}', space=sflag, size = 0x4, scoped, tag = 'scoped memory for tpu_custom_call.1']
    #allocation4 [shape = 's32[1]{0}', space=sflag, size = 0x4, scoped, tag = 'scoped memory for tpu_custom_call.1']
    #allocation5 [shape = 'u8[512]{0}', space=vmem, size = 0x400, scoped, tag = 'output window, operand 0, single buffered']
    %8 = vsyncpa [#allocation3], 0
    %9 = vsyncpa [#allocation4], 0
    // Predicated region
    $region2: #{tpu_custom_call.1} parent=1 // pred_check
      _
    $region3: #{tpu_custom_call.1} parent=1 // pred_check_branch
      %11 = sbr.rel (0) target = $region5
    $region4: #{tpu_custom_call.1} parent=1 // pred_region
      _
    $region5: #{tpu_custom_call.1} parent=1 // pred_fallthru
      _
    // Predicated region
    $region6: #{tpu_custom_call.1} parent=1 // pred_check
      _
    $region7: #{tpu_custom_call.1} parent=1 // pred_check_branch
      %13 = sbr.rel (0) target = $region9
    $region8: #{tpu_custom_call.1} parent=1 // pred_region
      %s15 = ssub.s32 1024, 1024
      %16 = vsyncadd [#allocation3], %s15
      %s17 = sshll.u32 [#allocation2], 4
      %s18 = int_to_ptr.vmem [resolvable:$true] %s17
      %23 = dma.hbm_to_vmem [thread:$0]  %s1, 1024, %s18, [#allocation3], 128, 128, 8
    $region9: #{tpu_custom_call.1} parent=1 // pred_fallthru
      _
    // Predicated region
    $region10: #{tpu_custom_call.1} parent=1 // pred_check
      _
    $region11: #{tpu_custom_call.1} parent=1 // pred_check_branch
      %25 = sbr.rel (0) target = $region13
    $region12: #{tpu_custom_call.1} parent=1 // pred_region
      _
    $region13: #{tpu_custom_call.1} parent=1 // pred_fallthru
      _
    // Predicated region
    $region14: #{tpu_custom_call.1} parent=1 // pred_check
      _
    $region15: #{tpu_custom_call.1} parent=1 // pred_check_branch
      %27 = sbr.rel (0) target = $region17
    $region16: #{tpu_custom_call.1} parent=1 // pred_region
      %28 = dma.done [#allocation3], 1024
    $region17: #{tpu_custom_call.1} parent=1 // pred_fallthru
      _
    %v30 = vld [vmem:[%s2] sm:$0xff]
    %v31 = vld [vmem:[%s2 + $0x8] sm:$0xff]
    %v32 = vld [vmem:[%s2 + $0x10] sm:$0xff]
    %v33 = vld [vmem:[%s2 + $0x18] sm:$0xff]
    %v34 = vld [vmem:[%s2 + $0x20] sm:$0xff]
    %v35 = vld [vmem:[%s2 + $0x28] sm:$0xff]
    %v36 = vld [vmem:[%s2 + $0x30] sm:$0xff]
    %v37 = vld [vmem:[%s2 + $0x38] sm:$0xff]
    %v38 = vlaneseq
    %v39 = vshrl.u32 %v38, 7
    %v40 = vlaneseq
    %v41 = vand.u32 %v40, 127
    %vm42 = vcmp.ne.s32.totalorder %v39, %v41
    %v43 = vld [vmem:[%s0] sm:$0xff]
    %v44 = vld [vmem:[%s0 + $0x8] sm:$0xff]
    %v45 = vld [vmem:[%s0 + $0x10] sm:$0xff]
    %v46 = vld [vmem:[%s0 + $0x18] sm:$0xff]
    %v47 = vld [vmem:[%s0 + $0x20] sm:$0xff]
    %v48 = vld [vmem:[%s0 + $0x28] sm:$0xff]
    %v49 = vld [vmem:[%s0 + $0x30] sm:$0xff]
    %v50 = vld [vmem:[%s0 + $0x38] sm:$0xff]
    %52 = vset.pattern.permute.xlu0 0
    %53 = vperm.xlu0 %52, %v30
    %v54 = vpop.permute.xlu0 %53
    %57 = vset.pattern.permute.xlu0 0
    %58 = vperm.xlu0 %57, %v31
    %v59 = vpop.permute.xlu0 %58
    %62 = vset.pattern.permute.xlu0 0
    %63 = vperm.xlu0 %62, %v32
    %v64 = vpop.permute.xlu0 %63
    %67 = vset.pattern.permute.xlu0 0
    %68 = vperm.xlu0 %67, %v33
    %v69 = vpop.permute.xlu0 %68
    %72 = vset.pattern.permute.xlu0 0
    %73 = vperm.xlu0 %72, %v34
    %v74 = vpop.permute.xlu0 %73
    %77 = vset.pattern.permute.xlu0 0
    %78 = vperm.xlu0 %77, %v35
    %v79 = vpop.permute.xlu0 %78
    %82 = vset.pattern.permute.xlu0 0
    %83 = vperm.xlu0 %82, %v36
    %v84 = vpop.permute.xlu0 %83
    %87 = vset.pattern.permute.xlu0 0
    %88 = vperm.xlu0 %87, %v37
    %v89 = vpop.permute.xlu0 %88
    %v91 = vmul.f32 %v43, %v54
    %v92 = vmul.f32 %v44, %v59
    %v93 = vmul.f32 %v45, %v64
    %v94 = vmul.f32 %v46, %v69
    %v95 = vmul.f32 %v47, %v74
    %v96 = vmul.f32 %v48, %v79
    %v97 = vmul.f32 %v49, %v84
    %v98 = vmul.f32 %v50, %v89
    %v99 = vcombine.low %v91, %v93
    %v100 = vcombine.high %v91, %v93
    %v102 = vunpack.c.l.s4 1983009808
    %v103 = vunpack.c.0.s8 %v102
    %v104 = vlaneseq
    %v105 = vshrl.u32 %v104, 7
    %v106 = vsub.s32 %v103, %v105
    %v107 = vrot.slane %v99, %v106
    %v109 = vunpack.c.l.s4 1983009808
    %v110 = vunpack.c.0.s8 %v109
    %v111 = vlaneseq
    %v112 = vshrl.u32 %v111, 7
    %v113 = vsub.s32 %v110, %v112
    %v114 = vrot.slane %v100, %v113
    %v115 = vcombine.low %v92, %v94
    %v116 = vcombine.high %v92, %v94
    %v118 = vunpack.c.l.s4 1983009808
    %v119 = vunpack.c.0.s8 %v118
    %v120 = vlaneseq
    %v121 = vshrl.u32 %v120, 7
    %v122 = vsub.s32 %v119, %v121
    %v123 = vrot.slane %v115, %v122
    %v125 = vunpack.c.l.s4 1983009808
    %v126 = vunpack.c.0.s8 %v125
    %v127 = vlaneseq
    %v128 = vshrl.u32 %v127, 7
    %v129 = vsub.s32 %v126, %v128
    %v130 = vrot.slane %v116, %v129
    %v131 = vcombine.low %v95, %v97
    %v132 = vcombine.high %v95, %v97
    %v134 = vunpack.c.l.s4 1983009808
    %v135 = vunpack.c.0.s8 %v134
    %v136 = vlaneseq
    %v137 = vshrl.u32 %v136, 7
    %v138 = vsub.s32 %v135, %v137
    %v139 = vrot.slane %v131, %v138
    %v141 = vunpack.c.l.s4 1983009808
    %v142 = vunpack.c.0.s8 %v141
    %v143 = vlaneseq
    %v144 = vshrl.u32 %v143, 7
    %v145 = vsub.s32 %v142, %v144
    %v146 = vrot.slane %v132, %v145
    %v147 = vcombine.low %v96, %v98
    %v148 = vcombine.high %v96, %v98
    %v150 = vunpack.c.l.s4 1983009808
    %v151 = vunpack.c.0.s8 %v150
    %v152 = vlaneseq
    %v153 = vshrl.u32 %v152, 7
    %v154 = vsub.s32 %v151, %v153
    %v155 = vrot.slane %v147, %v154
    %v157 = vunpack.c.l.s4 1983009808
    %v158 = vunpack.c.0.s8 %v157
    %v159 = vlaneseq
    %v160 = vshrl.u32 %v159, 7
    %v161 = vsub.s32 %v158, %v160
    %v162 = vrot.slane %v148, %v161
    %v163 = vcombine.low %v107, %v123
    %v164 = vcombine.high %v107, %v123
    %v166 = vunpack.c.l.s4 1934713408
    %v167 = vunpack.c.0.s8 %v166
    %v168 = vlaneseq
    %v169 = vshrl.u32 %v168, 7
    %v170 = vsub.s32 %v167, %v169
    %v171 = vrot.slane %v163, %v170
    %v173 = vunpack.c.l.s4 1934713408
    %v174 = vunpack.c.0.s8 %v173
    %v175 = vlaneseq
    %v176 = vshrl.u32 %v175, 7
    %v177 = vsub.s32 %v174, %v176
    %v178 = vrot.slane %v164, %v177
    %v179 = vcombine.low %v114, %v130
    %v180 = vcombine.high %v114, %v130
    %v182 = vunpack.c.l.s4 1934713408
    %v183 = vunpack.c.0.s8 %v182
    %v184 = vlaneseq
    %v185 = vshrl.u32 %v184, 7
    %v186 = vsub.s32 %v183, %v185
    %v187 = vrot.slane %v179, %v186
    %v189 = vunpack.c.l.s4 1934713408
    %v190 = vunpack.c.0.s8 %v189
    %v191 = vlaneseq
    %v192 = vshrl.u32 %v191, 7
    %v193 = vsub.s32 %v190, %v192
    %v194 = vrot.slane %v180, %v193
    %v195 = vcombine.low %v139, %v155
    %v196 = vcombine.high %v139, %v155
    %v198 = vunpack.c.l.s4 1934713408
    %v199 = vunpack.c.0.s8 %v198
    %v200 = vlaneseq
    %v201 = vshrl.u32 %v200, 7
    %v202 = vsub.s32 %v199, %v201
    %v203 = vrot.slane %v195, %v202
    %v205 = vunpack.c.l.s4 1934713408
    %v206 = vunpack.c.0.s8 %v205
    %v207 = vlaneseq
    %v208 = vshrl.u32 %v207, 7
    %v209 = vsub.s32 %v206, %v208
    %v210 = vrot.slane %v196, %v209
    %v211 = vcombine.low %v146, %v162
    %v212 = vcombine.high %v146, %v162
    %v214 = vunpack.c.l.s4 1934713408
    %v215 = vunpack.c.0.s8 %v214
    %v216 = vlaneseq
    %v217 = vshrl.u32 %v216, 7
    %v218 = vsub.s32 %v215, %v217
    %v219 = vrot.slane %v211, %v218
    %v221 = vunpack.c.l.s4 1934713408
    %v222 = vunpack.c.0.s8 %v221
    %v223 = vlaneseq
    %v224 = vshrl.u32 %v223, 7
    %v225 = vsub.s32 %v222, %v224
    %v226 = vrot.slane %v212, %v225
    %v227 = vcombine.low %v171, %v203
    %v228 = vcombine.high %v171, %v203
    %v229 = vcombine.low %v178, %v210
    %v230 = vcombine.high %v178, %v210
    %v231 = vcombine.low %v187, %v219
    %v232 = vcombine.high %v187, %v219
    %v233 = vcombine.low %v194, %v226
    %v234 = vcombine.high %v194, %v226
    %v235 = vpack.c.bf16 %v227, %v227
    %v236 = vpack.c.bf16 %v228, %v228
    %v237 = vpack.c.bf16 %v229, %v229
    %v238 = vpack.c.bf16 %v230, %v230
    %v239 = vpack.c.bf16 %v231, %v231
    %v240 = vpack.c.bf16 %v232, %v232
    %v241 = vpack.c.bf16 %v233, %v233
    %v242 = vpack.c.bf16 %v234, %v234
    %vm243 = vcmask 130048
    %v245 = vsel %vm243, %v235, 0
    %247 = vmatprep.subr.bf16.mxu0 0
    %248 = vmatpush1.bf16.xpose.msra.mxu0 %v245
    %249 = vmatprep.subr.bf16.mxu0 0
    %250 = vmatpush1.bf16.xpose.msra.mxu0 0
    %251 = vmatprep.subr.bf16.mxu0 0
    %252 = vmatpush1.bf16.xpose.msra.mxu0 0
    %253 = vmatprep.subr.bf16.mxu0 0
    %254 = vmatpush1.bf16.xpose.msra.mxu0 0
    %255 = vmatprep.subr.bf16.mxu0 0
    %256 = vmatpush1.bf16.xpose.msra.mxu0 0
    %257 = vmatprep.subr.bf16.mxu0 0
    %258 = vmatpush1.bf16.xpose.msra.mxu0 0
    %259 = vmatprep.subr.bf16.mxu0 0
    %260 = vmatpush1.bf16.xpose.msra.mxu0 0
    %261 = vmatprep.subr.bf16.mxu0 0
    %262 = vmatpush1.bf16.xpose.msra.mxu0 0
    %263 = vmatprep.subr.bf16.mxu0 0
    %264 = vmatpush1.bf16.xpose.msra.mxu0 0
    %265 = vmatprep.subr.bf16.mxu0 0
    %266 = vmatpush1.bf16.xpose.msra.mxu0 0
    %267 = vmatprep.subr.bf16.mxu0 0
    %268 = vmatpush1.bf16.xpose.msra.mxu0 0
    %269 = vmatprep.subr.bf16.mxu0 0
    %270 = vmatpush1.bf16.xpose.msra.mxu0 0
    %271 = vmatprep.subr.bf16.mxu0 0
    %272 = vmatpush1.bf16.xpose.msra.mxu0 0
    %273 = vmatprep.subr.bf16.mxu0 0
    %274 = vmatpush1.bf16.xpose.msra.mxu0 0
    %275 = vmatprep.subr.bf16.mxu0 0
    %276 = vmatpush1.bf16.xpose.msra.mxu0 0
    %277 = vmatprep.subr.bf16.mxu0 0
    %278 = vmatpush1.bf16.xpose.msra.mxu0 0
    %279 = vmatprep.mubr.bf16.mxu0 0
    %280 = vmatmul.mubr.bf16.gmra.mrb[0].mxu0 %v245
    %v281 = vpop.f32.mrb[0].mxu0
    %v282 = vadd.f32 0.0, %v281
    %v283 = vpop.f32.mrb[0].mxu0
    %v284 = vpop.f32.mrb[0].mxu0
    %v285 = vpop.f32.mrb[0].mxu0
    %286 = vdwg.mxu0
    %v288 = vsel %vm243, %v236, 0
    %290 = vmatprep.subr.bf16.mxu0 0
    %291 = vmatpush1.bf16.xpose.msra.mxu0 %v288
    %292 = vmatprep.subr.bf16.mxu0 0
    %293 = vmatpush1.bf16.xpose.msra.mxu0 0
    %294 = vmatprep.subr.bf16.mxu0 0
    %295 = vmatpush1.bf16.xpose.msra.mxu0 0
    %296 = vmatprep.subr.bf16.mxu0 0
    %297 = vmatpush1.bf16.xpose.msra.mxu0 0
    %298 = vmatprep.subr.bf16.mxu0 0
    %299 = vmatpush1.bf16.xpose.msra.mxu0 0
    %300 = vmatprep.subr.bf16.mxu0 0
    %301 = vmatpush1.bf16.xpose.msra.mxu0 0
    %302 = vmatprep.subr.bf16.mxu0 0
    %303 = vmatpush1.bf16.xpose.msra.mxu0 0
    %304 = vmatprep.subr.bf16.mxu0 0
    %305 = vmatpush1.bf16.xpose.msra.mxu0 0
    %306 = vmatprep.subr.bf16.mxu0 0
    %307 = vmatpush1.bf16.xpose.msra.mxu0 0
    %308 = vmatprep.subr.bf16.mxu0 0
    %309 = vmatpush1.bf16.xpose.msra.mxu0 0
    %310 = vmatprep.subr.bf16.mxu0 0
    %311 = vmatpush1.bf16.xpose.msra.mxu0 0
    %312 = vmatprep.subr.bf16.mxu0 0
    %313 = vmatpush1.bf16.xpose.msra.mxu0 0
    %314 = vmatprep.subr.bf16.mxu0 0
    %315 = vmatpush1.bf16.xpose.msra.mxu0 0
    %316 = vmatprep.subr.bf16.mxu0 0
    %317 = vmatpush1.bf16.xpose.msra.mxu0 0
    %318 = vmatprep.subr.bf16.mxu0 0
    %319 = vmatpush1.bf16.xpose.msra.mxu0 0
    %320 = vmatprep.subr.bf16.mxu0 0
    %321 = vmatpush1.bf16.xpose.msra.mxu0 0
    %322 = vmatprep.mubr.bf16.mxu0 0
    %323 = vmatmul.mubr.bf16.gmra.mrb[0].mxu0 %v288
    %v324 = vpop.f32.mrb[0].mxu0
    %v325 = vadd.f32 0.0, %v324
    %v326 = vpop.f32.mrb[0].mxu0
    %v327 = vpop.f32.mrb[0].mxu0
    %v328 = vpop.f32.mrb[0].mxu0
    %329 = vdwg.mxu0
    %v331 = vsel %vm243, %v237, 0
    %333 = vmatprep.subr.bf16.mxu0 0
    %334 = vmatpush1.bf16.xpose.msra.mxu0 %v331
    %335 = vmatprep.subr.bf16.mxu0 0
    %336 = vmatpush1.bf16.xpose.msra.mxu0 0
    %337 = vmatprep.subr.bf16.mxu0 0
    %338 = vmatpush1.bf16.xpose.msra.mxu0 0
    %339 = vmatprep.subr.bf16.mxu0 0
    %340 = vmatpush1.bf16.xpose.msra.mxu0 0
    %341 = vmatprep.subr.bf16.mxu0 0
    %342 = vmatpush1.bf16.xpose.msra.mxu0 0
    %343 = vmatprep.subr.bf16.mxu0 0
    %344 = vmatpush1.bf16.xpose.msra.mxu0 0
    %345 = vmatprep.subr.bf16.mxu0 0
    %346 = vmatpush1.bf16.xpose.msra.mxu0 0
    %347 = vmatprep.subr.bf16.mxu0 0
    %348 = vmatpush1.bf16.xpose.msra.mxu0 0
    %349 = vmatprep.subr.bf16.mxu0 0
    %350 = vmatpush1.bf16.xpose.msra.mxu0 0
    %351 = vmatprep.subr.bf16.mxu0 0
    %352 = vmatpush1.bf16.xpose.msra.mxu0 0
    %353 = vmatprep.subr.bf16.mxu0 0
    %354 = vmatpush1.bf16.xpose.msra.mxu0 0
    %355 = vmatprep.subr.bf16.mxu0 0
    %356 = vmatpush1.bf16.xpose.msra.mxu0 0
    %357 = vmatprep.subr.bf16.mxu0 0
    %358 = vmatpush1.bf16.xpose.msra.mxu0 0
    %359 = vmatprep.subr.bf16.mxu0 0
    %360 = vmatpush1.bf16.xpose.msra.mxu0 0
    %361 = vmatprep.subr.bf16.mxu0 0
    %362 = vmatpush1.bf16.xpose.msra.mxu0 0
    %363 = vmatprep.subr.bf16.mxu0 0
    %364 = vmatpush1.bf16.xpose.msra.mxu0 0
    %365 = vmatprep.mubr.bf16.mxu0 0
    %366 = vmatmul.mubr.bf16.gmra.mrb[0].mxu0 %v331
    %v367 = vpop.f32.mrb[0].mxu0
    %v368 = vadd.f32 0.0, %v367
    %v369 = vpop.f32.mrb[0].mxu0
    %v370 = vpop.f32.mrb[0].mxu0
    %v371 = vpop.f32.mrb[0].mxu0
    %372 = vdwg.mxu0
    %v374 = vsel %vm243, %v238, 0
    %376 = vmatprep.subr.bf16.mxu0 0
    %377 = vmatpush1.bf16.xpose.msra.mxu0 %v374
    %378 = vmatprep.subr.bf16.mxu0 0
    %379 = vmatpush1.bf16.xpose.msra.mxu0 0
    %380 = vmatprep.subr.bf16.mxu0 0
    %381 = vmatpush1.bf16.xpose.msra.mxu0 0
    %382 = vmatprep.subr.bf16.mxu0 0
    %383 = vmatpush1.bf16.xpose.msra.mxu0 0
    %384 = vmatprep.subr.bf16.mxu0 0
    %385 = vmatpush1.bf16.xpose.msra.mxu0 0
    %386 = vmatprep.subr.bf16.mxu0 0
    %387 = vmatpush1.bf16.xpose.msra.mxu0 0
    %388 = vmatprep.subr.bf16.mxu0 0
    %389 = vmatpush1.bf16.xpose.msra.mxu0 0
    %390 = vmatprep.subr.bf16.mxu0 0
    %391 = vmatpush1.bf16.xpose.msra.mxu0 0
    %392 = vmatprep.subr.bf16.mxu0 0
    %393 = vmatpush1.bf16.xpose.msra.mxu0 0
    %394 = vmatprep.subr.bf16.mxu0 0
    %395 = vmatpush1.bf16.xpose.msra.mxu0 0
    %396 = vmatprep.subr.bf16.mxu0 0
    %397 = vmatpush1.bf16.xpose.msra.mxu0 0
    %398 = vmatprep.subr.bf16.mxu0 0
    %399 = vmatpush1.bf16.xpose.msra.mxu0 0
    %400 = vmatprep.subr.bf16.mxu0 0
    %401 = vmatpush1.bf16.xpose.msra.mxu0 0
    %402 = vmatprep.subr.bf16.mxu0 0
    %403 = vmatpush1.bf16.xpose.msra.mxu0 0
    %404 = vmatprep.subr.bf16.mxu0 0
    %405 = vmatpush1.bf16.xpose.msra.mxu0 0
    %406 = vmatprep.subr.bf16.mxu0 0
    %407 = vmatpush1.bf16.xpose.msra.mxu0 0
    %408 = vmatprep.mubr.bf16.mxu0 0
    %409 = vmatmul.mubr.bf16.gmra.mrb[0].mxu0 %v374
    %v410 = vpop.f32.mrb[0].mxu0
    %v411 = vadd.f32 0.0, %v410
    %v412 = vpop.f32.mrb[0].mxu0
    %v413 = vpop.f32.mrb[0].mxu0
    %v414 = vpop.f32.mrb[0].mxu0
    %415 = vdwg.mxu0
    %v417 = vsel %vm243, %v239, 0
    %419 = vmatprep.subr.bf16.mxu0 0
    %420 = vmatpush1.bf16.xpose.msra.mxu0 %v417
    %421 = vmatprep.subr.bf16.mxu0 0
    %422 = vmatpush1.bf16.xpose.msra.mxu0 0
    %423 = vmatprep.subr.bf16.mxu0 0
    %424 = vmatpush1.bf16.xpose.msra.mxu0 0
    %425 = vmatprep.subr.bf16.mxu0 0
    %426 = vmatpush1.bf16.xpose.msra.mxu0 0
    %427 = vmatprep.subr.bf16.mxu0 0
    %428 = vmatpush1.bf16.xpose.msra.mxu0 0
    %429 = vmatprep.subr.bf16.mxu0 0
    %430 = vmatpush1.bf16.xpose.msra.mxu0 0
    %431 = vmatprep.subr.bf16.mxu0 0
    %432 = vmatpush1.bf16.xpose.msra.mxu0 0
    %433 = vmatprep.subr.bf16.mxu0 0
    %434 = vmatpush1.bf16.xpose.msra.mxu0 0
    %435 = vmatprep.subr.bf16.mxu0 0
    %436 = vmatpush1.bf16.xpose.msra.mxu0 0
    %437 = vmatprep.subr.bf16.mxu0 0
    %438 = vmatpush1.bf16.xpose.msra.mxu0 0
    %439 = vmatprep.subr.bf16.mxu0 0
    %440 = vmatpush1.bf16.xpose.msra.mxu0 0
    %441 = vmatprep.subr.bf16.mxu0 0
    %442 = vmatpush1.bf16.xpose.msra.mxu0 0
    %443 = vmatprep.subr.bf16.mxu0 0
    %444 = vmatpush1.bf16.xpose.msra.mxu0 0
    %445 = vmatprep.subr.bf16.mxu0 0
    %446 = vmatpush1.bf16.xpose.msra.mxu0 0
    %447 = vmatprep.subr.bf16.mxu0 0
    %448 = vmatpush1.bf16.xpose.msra.mxu0 0
    %449 = vmatprep.subr.bf16.mxu0 0
    %450 = vmatpush1.bf16.xpose.msra.mxu0 0
    %451 = vmatprep.mubr.bf16.mxu0 0
    %452 = vmatmul.mubr.bf16.gmra.mrb[0].mxu0 %v417
    %v453 = vpop.f32.mrb[0].mxu0
    %v454 = vadd.f32 0.0, %v453
    %v455 = vpop.f32.mrb[0].mxu0
    %v456 = vpop.f32.mrb[0].mxu0
    %v457 = vpop.f32.mrb[0].mxu0
    %458 = vdwg.mxu0
    %v460 = vsel %vm243, %v240, 0
    %462 = vmatprep.subr.bf16.mxu0 0
    %463 = vmatpush1.bf16.xpose.msra.mxu0 %v460
    %464 = vmatprep.subr.bf16.mxu0 0
    %465 = vmatpush1.bf16.xpose.msra.mxu0 0
    %466 = vmatprep.subr.bf16.mxu0 0
    %467 = vmatpush1.bf16.xpose.msra.mxu0 0
    %468 = vmatprep.subr.bf16.mxu0 0
    %469 = vmatpush1.bf16.xpose.msra.mxu0 0
    %470 = vmatprep.subr.bf16.mxu0 0
    %471 = vmatpush1.bf16.xpose.msra.mxu0 0
    %472 = vmatprep.subr.bf16.mxu0 0
    %473 = vmatpush1.bf16.xpose.msra.mxu0 0
    %474 = vmatprep.subr.bf16.mxu0 0
    %475 = vmatpush1.bf16.xpose.msra.mxu0 0
    %476 = vmatprep.subr.bf16.mxu0 0
    %477 = vmatpush1.bf16.xpose.msra.mxu0 0
    %478 = vmatprep.subr.bf16.mxu0 0
    %479 = vmatpush1.bf16.xpose.msra.mxu0 0
    %480 = vmatprep.subr.bf16.mxu0 0
    %481 = vmatpush1.bf16.xpose.msra.mxu0 0
    %482 = vmatprep.subr.bf16.mxu0 0
    %483 = vmatpush1.bf16.xpose.msra.mxu0 0
    %484 = vmatprep.subr.bf16.mxu0 0
    %485 = vmatpush1.bf16.xpose.msra.mxu0 0
    %486 = vmatprep.subr.bf16.mxu0 0
    %487 = vmatpush1.bf16.xpose.msra.mxu0 0
    %488 = vmatprep.subr.bf16.mxu0 0
    %489 = vmatpush1.bf16.xpose.msra.mxu0 0
    %490 = vmatprep.subr.bf16.mxu0 0
    %491 = vmatpush1.bf16.xpose.msra.mxu0 0
    %492 = vmatprep.subr.bf16.mxu0 0
    %493 = vmatpush1.bf16.xpose.msra.mxu0 0
    %494 = vmatprep.mubr.bf16.mxu0 0
    %495 = vmatmul.mubr.bf16.gmra.mrb[0].mxu0 %v460
    %v496 = vpop.f32.mrb[0].mxu0
    %v497 = vadd.f32 0.0, %v496
    %v498 = vpop.f32.mrb[0].mxu0
    %v499 = vpop.f32.mrb[0].mxu0
    %v500 = vpop.f32.mrb[0].mxu0
    %501 = vdwg.mxu0
    %v503 = vsel %vm243, %v241, 0
    %505 = vmatprep.subr.bf16.mxu0 0
    %506 = vmatpush1.bf16.xpose.msra.mxu0 %v503
    %507 = vmatprep.subr.bf16.mxu0 0
    %508 = vmatpush1.bf16.xpose.msra.mxu0 0
    %509 = vmatprep.subr.bf16.mxu0 0
    %510 = vmatpush1.bf16.xpose.msra.mxu0 0
    %511 = vmatprep.subr.bf16.mxu0 0
    %512 = vmatpush1.bf16.xpose.msra.mxu0 0
    %513 = vmatprep.subr.bf16.mxu0 0
    %514 = vmatpush1.bf16.xpose.msra.mxu0 0
    %515 = vmatprep.subr.bf16.mxu0 0
    %516 = vmatpush1.bf16.xpose.msra.mxu0 0
    %517 = vmatprep.subr.bf16.mxu0 0
    %518 = vmatpush1.bf16.xpose.msra.mxu0 0
    %519 = vmatprep.subr.bf16.mxu0 0
    %520 = vmatpush1.bf16.xpose.msra.mxu0 0
    %521 = vmatprep.subr.bf16.mxu0 0
    %522 = vmatpush1.bf16.xpose.msra.mxu0 0
    %523 = vmatprep.subr.bf16.mxu0 0
    %524 = vmatpush1.bf16.xpose.msra.mxu0 0
    %525 = vmatprep.subr.bf16.mxu0 0
    %526 = vmatpush1.bf16.xpose.msra.mxu0 0
    %527 = vmatprep.subr.bf16.mxu0 0
    %528 = vmatpush1.bf16.xpose.msra.mxu0 0
    %529 = vmatprep.subr.bf16.mxu0 0
    %530 = vmatpush1.bf16.xpose.msra.mxu0 0
    %531 = vmatprep.subr.bf16.mxu0 0
    %532 = vmatpush1.bf16.xpose.msra.mxu0 0
    %533 = vmatprep.subr.bf16.mxu0 0
    %534 = vmatpush1.bf16.xpose.msra.mxu0 0
    %535 = vmatprep.subr.bf16.mxu0 0
    %536 = vmatpush1.bf16.xpose.msra.mxu0 0
    %537 = vmatprep.mubr.bf16.mxu0 0
    %538 = vmatmul.mubr.bf16.gmra.mrb[0].mxu0 %v503
    %v539 = vpop.f32.mrb[0].mxu0
    %v540 = vadd.f32 0.0, %v539
    %v541 = vpop.f32.mrb[0].mxu0
    %v542 = vpop.f32.mrb[0].mxu0
    %v543 = vpop.f32.mrb[0].mxu0
    %544 = vdwg.mxu0
    %v546 = vsel %vm243, %v242, 0
    %548 = vmatprep.subr.bf16.mxu0 0
    %549 = vmatpush1.bf16.xpose.msra.mxu0 %v546
    %550 = vmatprep.subr.bf16.mxu0 0
    %551 = vmatpush1.bf16.xpose.msra.mxu0 0
    %552 = vmatprep.subr.bf16.mxu0 0
    %553 = vmatpush1.bf16.xpose.msra.mxu0 0
    %554 = vmatprep.subr.bf16.mxu0 0
    %555 = vmatpush1.bf16.xpose.msra.mxu0 0
    %556 = vmatprep.subr.bf16.mxu0 0
    %557 = vmatpush1.bf16.xpose.msra.mxu0 0
    %558 = vmatprep.subr.bf16.mxu0 0
    %559 = vmatpush1.bf16.xpose.msra.mxu0 0
    %560 = vmatprep.subr.bf16.mxu0 0
    %561 = vmatpush1.bf16.xpose.msra.mxu0 0
    %562 = vmatprep.subr.bf16.mxu0 0
    %563 = vmatpush1.bf16.xpose.msra.mxu0 0
    %564 = vmatprep.subr.bf16.mxu0 0
    %565 = vmatpush1.bf16.xpose.msra.mxu0 0
    %566 = vmatprep.subr.bf16.mxu0 0
    %567 = vmatpush1.bf16.xpose.msra.mxu0 0
    %568 = vmatprep.subr.bf16.mxu0 0
    %569 = vmatpush1.bf16.xpose.msra.mxu0 0
    %570 = vmatprep.subr.bf16.mxu0 0
    %571 = vmatpush1.bf16.xpose.msra.mxu0 0
    %572 = vmatprep.subr.bf16.mxu0 0
    %573 = vmatpush1.bf16.xpose.msra.mxu0 0
    %574 = vmatprep.subr.bf16.mxu0 0
    %575 = vmatpush1.bf16.xpose.msra.mxu0 0
    %576 = vmatprep.subr.bf16.mxu0 0
    %577 = vmatpush1.bf16.xpose.msra.mxu0 0
    %578 = vmatprep.subr.bf16.mxu0 0
    %579 = vmatpush1.bf16.xpose.msra.mxu0 0
    %580 = vmatprep.mubr.bf16.mxu0 0
    %581 = vmatmul.mubr.bf16.gmra.mrb[0].mxu0 %v546
    %v582 = vpop.f32.mrb[0].mxu0
    %v583 = vadd.f32 0.0, %v582
    %v584 = vpop.f32.mrb[0].mxu0
    %v585 = vpop.f32.mrb[0].mxu0
    %v586 = vpop.f32.mrb[0].mxu0
    %587 = vdwg.mxu0
    %v588 = vmul.f32 %v227, %v227
    %v589 = vmul.f32 %v228, %v228
    %v590 = vmul.f32 %v229, %v229
    %v591 = vmul.f32 %v230, %v230
    %v592 = vmul.f32 %v231, %v231
    %v593 = vmul.f32 %v232, %v232
    %v594 = vmul.f32 %v233, %v233
    %v595 = vmul.f32 %v234, %v234
    %v596 = vsel %vm243, %v588, 0.0
    %597 = vadd.xlane.f32.xlu0 %v596
    %v598 = vpop.xlane.xlu0 %597
    %v599 = vsel %vm243, %v589, 0.0
    %600 = vadd.xlane.f32.xlu0 %v599
    %v601 = vpop.xlane.xlu0 %600
    %v602 = vsel %vm243, %v590, 0.0
    %603 = vadd.xlane.f32.xlu0 %v602
    %v604 = vpop.xlane.xlu0 %603
    %v605 = vsel %vm243, %v591, 0.0
    %606 = vadd.xlane.f32.xlu0 %v605
    %v607 = vpop.xlane.xlu0 %606
    %v608 = vsel %vm243, %v592, 0.0
    %609 = vadd.xlane.f32.xlu0 %v608
    %v610 = vpop.xlane.xlu0 %609
    %v611 = vsel %vm243, %v593, 0.0
    %612 = vadd.xlane.f32.xlu0 %v611
    %v613 = vpop.xlane.xlu0 %612
    %v614 = vsel %vm243, %v594, 0.0
    %615 = vadd.xlane.f32.xlu0 %v614
    %v616 = vpop.xlane.xlu0 %615
    %v617 = vsel %vm243, %v595, 0.0
    %618 = vadd.xlane.f32.xlu0 %v617
    %v619 = vpop.xlane.xlu0 %618
    %v621 = vsel %vm243, 1.0, 0
    %v624 = vsel %vm243, %v588, 0
    %626 = vmatprep.subr.mxu0 0.0
    %627 = vmatpush1.xpose.msra.mxu0 %v624
    %628 = vmatprep.subr.mxu0 0.0
    %629 = vmatpush1.xpose.msra.mxu0 0.0
    %630 = vmatprep.subr.mxu0 0.0
    %631 = vmatpush1.xpose.msra.mxu0 0.0
    %632 = vmatprep.subr.mxu0 0.0
    %633 = vmatpush1.xpose.msra.mxu0 0.0
    %634 = vmatprep.subr.mxu0 0.0
    %635 = vmatpush1.xpose.msra.mxu0 0.0
    %636 = vmatprep.subr.mxu0 0.0
    %637 = vmatpush1.xpose.msra.mxu0 0.0
    %638 = vmatprep.subr.mxu0 0.0
    %639 = vmatpush1.xpose.msra.mxu0 0.0
    %640 = vmatprep.subr.mxu0 0.0
    %641 = vmatpush1.xpose.msra.mxu0 0.0
    %642 = vmatprep.subr.mxu0 0.0
    %643 = vmatpush1.xpose.msra.mxu0 0.0
    %644 = vmatprep.subr.mxu0 0.0
    %645 = vmatpush1.xpose.msra.mxu0 0.0
    %646 = vmatprep.subr.mxu0 0.0
    %647 = vmatpush1.xpose.msra.mxu0 0.0
    %648 = vmatprep.subr.mxu0 0.0
    %649 = vmatpush1.xpose.msra.mxu0 0.0
    %650 = vmatprep.subr.mxu0 0.0
    %651 = vmatpush1.xpose.msra.mxu0 0.0
    %652 = vmatprep.subr.mxu0 0.0
    %653 = vmatpush1.xpose.msra.mxu0 0.0
    %654 = vmatprep.subr.mxu0 0.0
    %655 = vmatpush1.xpose.msra.mxu0 0.0
    %656 = vmatprep.subr.mxu0 0.0
    %657 = vmatpush1.xpose.msra.mxu0 0.0
    %658 = vmatprep.subr.mxu0 0.0
    %659 = vmatpush1.xpose.msra.mxu0 0.0
    %660 = vmatprep.subr.mxu0 0.0
    %661 = vmatpush1.xpose.msra.mxu0 0.0
    %662 = vmatprep.subr.mxu0 0.0
    %663 = vmatpush1.xpose.msra.mxu0 0.0
    %664 = vmatprep.subr.mxu0 0.0
    %665 = vmatpush1.xpose.msra.mxu0 0.0
    %666 = vmatprep.subr.mxu0 0.0
    %667 = vmatpush1.xpose.msra.mxu0 0.0
    %668 = vmatprep.subr.mxu0 0.0
    %669 = vmatpush1.xpose.msra.mxu0 0.0
    %670 = vmatprep.subr.mxu0 0.0
    %671 = vmatpush1.xpose.msra.mxu0 0.0
    %672 = vmatprep.subr.mxu0 0.0
    %673 = vmatpush1.xpose.msra.mxu0 0.0
    %674 = vmatprep.subr.mxu0 0.0
    %675 = vmatpush1.xpose.msra.mxu0 0.0
    %676 = vmatprep.subr.mxu0 0.0
    %677 = vmatpush1.xpose.msra.mxu0 0.0
    %678 = vmatprep.subr.mxu0 0.0
    %679 = vmatpush1.xpose.msra.mxu0 0.0
    %680 = vmatprep.subr.mxu0 0.0
    %681 = vmatpush1.xpose.msra.mxu0 0.0
    %682 = vmatprep.subr.mxu0 0.0
    %683 = vmatpush1.xpose.msra.mxu0 0.0
    %684 = vmatprep.subr.mxu0 0.0
    %685 = vmatpush1.xpose.msra.mxu0 0.0
    %686 = vmatprep.subr.mxu0 0.0
    %687 = vmatpush1.xpose.msra.mxu0 0.0
    %688 = vmatprep.subr.mxu0 0.0
    %689 = vmatpush1.xpose.msra.mxu0 0.0
    %690 = vmatprep.mubr.f32.mxu0 0.0
    %691 = vmatmul.mubr.f32.gmra.mrb[0].mxu0 %v621
    %v692 = vpop.f32.mrb[0].mxu0
    %v693 = vadd.f32 0.0, %v692
    %v694 = vpop.f32.mrb[0].mxu0
    %695 = vdwg.mxu0
    %v697 = vsel %vm243, %v589, 0
    %699 = vmatprep.subr.mxu0 0.0
    %700 = vmatpush1.xpose.msra.mxu0 %v697
    %701 = vmatprep.subr.mxu0 0.0
    %702 = vmatpush1.xpose.msra.mxu0 0.0
    %703 = vmatprep.subr.mxu0 0.0
    %704 = vmatpush1.xpose.msra.mxu0 0.0
    %705 = vmatprep.subr.mxu0 0.0
    %706 = vmatpush1.xpose.msra.mxu0 0.0
    %707 = vmatprep.subr.mxu0 0.0
    %708 = vmatpush1.xpose.msra.mxu0 0.0
    %709 = vmatprep.subr.mxu0 0.0
    %710 = vmatpush1.xpose.msra.mxu0 0.0
    %711 = vmatprep.subr.mxu0 0.0
    %712 = vmatpush1.xpose.msra.mxu0 0.0
    %713 = vmatprep.subr.mxu0 0.0
    %714 = vmatpush1.xpose.msra.mxu0 0.0
    %715 = vmatprep.subr.mxu0 0.0
    %716 = vmatpush1.xpose.msra.mxu0 0.0
    %717 = vmatprep.subr.mxu0 0.0
    %718 = vmatpush1.xpose.msra.mxu0 0.0
    %719 = vmatprep.subr.mxu0 0.0
    %720 = vmatpush1.xpose.msra.mxu0 0.0
    %721 = vmatprep.subr.mxu0 0.0
    %722 = vmatpush1.xpose.msra.mxu0 0.0
    %723 = vmatprep.subr.mxu0 0.0
    %724 = vmatpush1.xpose.msra.mxu0 0.0
    %725 = vmatprep.subr.mxu0 0.0
    %726 = vmatpush1.xpose.msra.mxu0 0.0
    %727 = vmatprep.subr.mxu0 0.0
    %728 = vmatpush1.xpose.msra.mxu0 0.0
    %729 = vmatprep.subr.mxu0 0.0
    %730 = vmatpush1.xpose.msra.mxu0 0.0
    %731 = vmatprep.subr.mxu0 0.0
    %732 = vmatpush1.xpose.msra.mxu0 0.0
    %733 = vmatprep.subr.mxu0 0.0
    %734 = vmatpush1.xpose.msra.mxu0 0.0
    %735 = vmatprep.subr.mxu0 0.0
    %736 = vmatpush1.xpose.msra.mxu0 0.0
    %737 = vmatprep.subr.mxu0 0.0
    %738 = vmatpush1.xpose.msra.mxu0 0.0
    %739 = vmatprep.subr.mxu0 0.0
    %740 = vmatpush1.xpose.msra.mxu0 0.0
    %741 = vmatprep.subr.mxu0 0.0
    %742 = vmatpush1.xpose.msra.mxu0 0.0
    %743 = vmatprep.subr.mxu0 0.0
    %744 = vmatpush1.xpose.msra.mxu0 0.0
    %745 = vmatprep.subr.mxu0 0.0
    %746 = vmatpush1.xpose.msra.mxu0 0.0
    %747 = vmatprep.subr.mxu0 0.0
    %748 = vmatpush1.xpose.msra.mxu0 0.0
    %749 = vmatprep.subr.mxu0 0.0
    %750 = vmatpush1.xpose.msra.mxu0 0.0
    %751 = vmatprep.subr.mxu0 0.0
    %752 = vmatpush1.xpose.msra.mxu0 0.0
    %753 = vmatprep.subr.mxu0 0.0
    %754 = vmatpush1.xpose.msra.mxu0 0.0
    %755 = vmatprep.subr.mxu0 0.0
    %756 = vmatpush1.xpose.msra.mxu0 0.0
    %757 = vmatprep.subr.mxu0 0.0
    %758 = vmatpush1.xpose.msra.mxu0 0.0
    %759 = vmatprep.subr.mxu0 0.0
    %760 = vmatpush1.xpose.msra.mxu0 0.0
    %761 = vmatprep.subr.mxu0 0.0
    %762 = vmatpush1.xpose.msra.mxu0 0.0
    %763 = vmatprep.mubr.f32.mxu0 0.0
    %764 = vmatmul.mubr.f32.gmra.mrb[0].mxu0 %v621
    %v765 = vpop.f32.mrb[0].mxu0
    %v766 = vadd.f32 0.0, %v765
    %v767 = vpop.f32.mrb[0].mxu0
    %768 = vdwg.mxu0
    %v770 = vsel %vm243, %v590, 0
    %772 = vmatprep.subr.mxu0 0.0
    %773 = vmatpush1.xpose.msra.mxu0 %v770
    %774 = vmatprep.subr.mxu0 0.0
    %775 = vmatpush1.xpose.msra.mxu0 0.0
    %776 = vmatprep.subr.mxu0 0.0
    %777 = vmatpush1.xpose.msra.mxu0 0.0
    %778 = vmatprep.subr.mxu0 0.0
    %779 = vmatpush1.xpose.msra.mxu0 0.0
    %780 = vmatprep.subr.mxu0 0.0
    %781 = vmatpush1.xpose.msra.mxu0 0.0
    %782 = vmatprep.subr.mxu0 0.0
    %783 = vmatpush1.xpose.msra.mxu0 0.0
    %784 = vmatprep.subr.mxu0 0.0
    %785 = vmatpush1.xpose.msra.mxu0 0.0
    %786 = vmatprep.subr.mxu0 0.0
    %787 = vmatpush1.xpose.msra.mxu0 0.0
    %788 = vmatprep.subr.mxu0 0.0
    %789 = vmatpush1.xpose.msra.mxu0 0.0
    %790 = vmatprep.subr.mxu0 0.0
    %791 = vmatpush1.xpose.msra.mxu0 0.0
    %792 = vmatprep.subr.mxu0 0.0
    %793 = vmatpush1.xpose.msra.mxu0 0.0
    %794 = vmatprep.subr.mxu0 0.0
    %795 = vmatpush1.xpose.msra.mxu0 0.0
    %796 = vmatprep.subr.mxu0 0.0
    %797 = vmatpush1.xpose.msra.mxu0 0.0
    %798 = vmatprep.subr.mxu0 0.0
    %799 = vmatpush1.xpose.msra.mxu0 0.0
    %800 = vmatprep.subr.mxu0 0.0
    %801 = vmatpush1.xpose.msra.mxu0 0.0
    %802 = vmatprep.subr.mxu0 0.0
    %803 = vmatpush1.xpose.msra.mxu0 0.0
    %804 = vmatprep.subr.mxu0 0.0
    %805 = vmatpush1.xpose.msra.mxu0 0.0
    %806 = vmatprep.subr.mxu0 0.0
    %807 = vmatpush1.xpose.msra.mxu0 0.0
    %808 = vmatprep.subr.mxu0 0.0
    %809 = vmatpush1.xpose.msra.mxu0 0.0
    %810 = vmatprep.subr.mxu0 0.0
    %811 = vmatpush1.xpose.msra.mxu0 0.0
    %812 = vmatprep.subr.mxu0 0.0
    %813 = vmatpush1.xpose.msra.mxu0 0.0
    %814 = vmatprep.subr.mxu0 0.0
    %815 = vmatpush1.xpose.msra.mxu0 0.0
    %816 = vmatprep.subr.mxu0 0.0
    %817 = vmatpush1.xpose.msra.mxu0 0.0
    %818 = vmatprep.subr.mxu0 0.0
    %819 = vmatpush1.xpose.msra.mxu0 0.0
    %820 = vmatprep.subr.mxu0 0.0
    %821 = vmatpush1.xpose.msra.mxu0 0.0
    %822 = vmatprep.subr.mxu0 0.0
    %823 = vmatpush1.xpose.msra.mxu0 0.0
    %824 = vmatprep.subr.mxu0 0.0
    %825 = vmatpush1.xpose.msra.mxu0 0.0
    %826 = vmatprep.subr.mxu0 0.0
    %827 = vmatpush1.xpose.msra.mxu0 0.0
    %828 = vmatprep.subr.mxu0 0.0
    %829 = vmatpush1.xpose.msra.mxu0 0.0
    %830 = vmatprep.subr.mxu0 0.0
    %831 = vmatpush1.xpose.msra.mxu0 0.0
    %832 = vmatprep.subr.mxu0 0.0
    %833 = vmatpush1.xpose.msra.mxu0 0.0
    %834 = vmatprep.subr.mxu0 0.0
    %835 = vmatpush1.xpose.msra.mxu0 0.0
    %836 = vmatprep.mubr.f32.mxu0 0.0
    %837 = vmatmul.mubr.f32.gmra.mrb[0].mxu0 %v621
    %v838 = vpop.f32.mrb[0].mxu0
    %v839 = vadd.f32 0.0, %v838
    %v840 = vpop.f32.mrb[0].mxu0
    %841 = vdwg.mxu0
    %v843 = vsel %vm243, %v591, 0
    %845 = vmatprep.subr.mxu0 0.0
    %846 = vmatpush1.xpose.msra.mxu0 %v843
    %847 = vmatprep.subr.mxu0 0.0
    %848 = vmatpush1.xpose.msra.mxu0 0.0
    %849 = vmatprep.subr.mxu0 0.0
    %850 = vmatpush1.xpose.msra.mxu0 0.0
    %851 = vmatprep.subr.mxu0 0.0
    %852 = vmatpush1.xpose.msra.mxu0 0.0
    %853 = vmatprep.subr.mxu0 0.0
    %854 = vmatpush1.xpose.msra.mxu0 0.0
    %855 = vmatprep.subr.mxu0 0.0
    %856 = vmatpush1.xpose.msra.mxu0 0.0
    %857 = vmatprep.subr.mxu0 0.0
    %858 = vmatpush1.xpose.msra.mxu0 0.0
    %859 = vmatprep.subr.mxu0 0.0
    %860 = vmatpush1.xpose.msra.mxu0 0.0
    %861 = vmatprep.subr.mxu0 0.0
    %862 = vmatpush1.xpose.msra.mxu0 0.0
    %863 = vmatprep.subr.mxu0 0.0
    %864 = vmatpush1.xpose.msra.mxu0 0.0
    %865 = vmatprep.subr.mxu0 0.0
    %866 = vmatpush1.xpose.msra.mxu0 0.0
    %867 = vmatprep.subr.mxu0 0.0
    %868 = vmatpush1.xpose.msra.mxu0 0.0
    %869 = vmatprep.subr.mxu0 0.0
    %870 = vmatpush1.xpose.msra.mxu0 0.0
    %871 = vmatprep.subr.mxu0 0.0
    %872 = vmatpush1.xpose.msra.mxu0 0.0
    %873 = vmatprep.subr.mxu0 0.0
    %874 = vmatpush1.xpose.msra.mxu0 0.0
    %875 = vmatprep.subr.mxu0 0.0
    %876 = vmatpush1.xpose.msra.mxu0 0.0
    %877 = vmatprep.subr.mxu0 0.0
    %878 = vmatpush1.xpose.msra.mxu0 0.0
    %879 = vmatprep.subr.mxu0 0.0
    %880 = vmatpush1.xpose.msra.mxu0 0.0
    %881 = vmatprep.subr.mxu0 0.0
    %882 = vmatpush1.xpose.msra.mxu0 0.0
    %883 = vmatprep.subr.mxu0 0.0
    %884 = vmatpush1.xpose.msra.mxu0 0.0
    %885 = vmatprep.subr.mxu0 0.0
    %886 = vmatpush1.xpose.msra.mxu0 0.0
    %887 = vmatprep.subr.mxu0 0.0
    %888 = vmatpush1.xpose.msra.mxu0 0.0
    %889 = vmatprep.subr.mxu0 0.0
    %890 = vmatpush1.xpose.msra.mxu0 0.0
    %891 = vmatprep.subr.mxu0 0.0
    %892 = vmatpush1.xpose.msra.mxu0 0.0
    %893 = vmatprep.subr.mxu0 0.0
    %894 = vmatpush1.xpose.msra.mxu0 0.0
    %895 = vmatprep.subr.mxu0 0.0
    %896 = vmatpush1.xpose.msra.mxu0 0.0
    %897 = vmatprep.subr.mxu0 0.0
    %898 = vmatpush1.xpose.msra.mxu0 0.0
    %899 = vmatprep.subr.mxu0 0.0
    %900 = vmatpush1.xpose.msra.mxu0 0.0
    %901 = vmatprep.subr.mxu0 0.0
    %902 = vmatpush1.xpose.msra.mxu0 0.0
    %903 = vmatprep.subr.mxu0 0.0
    %904 = vmatpush1.xpose.msra.mxu0 0.0
    %905 = vmatprep.subr.mxu0 0.0
    %906 = vmatpush1.xpose.msra.mxu0 0.0
    %907 = vmatprep.subr.mxu0 0.0
    %908 = vmatpush1.xpose.msra.mxu0 0.0
    %909 = vmatprep.mubr.f32.mxu0 0.0
    %910 = vmatmul.mubr.f32.gmra.mrb[0].mxu0 %v621
    %v911 = vpop.f32.mrb[0].mxu0
    %v912 = vadd.f32 0.0, %v911
    %v913 = vpop.f32.mrb[0].mxu0
    %914 = vdwg.mxu0
    %v916 = vsel %vm243, %v592, 0
    %918 = vmatprep.subr.mxu0 0.0
    %919 = vmatpush1.xpose.msra.mxu0 %v916
    %920 = vmatprep.subr.mxu0 0.0
    %921 = vmatpush1.xpose.msra.mxu0 0.0
    %922 = vmatprep.subr.mxu0 0.0
    %923 = vmatpush1.xpose.msra.mxu0 0.0
    %924 = vmatprep.subr.mxu0 0.0
    %925 = vmatpush1.xpose.msra.mxu0 0.0
    %926 = vmatprep.subr.mxu0 0.0
    %927 = vmatpush1.xpose.msra.mxu0 0.0
    %928 = vmatprep.subr.mxu0 0.0
    %929 = vmatpush1.xpose.msra.mxu0 0.0
    %930 = vmatprep.subr.mxu0 0.0
    %931 = vmatpush1.xpose.msra.mxu0 0.0
    %932 = vmatprep.subr.mxu0 0.0
    %933 = vmatpush1.xpose.msra.mxu0 0.0
    %934 = vmatprep.subr.mxu0 0.0
    %935 = vmatpush1.xpose.msra.mxu0 0.0
    %936 = vmatprep.subr.mxu0 0.0
    %937 = vmatpush1.xpose.msra.mxu0 0.0
    %938 = vmatprep.subr.mxu0 0.0
    %939 = vmatpush1.xpose.msra.mxu0 0.0
    %940 = vmatprep.subr.mxu0 0.0
    %941 = vmatpush1.xpose.msra.mxu0 0.0
    %942 = vmatprep.subr.mxu0 0.0
    %943 = vmatpush1.xpose.msra.mxu0 0.0
    %944 = vmatprep.subr.mxu0 0.0
    %945 = vmatpush1.xpose.msra.mxu0 0.0
    %946 = vmatprep.subr.mxu0 0.0
    %947 = vmatpush1.xpose.msra.mxu0 0.0
    %948 = vmatprep.subr.mxu0 0.0
    %949 = vmatpush1.xpose.msra.mxu0 0.0
    %950 = vmatprep.subr.mxu0 0.0
    %951 = vmatpush1.xpose.msra.mxu0 0.0
    %952 = vmatprep.subr.mxu0 0.0
    %953 = vmatpush1.xpose.msra.mxu0 0.0
    %954 = vmatprep.subr.mxu0 0.0
    %955 = vmatpush1.xpose.msra.mxu0 0.0
    %956 = vmatprep.subr.mxu0 0.0
    %957 = vmatpush1.xpose.msra.mxu0 0.0
    %958 = vmatprep.subr.mxu0 0.0
    %959 = vmatpush1.xpose.msra.mxu0 0.0
    %960 = vmatprep.subr.mxu0 0.0
    %961 = vmatpush1.xpose.msra.mxu0 0.0
    %962 = vmatprep.subr.mxu0 0.0
    %963 = vmatpush1.xpose.msra.mxu0 0.0
    %964 = vmatprep.subr.mxu0 0.0
    %965 = vmatpush1.xpose.msra.mxu0 0.0
    %966 = vmatprep.subr.mxu0 0.0
    %967 = vmatpush1.xpose.msra.mxu0 0.0
    %968 = vmatprep.subr.mxu0 0.0
    %969 = vmatpush1.xpose.msra.mxu0 0.0
    %970 = vmatprep.subr.mxu0 0.0
    %971 = vmatpush1.xpose.msra.mxu0 0.0
    %972 = vmatprep.subr.mxu0 0.0
    %973 = vmatpush1.xpose.msra.mxu0 0.0
    %974 = vmatprep.subr.mxu0 0.0
    %975 = vmatpush1.xpose.msra.mxu0 0.0
    %976 = vmatprep.subr.mxu0 0.0
    %977 = vmatpush1.xpose.msra.mxu0 0.0
    %978 = vmatprep.subr.mxu0 0.0
    %979 = vmatpush1.xpose.msra.mxu0 0.0
    %980 = vmatprep.subr.mxu0 0.0
    %981 = vmatpush1.xpose.msra.mxu0 0.0
    %982 = vmatprep.mubr.f32.mxu0 0.0
    %983 = vmatmul.mubr.f32.gmra.mrb[0].mxu0 %v621
    %v984 = vpop.f32.mrb[0].mxu0
    %v985 = vadd.f32 0.0, %v984
    %v986 = vpop.f32.mrb[0].mxu0
    %987 = vdwg.mxu0
    %v989 = vsel %vm243, %v593, 0
    %991 = vmatprep.subr.mxu0 0.0
    %992 = vmatpush1.xpose.msra.mxu0 %v989
    %993 = vmatprep.subr.mxu0 0.0
    %994 = vmatpush1.xpose.msra.mxu0 0.0
    %995 = vmatprep.subr.mxu0 0.0
    %996 = vmatpush1.xpose.msra.mxu0 0.0
    %997 = vmatprep.subr.mxu0 0.0
    %998 = vmatpush1.xpose.msra.mxu0 0.0
    %999 = vmatprep.subr.mxu0 0.0
    %1000 = vmatpush1.xpose.msra.mxu0 0.0
    %1001 = vmatprep.subr.mxu0 0.0
    %1002 = vmatpush1.xpose.msra.mxu0 0.0
    %1003 = vmatprep.subr.mxu0 0.0
    %1004 = vmatpush1.xpose.msra.mxu0 0.0
    %1005 = vmatprep.subr.mxu0 0.0
    %1006 = vmatpush1.xpose.msra.mxu0 0.0
    %1007 = vmatprep.subr.mxu0 0.0
    %1008 = vmatpush1.xpose.msra.mxu0 0.0
    %1009 = vmatprep.subr.mxu0 0.0
    %1010 = vmatpush1.xpose.msra.mxu0 0.0
    %1011 = vmatprep.subr.mxu0 0.0
    %1012 = vmatpush1.xpose.msra.mxu0 0.0
    %1013 = vmatprep.subr.mxu0 0.0
    %1014 = vmatpush1.xpose.msra.mxu0 0.0
    %1015 = vmatprep.subr.mxu0 0.0
    %1016 = vmatpush1.xpose.msra.mxu0 0.0
    %1017 = vmatprep.subr.mxu0 0.0
    %1018 = vmatpush1.xpose.msra.mxu0 0.0
    %1019 = vmatprep.subr.mxu0 0.0
    %1020 = vmatpush1.xpose.msra.mxu0 0.0
    %1021 = vmatprep.subr.mxu0 0.0
    %1022 = vmatpush1.xpose.msra.mxu0 0.0
    %1023 = vmatprep.subr.mxu0 0.0
    %1024 = vmatpush1.xpose.msra.mxu0 0.0
    %1025 = vmatprep.subr.mxu0 0.0
    %1026 = vmatpush1.xpose.msra.mxu0 0.0
    %1027 = vmatprep.subr.mxu0 0.0
    %1028 = vmatpush1.xpose.msra.mxu0 0.0
    %1029 = vmatprep.subr.mxu0 0.0
    %1030 = vmatpush1.xpose.msra.mxu0 0.0
    %1031 = vmatprep.subr.mxu0 0.0
    %1032 = vmatpush1.xpose.msra.mxu0 0.0
    %1033 = vmatprep.subr.mxu0 0.0
    %1034 = vmatpush1.xpose.msra.mxu0 0.0
    %1035 = vmatprep.subr.mxu0 0.0
    %1036 = vmatpush1.xpose.msra.mxu0 0.0
    %1037 = vmatprep.subr.mxu0 0.0
    %1038 = vmatpush1.xpose.msra.mxu0 0.0
    %1039 = vmatprep.subr.mxu0 0.0
    %1040 = vmatpush1.xpose.msra.mxu0 0.0
    %1041 = vmatprep.subr.mxu0 0.0
    %1042 = vmatpush1.xpose.msra.mxu0 0.0
    %1043 = vmatprep.subr.mxu0 0.0
    %1044 = vmatpush1.xpose.msra.mxu0 0.0
    %1045 = vmatprep.subr.mxu0 0.0
    %1046 = vmatpush1.xpose.msra.mxu0 0.0
    %1047 = vmatprep.subr.mxu0 0.0
    %1048 = vmatpush1.xpose.msra.mxu0 0.0
    %1049 = vmatprep.subr.mxu0 0.0
    %1050 = vmatpush1.xpose.msra.mxu0 0.0
    %1051 = vmatprep.subr.mxu0 0.0
    %1052 = vmatpush1.xpose.msra.mxu0 0.0
    %1053 = vmatprep.subr.mxu0 0.0
    %1054 = vmatpush1.xpose.msra.mxu0 0.0
    %1055 = vmatprep.mubr.f32.mxu0 0.0
    %1056 = vmatmul.mubr.f32.gmra.mrb[0].mxu0 %v621
    %v1057 = vpop.f32.mrb[0].mxu0
    %v1058 = vadd.f32 0.0, %v1057
    %v1059 = vpop.f32.mrb[0].mxu0
    %1060 = vdwg.mxu0
    %v1062 = vsel %vm243, %v594, 0
    %1064 = vmatprep.subr.mxu0 0.0
    %1065 = vmatpush1.xpose.msra.mxu0 %v1062
    %1066 = vmatprep.subr.mxu0 0.0
    %1067 = vmatpush1.xpose.msra.mxu0 0.0
    %1068 = vmatprep.subr.mxu0 0.0
    %1069 = vmatpush1.xpose.msra.mxu0 0.0
    %1070 = vmatprep.subr.mxu0 0.0
    %1071 = vmatpush1.xpose.msra.mxu0 0.0
    %1072 = vmatprep.subr.mxu0 0.0
    %1073 = vmatpush1.xpose.msra.mxu0 0.0
    %1074 = vmatprep.subr.mxu0 0.0
    %1075 = vmatpush1.xpose.msra.mxu0 0.0
    %1076 = vmatprep.subr.mxu0 0.0
    %1077 = vmatpush1.xpose.msra.mxu0 0.0
    %1078 = vmatprep.subr.mxu0 0.0
    %1079 = vmatpush1.xpose.msra.mxu0 0.0
    %1080 = vmatprep.subr.mxu0 0.0
    %1081 = vmatpush1.xpose.msra.mxu0 0.0
    %1082 = vmatprep.subr.mxu0 0.0
    %1083 = vmatpush1.xpose.msra.mxu0 0.0
    %1084 = vmatprep.subr.mxu0 0.0
    %1085 = vmatpush1.xpose.msra.mxu0 0.0
    %1086 = vmatprep.subr.mxu0 0.0
    %1087 = vmatpush1.xpose.msra.mxu0 0.0
    %1088 = vmatprep.subr.mxu0 0.0
    %1089 = vmatpush1.xpose.msra.mxu0 0.0
    %1090 = vmatprep.subr.mxu0 0.0
    %1091 = vmatpush1.xpose.msra.mxu0 0.0
    %1092 = vmatprep.subr.mxu0 0.0
    %1093 = vmatpush1.xpose.msra.mxu0 0.0
    %1094 = vmatprep.subr.mxu0 0.0
    %1095 = vmatpush1.xpose.msra.mxu0 0.0
    %1096 = vmatprep.subr.mxu0 0.0
    %1097 = vmatpush1.xpose.msra.mxu0 0.0
    %1098 = vmatprep.subr.mxu0 0.0
    %1099 = vmatpush1.xpose.msra.mxu0 0.0
    %1100 = vmatprep.subr.mxu0 0.0
    %1101 = vmatpush1.xpose.msra.mxu0 0.0
    %1102 = vmatprep.subr.mxu0 0.0
    %1103 = vmatpush1.xpose.msra.mxu0 0.0
    %1104 = vmatprep.subr.mxu0 0.0
    %1105 = vmatpush1.xpose.msra.mxu0 0.0
    %1106 = vmatprep.subr.mxu0 0.0
    %1107 = vmatpush1.xpose.msra.mxu0 0.0
    %1108 = vmatprep.subr.mxu0 0.0
    %1109 = vmatpush1.xpose.msra.mxu0 0.0
    %1110 = vmatprep.subr.mxu0 0.0
    %1111 = vmatpush1.xpose.msra.mxu0 0.0
    %1112 = vmatprep.subr.mxu0 0.0
    %1113 = vmatpush1.xpose.msra.mxu0 0.0
    %1114 = vmatprep.subr.mxu0 0.0
    %1115 = vmatpush1.xpose.msra.mxu0 0.0
    %1116 = vmatprep.subr.mxu0 0.0
    %1117 = vmatpush1.xpose.msra.mxu0 0.0
    %1118 = vmatprep.subr.mxu0 0.0
    %1119 = vmatpush1.xpose.msra.mxu0 0.0
    %1120 = vmatprep.subr.mxu0 0.0
    %1121 = vmatpush1.xpose.msra.mxu0 0.0
    %1122 = vmatprep.subr.mxu0 0.0
    %1123 = vmatpush1.xpose.msra.mxu0 0.0
    %1124 = vmatprep.subr.mxu0 0.0
    %1125 = vmatpush1.xpose.msra.mxu0 0.0
    %1126 = vmatprep.subr.mxu0 0.0
    %1127 = vmatpush1.xpose.msra.mxu0 0.0
    %1128 = vmatprep.mubr.f32.mxu0 0.0
    %1129 = vmatmul.mubr.f32.gmra.mrb[0].mxu0 %v621
    %v1130 = vpop.f32.mrb[0].mxu0
    %v1131 = vadd.f32 0.0, %v1130
    %v1132 = vpop.f32.mrb[0].mxu0
    %1133 = vdwg.mxu0
    %v1135 = vsel %vm243, %v595, 0
    %1137 = vmatprep.subr.mxu0 0.0
    %1138 = vmatpush1.xpose.msra.mxu0 %v1135
    %1139 = vmatprep.subr.mxu0 0.0
    %1140 = vmatpush1.xpose.msra.mxu0 0.0
    %1141 = vmatprep.subr.mxu0 0.0
    %1142 = vmatpush1.xpose.msra.mxu0 0.0
    %1143 = vmatprep.subr.mxu0 0.0
    %1144 = vmatpush1.xpose.msra.mxu0 0.0
    %1145 = vmatprep.subr.mxu0 0.0
    %1146 = vmatpush1.xpose.msra.mxu0 0.0
    %1147 = vmatprep.subr.mxu0 0.0
    %1148 = vmatpush1.xpose.msra.mxu0 0.0
    %1149 = vmatprep.subr.mxu0 0.0
    %1150 = vmatpush1.xpose.msra.mxu0 0.0
    %1151 = vmatprep.subr.mxu0 0.0
    %1152 = vmatpush1.xpose.msra.mxu0 0.0
    %1153 = vmatprep.subr.mxu0 0.0
    %1154 = vmatpush1.xpose.msra.mxu0 0.0
    %1155 = vmatprep.subr.mxu0 0.0
    %1156 = vmatpush1.xpose.msra.mxu0 0.0
    %1157 = vmatprep.subr.mxu0 0.0
    %1158 = vmatpush1.xpose.msra.mxu0 0.0
    %1159 = vmatprep.subr.mxu0 0.0
    %1160 = vmatpush1.xpose.msra.mxu0 0.0
    %1161 = vmatprep.subr.mxu0 0.0
    %1162 = vmatpush1.xpose.msra.mxu0 0.0
    %1163 = vmatprep.subr.mxu0 0.0
    %1164 = vmatpush1.xpose.msra.mxu0 0.0
    %1165 = vmatprep.subr.mxu0 0.0
    %1166 = vmatpush1.xpose.msra.mxu0 0.0
    %1167 = vmatprep.subr.mxu0 0.0
    %1168 = vmatpush1.xpose.msra.mxu0 0.0
    %1169 = vmatprep.subr.mxu0 0.0
    %1170 = vmatpush1.xpose.msra.mxu0 0.0
    %1171 = vmatprep.subr.mxu0 0.0
    %1172 = vmatpush1.xpose.msra.mxu0 0.0
    %1173 = vmatprep.subr.mxu0 0.0
    %1174 = vmatpush1.xpose.msra.mxu0 0.0
    %1175 = vmatprep.subr.mxu0 0.0
    %1176 = vmatpush1.xpose.msra.mxu0 0.0
    %1177 = vmatprep.subr.mxu0 0.0
    %1178 = vmatpush1.xpose.msra.mxu0 0.0
    %1179 = vmatprep.subr.mxu0 0.0
    %1180 = vmatpush1.xpose.msra.mxu0 0.0
    %1181 = vmatprep.subr.mxu0 0.0
    %1182 = vmatpush1.xpose.msra.mxu0 0.0
    %1183 = vmatprep.subr.mxu0 0.0
    %1184 = vmatpush1.xpose.msra.mxu0 0.0
    %1185 = vmatprep.subr.mxu0 0.0
    %1186 = vmatpush1.xpose.msra.mxu0 0.0
    %1187 = vmatprep.subr.mxu0 0.0
    %1188 = vmatpush1.xpose.msra.mxu0 0.0
    %1189 = vmatprep.subr.mxu0 0.0
    %1190 = vmatpush1.xpose.msra.mxu0 0.0
    %1191 = vmatprep.subr.mxu0 0.0
    %1192 = vmatpush1.xpose.msra.mxu0 0.0
    %1193 = vmatprep.subr.mxu0 0.0
    %1194 = vmatpush1.xpose.msra.mxu0 0.0
    %1195 = vmatprep.subr.mxu0 0.0
    %1196 = vmatpush1.xpose.msra.mxu0 0.0
    %1197 = vmatprep.subr.mxu0 0.0
    %1198 = vmatpush1.xpose.msra.mxu0 0.0
    %1199 = vmatprep.subr.mxu0 0.0
    %1200 = vmatpush1.xpose.msra.mxu0 0.0
    %1201 = vmatprep.mubr.f32.mxu0 0.0
    %1202 = vmatmul.mubr.f32.gmra.mrb[0].mxu0 %v621
    %v1203 = vpop.f32.mrb[0].mxu0
    %v1204 = vadd.f32 0.0, %v1203
    %v1205 = vpop.f32.mrb[0].mxu0
    %1206 = vdwg.mxu0
    %v1207 = vlaneseq
    %v1208 = vshrl.u32 %v1207, 7
    %v1209 = vsub.s32 0, %v1208
    %v1210 = vrot.slane %v693, %v1209
    %v1211 = vlaneseq
    %v1212 = vshrl.u32 %v1211, 7
    %v1213 = vsub.s32 0, %v1212
    %v1214 = vrot.slane %v766, %v1213
    %v1215 = vlaneseq
    %v1216 = vshrl.u32 %v1215, 7
    %v1217 = vsub.s32 0, %v1216
    %v1218 = vrot.slane %v839, %v1217
    %v1219 = vlaneseq
    %v1220 = vshrl.u32 %v1219, 7
    %v1221 = vsub.s32 0, %v1220
    %v1222 = vrot.slane %v912, %v1221
    %v1223 = vlaneseq
    %v1224 = vshrl.u32 %v1223, 7
    %v1225 = vsub.s32 0, %v1224
    %v1226 = vrot.slane %v985, %v1225
    %v1227 = vlaneseq
    %v1228 = vshrl.u32 %v1227, 7
    %v1229 = vsub.s32 0, %v1228
    %v1230 = vrot.slane %v1058, %v1229
    %v1231 = vlaneseq
    %v1232 = vshrl.u32 %v1231, 7
    %v1233 = vsub.s32 0, %v1232
    %v1234 = vrot.slane %v1131, %v1233
    %v1235 = vlaneseq
    %v1236 = vshrl.u32 %v1235, 7
    %v1237 = vsub.s32 0, %v1236
    %v1238 = vrot.slane %v1204, %v1237
    %v1239 = vadd.f32 %v598, %v1210
    %v1240 = vadd.f32 %v601, %v1214
    %v1241 = vadd.f32 %v604, %v1218
    %v1242 = vadd.f32 %v607, %v1222
    %v1243 = vadd.f32 %v610, %v1226
    %v1244 = vadd.f32 %v613, %v1230
    %v1245 = vadd.f32 %v616, %v1234
    %v1246 = vadd.f32 %v619, %v1238
    %v1247 = vmul.f32 %v282, 2.0
    %v1248 = vmul.f32 %v325, 2.0
    %v1249 = vmul.f32 %v368, 2.0
    %v1250 = vmul.f32 %v411, 2.0
    %v1251 = vmul.f32 %v454, 2.0
    %v1252 = vmul.f32 %v497, 2.0
    %v1253 = vmul.f32 %v540, 2.0
    %v1254 = vmul.f32 %v583, 2.0
    %v1255 = vsub.f32 %v1239, %v1247
    %v1256 = vsub.f32 %v1240, %v1248
    %v1257 = vsub.f32 %v1241, %v1249
    %v1258 = vsub.f32 %v1242, %v1250
    %v1259 = vsub.f32 %v1243, %v1251
    %v1260 = vsub.f32 %v1244, %v1252
    %v1261 = vsub.f32 %v1245, %v1253
    %v1262 = vsub.f32 %v1246, %v1254
    %v1263 = vmax.f32 %v1255, 0.0
    %v1264 = vmax.f32 %v1256, 0.0
    %v1265 = vmax.f32 %v1257, 0.0
    %v1266 = vmax.f32 %v1258, 0.0
    %v1267 = vmax.f32 %v1259, 0.0
    %v1268 = vmax.f32 %v1260, 0.0
    %v1269 = vmax.f32 %v1261, 0.0
    %v1270 = vmax.f32 %v1262, 0.0
    %vm1271 = vcmp.gt.f32.partialorder %v598, 0.0
    %vm1272 = vcmp.gt.f32.partialorder %v601, 0.0
    %vm1273 = vcmp.gt.f32.partialorder %v604, 0.0
    %vm1274 = vcmp.gt.f32.partialorder %v607, 0.0
    %vm1275 = vcmp.gt.f32.partialorder %v610, 0.0
    %vm1276 = vcmp.gt.f32.partialorder %v613, 0.0
    %vm1277 = vcmp.gt.f32.partialorder %v616, 0.0
    %vm1278 = vcmp.gt.f32.partialorder %v619, 0.0
    %vm1279 = vcmp.gt.f32.partialorder %v693, 0.0
    %vm1280 = vcmp.gt.f32.partialorder %v766, 0.0
    %vm1281 = vcmp.gt.f32.partialorder %v839, 0.0
    %vm1282 = vcmp.gt.f32.partialorder %v912, 0.0
    %vm1283 = vcmp.gt.f32.partialorder %v985, 0.0
    %vm1284 = vcmp.gt.f32.partialorder %v1058, 0.0
    %vm1285 = vcmp.gt.f32.partialorder %v1131, 0.0
    %vm1286 = vcmp.gt.f32.partialorder %v1204, 0.0
    %v1287 = vsel %vm1271, 1, 0
    %v1288 = vsel %vm1272, 1, 0
    %v1289 = vsel %vm1273, 1, 0
    %v1290 = vsel %vm1274, 1, 0
    %v1291 = vsel %vm1275, 1, 0
    %v1292 = vsel %vm1276, 1, 0
    %v1293 = vsel %vm1277, 1, 0
    %v1294 = vsel %vm1278, 1, 0
    %vm1295 = vcmp.eq.s32.totalorder %v1287, 1
    %vm1296 = vcmp.eq.s32.totalorder %v1288, 1
    %vm1297 = vcmp.eq.s32.totalorder %v1289, 1
    %vm1298 = vcmp.eq.s32.totalorder %v1290, 1
    %vm1299 = vcmp.eq.s32.totalorder %v1291, 1
    %vm1300 = vcmp.eq.s32.totalorder %v1292, 1
    %vm1301 = vcmp.eq.s32.totalorder %v1293, 1
    %vm1302 = vcmp.eq.s32.totalorder %v1294, 1
    %v1303 = vsel %vm1279, 1, 0
    %v1304 = vsel %vm1280, 1, 0
    %v1305 = vsel %vm1281, 1, 0
    %v1306 = vsel %vm1282, 1, 0
    %v1307 = vsel %vm1283, 1, 0
    %v1308 = vsel %vm1284, 1, 0
    %v1309 = vsel %vm1285, 1, 0
    %v1310 = vsel %vm1286, 1, 0
    %v1311 = vlaneseq
    %v1312 = vshrl.u32 %v1311, 7
    %v1313 = vsub.s32 0, %v1312
    %v1314 = vrot.slane %v1303, %v1313
    %v1315 = vlaneseq
    %v1316 = vshrl.u32 %v1315, 7
    %v1317 = vsub.s32 0, %v1316
    %v1318 = vrot.slane %v1304, %v1317
    %v1319 = vlaneseq
    %v1320 = vshrl.u32 %v1319, 7
    %v1321 = vsub.s32 0, %v1320
    %v1322 = vrot.slane %v1305, %v1321
    %v1323 = vlaneseq
    %v1324 = vshrl.u32 %v1323, 7
    %v1325 = vsub.s32 0, %v1324
    %v1326 = vrot.slane %v1306, %v1325
    %v1327 = vlaneseq
    %v1328 = vshrl.u32 %v1327, 7
    %v1329 = vsub.s32 0, %v1328
    %v1330 = vrot.slane %v1307, %v1329
    %v1331 = vlaneseq
    %v1332 = vshrl.u32 %v1331, 7
    %v1333 = vsub.s32 0, %v1332
    %v1334 = vrot.slane %v1308, %v1333
    %v1335 = vlaneseq
    %v1336 = vshrl.u32 %v1335, 7
    %v1337 = vsub.s32 0, %v1336
    %v1338 = vrot.slane %v1309, %v1337
    %v1339 = vlaneseq
    %v1340 = vshrl.u32 %v1339, 7
    %v1341 = vsub.s32 0, %v1340
    %v1342 = vrot.slane %v1310, %v1341
    %vm1343 = vcmp.eq.s32.totalorder %v1314, 1
    %vm1344 = vcmp.eq.s32.totalorder %v1318, 1
    %vm1345 = vcmp.eq.s32.totalorder %v1322, 1
    %vm1346 = vcmp.eq.s32.totalorder %v1326, 1
    %vm1347 = vcmp.eq.s32.totalorder %v1330, 1
    %vm1348 = vcmp.eq.s32.totalorder %v1334, 1
    %vm1349 = vcmp.eq.s32.totalorder %v1338, 1
    %vm1350 = vcmp.eq.s32.totalorder %v1342, 1
    %vm1351 = vmand %vm1295, %vm1343
    %vm1352 = vmand %vm1296, %vm1344
    %vm1353 = vmand %vm1297, %vm1345
    %vm1354 = vmand %vm1298, %vm1346
    %vm1355 = vmand %vm1299, %vm1347
    %vm1356 = vmand %vm1300, %vm1348
    %vm1357 = vmand %vm1301, %vm1349
    %vm1358 = vmand %vm1302, %vm1350
    %v1359 = vsel %vm42, 1, 0
    %vm1360 = vcmp.eq.s32.totalorder %v1359, 1
    %vm1361 = vmand %vm1351, %vm1360
    %vm1362 = vmand %vm1352, %vm1360
    %vm1363 = vmand %vm1353, %vm1360
    %vm1364 = vmand %vm1354, %vm1360
    %vm1365 = vmand %vm1355, %vm1360
    %vm1366 = vmand %vm1356, %vm1360
    %vm1367 = vmand %vm1357, %vm1360
    %vm1368 = vmand %vm1358, %vm1360
    %v1369 = vrsqrt.pop %v1263
    %v1370 = vmul.f32 %v1263, %v1369
    %vm1371 = vcmp.eq.f32.partialorder %v1263, inf
    %v1372 = vsel %vm1371, %v1263, %v1370
    %vm1373 = vcmp.eq.f32.partialorder %v1263, 0.0
    %v1374 = vand.u32 %v1263, 2147483648
    %v1375 = vsel %vm1373, %v1374, %v1372
    %v1376 = vrsqrt.pop %v1264
    %v1377 = vmul.f32 %v1264, %v1376
    %vm1378 = vcmp.eq.f32.partialorder %v1264, inf
    %v1379 = vsel %vm1378, %v1264, %v1377
    %vm1380 = vcmp.eq.f32.partialorder %v1264, 0.0
    %v1381 = vand.u32 %v1264, 2147483648
    %v1382 = vsel %vm1380, %v1381, %v1379
    %v1383 = vrsqrt.pop %v1265
    %v1384 = vmul.f32 %v1265, %v1383
    %vm1385 = vcmp.eq.f32.partialorder %v1265, inf
    %v1386 = vsel %vm1385, %v1265, %v1384
    %vm1387 = vcmp.eq.f32.partialorder %v1265, 0.0
    %v1388 = vand.u32 %v1265, 2147483648
    %v1389 = vsel %vm1387, %v1388, %v1386
    %v1390 = vrsqrt.pop %v1266
    %v1391 = vmul.f32 %v1266, %v1390
    %vm1392 = vcmp.eq.f32.partialorder %v1266, inf
    %v1393 = vsel %vm1392, %v1266, %v1391
    %vm1394 = vcmp.eq.f32.partialorder %v1266, 0.0
    %v1395 = vand.u32 %v1266, 2147483648
    %v1396 = vsel %vm1394, %v1395, %v1393
    %v1397 = vrsqrt.pop %v1267
    %v1398 = vmul.f32 %v1267, %v1397
    %vm1399 = vcmp.eq.f32.partialorder %v1267, inf
    %v1400 = vsel %vm1399, %v1267, %v1398
    %vm1401 = vcmp.eq.f32.partialorder %v1267, 0.0
    %v1402 = vand.u32 %v1267, 2147483648
    %v1403 = vsel %vm1401, %v1402, %v1400
    %v1404 = vrsqrt.pop %v1268
    %v1405 = vmul.f32 %v1268, %v1404
    %vm1406 = vcmp.eq.f32.partialorder %v1268, inf
    %v1407 = vsel %vm1406, %v1268, %v1405
    %vm1408 = vcmp.eq.f32.partialorder %v1268, 0.0
    %v1409 = vand.u32 %v1268, 2147483648
    %v1410 = vsel %vm1408, %v1409, %v1407
    %v1411 = vrsqrt.pop %v1269
    %v1412 = vmul.f32 %v1269, %v1411
    %vm1413 = vcmp.eq.f32.partialorder %v1269, inf
    %v1414 = vsel %vm1413, %v1269, %v1412
    %vm1415 = vcmp.eq.f32.partialorder %v1269, 0.0
    %v1416 = vand.u32 %v1269, 2147483648
    %v1417 = vsel %vm1415, %v1416, %v1414
    %v1418 = vrsqrt.pop %v1270
    %v1419 = vmul.f32 %v1270, %v1418
    %vm1420 = vcmp.eq.f32.partialorder %v1270, inf
    %v1421 = vsel %vm1420, %v1270, %v1419
    %vm1422 = vcmp.eq.f32.partialorder %v1270, 0.0
    %v1423 = vand.u32 %v1270, 2147483648
    %v1424 = vsel %vm1422, %v1423, %v1421
    %v1425 = vsel %vm1361, %v1375, 0.0
    %v1426 = vsel %vm1362, %v1382, 0.0
    %v1427 = vsel %vm1363, %v1389, 0.0
    %v1428 = vsel %vm1364, %v1396, 0.0
    %v1429 = vsel %vm1365, %v1403, 0.0
    %v1430 = vsel %vm1366, %v1410, 0.0
    %v1431 = vsel %vm1367, %v1417, 0.0
    %v1432 = vsel %vm1368, %v1424, 0.0
    %vm1433 = vcmp.gt.f32.partialorder %v1425, 0.0
    %vm1434 = vcmp.gt.f32.partialorder %v1426, 0.0
    %vm1435 = vcmp.gt.f32.partialorder %v1427, 0.0
    %vm1436 = vcmp.gt.f32.partialorder %v1428, 0.0
    %vm1437 = vcmp.gt.f32.partialorder %v1429, 0.0
    %vm1438 = vcmp.gt.f32.partialorder %v1430, 0.0
    %vm1439 = vcmp.gt.f32.partialorder %v1431, 0.0
    %vm1440 = vcmp.gt.f32.partialorder %v1432, 0.0
    %v1441 = vsel %vm1433, 1, 0
    %v1442 = vsel %vm1434, 1, 0
    %v1443 = vsel %vm1435, 1, 0
    %v1444 = vsel %vm1436, 1, 0
    %v1445 = vsel %vm1437, 1, 0
    %v1446 = vsel %vm1438, 1, 0
    %v1447 = vsel %vm1439, 1, 0
    %v1448 = vsel %vm1440, 1, 0
    %v1449 = vcvt.s32.f32 %v1441
    %v1450 = vcvt.s32.f32 %v1442
    %v1451 = vcvt.s32.f32 %v1443
    %v1452 = vcvt.s32.f32 %v1444
    %v1453 = vcvt.s32.f32 %v1445
    %v1454 = vcvt.s32.f32 %v1446
    %v1455 = vcvt.s32.f32 %v1447
    %v1456 = vcvt.s32.f32 %v1448
    %vm1457 = vcmask 64512
    %v1458 = vsel %vm1457, %v1425, 0.0
    %1459 = vadd.xlane.f32.xlu0 %v1458
    %v1460 = vpop.xlane.xlu0 %1459
    %v1461 = vsel %vm1457, %v1426, 0.0
    %1462 = vadd.xlane.f32.xlu0 %v1461
    %v1463 = vpop.xlane.xlu0 %1462
    %v1464 = vsel %vm1457, %v1427, 0.0
    %1465 = vadd.xlane.f32.xlu0 %v1464
    %v1466 = vpop.xlane.xlu0 %1465
    %v1467 = vsel %vm1457, %v1428, 0.0
    %1468 = vadd.xlane.f32.xlu0 %v1467
    %v1469 = vpop.xlane.xlu0 %1468
    %v1470 = vsel %vm1457, %v1429, 0.0
    %1471 = vadd.xlane.f32.xlu0 %v1470
    %v1472 = vpop.xlane.xlu0 %1471
    %v1473 = vsel %vm1457, %v1430, 0.0
    %1474 = vadd.xlane.f32.xlu0 %v1473
    %v1475 = vpop.xlane.xlu0 %1474
    %v1476 = vsel %vm1457, %v1431, 0.0
    %1477 = vadd.xlane.f32.xlu0 %v1476
    %v1478 = vpop.xlane.xlu0 %1477
    %v1479 = vsel %vm1457, %v1432, 0.0
    %1480 = vadd.xlane.f32.xlu0 %v1479
    %v1481 = vpop.xlane.xlu0 %1480
    %v1482 = vrot.slane %v1460, 4
    %v1483 = vadd.f32 %v1460, %v1482
    %v1484 = vrot.slane %v1483, 2
    %v1485 = vadd.f32 %v1483, %v1484
    %v1486 = vrot.slane %v1485, 1
    %v1487 = vadd.f32 %v1485, %v1486
    %v1488 = vrot.slane %v1463, 4
    %v1489 = vadd.f32 %v1463, %v1488
    %v1490 = vrot.slane %v1489, 2
    %v1491 = vadd.f32 %v1489, %v1490
    %v1492 = vrot.slane %v1491, 1
    %v1493 = vadd.f32 %v1491, %v1492
    %v1494 = vrot.slane %v1466, 4
    %v1495 = vadd.f32 %v1466, %v1494
    %v1496 = vrot.slane %v1495, 2
    %v1497 = vadd.f32 %v1495, %v1496
    %v1498 = vrot.slane %v1497, 1
    %v1499 = vadd.f32 %v1497, %v1498
    %v1500 = vrot.slane %v1469, 4
    %v1501 = vadd.f32 %v1469, %v1500
    %v1502 = vrot.slane %v1501, 2
    %v1503 = vadd.f32 %v1501, %v1502
    %v1504 = vrot.slane %v1503, 1
    %v1505 = vadd.f32 %v1503, %v1504
    %v1506 = vrot.slane %v1472, 4
    %v1507 = vadd.f32 %v1472, %v1506
    %v1508 = vrot.slane %v1507, 2
    %v1509 = vadd.f32 %v1507, %v1508
    %v1510 = vrot.slane %v1509, 1
    %v1511 = vadd.f32 %v1509, %v1510
    %v1512 = vrot.slane %v1475, 4
    %v1513 = vadd.f32 %v1475, %v1512
    %v1514 = vrot.slane %v1513, 2
    %v1515 = vadd.f32 %v1513, %v1514
    %v1516 = vrot.slane %v1515, 1
    %v1517 = vadd.f32 %v1515, %v1516
    %v1518 = vrot.slane %v1478, 4
    %v1519 = vadd.f32 %v1478, %v1518
    %v1520 = vrot.slane %v1519, 2
    %v1521 = vadd.f32 %v1519, %v1520
    %v1522 = vrot.slane %v1521, 1
    %v1523 = vadd.f32 %v1521, %v1522
    %v1524 = vrot.slane %v1481, 4
    %v1525 = vadd.f32 %v1481, %v1524
    %v1526 = vrot.slane %v1525, 2
    %v1527 = vadd.f32 %v1525, %v1526
    %v1528 = vrot.slane %v1527, 1
    %v1529 = vadd.f32 %v1527, %v1528
    %v1530 = vsel %vm1457, %v1449, 0.0
    %1531 = vadd.xlane.f32.xlu0 %v1530
    %v1532 = vpop.xlane.xlu0 %1531
    %v1533 = vsel %vm1457, %v1450, 0.0
    %1534 = vadd.xlane.f32.xlu0 %v1533
    %v1535 = vpop.xlane.xlu0 %1534
    %v1536 = vsel %vm1457, %v1451, 0.0
    %1537 = vadd.xlane.f32.xlu0 %v1536
    %v1538 = vpop.xlane.xlu0 %1537
    %v1539 = vsel %vm1457, %v1452, 0.0
    %1540 = vadd.xlane.f32.xlu0 %v1539
    %v1541 = vpop.xlane.xlu0 %1540
    %v1542 = vsel %vm1457, %v1453, 0.0
    %1543 = vadd.xlane.f32.xlu0 %v1542
    %v1544 = vpop.xlane.xlu0 %1543
    %v1545 = vsel %vm1457, %v1454, 0.0
    %1546 = vadd.xlane.f32.xlu0 %v1545
    %v1547 = vpop.xlane.xlu0 %1546
    %v1548 = vsel %vm1457, %v1455, 0.0
    %1549 = vadd.xlane.f32.xlu0 %v1548
    %v1550 = vpop.xlane.xlu0 %1549
    %v1551 = vsel %vm1457, %v1456, 0.0
    %1552 = vadd.xlane.f32.xlu0 %v1551
    %v1553 = vpop.xlane.xlu0 %1552
    %v1554 = vrot.slane %v1532, 4
    %v1555 = vadd.f32 %v1532, %v1554
    %v1556 = vrot.slane %v1555, 2
    %v1557 = vadd.f32 %v1555, %v1556
    %v1558 = vrot.slane %v1557, 1
    %v1559 = vadd.f32 %v1557, %v1558
    %v1560 = vrot.slane %v1535, 4
    %v1561 = vadd.f32 %v1535, %v1560
    %v1562 = vrot.slane %v1561, 2
    %v1563 = vadd.f32 %v1561, %v1562
    %v1564 = vrot.slane %v1563, 1
    %v1565 = vadd.f32 %v1563, %v1564
    %v1566 = vrot.slane %v1538, 4
    %v1567 = vadd.f32 %v1538, %v1566
    %v1568 = vrot.slane %v1567, 2
    %v1569 = vadd.f32 %v1567, %v1568
    %v1570 = vrot.slane %v1569, 1
    %v1571 = vadd.f32 %v1569, %v1570
    %v1572 = vrot.slane %v1541, 4
    %v1573 = vadd.f32 %v1541, %v1572
    %v1574 = vrot.slane %v1573, 2
    %v1575 = vadd.f32 %v1573, %v1574
    %v1576 = vrot.slane %v1575, 1
    %v1577 = vadd.f32 %v1575, %v1576
    %v1578 = vrot.slane %v1544, 4
    %v1579 = vadd.f32 %v1544, %v1578
    %v1580 = vrot.slane %v1579, 2
    %v1581 = vadd.f32 %v1579, %v1580
    %v1582 = vrot.slane %v1581, 1
    %v1583 = vadd.f32 %v1581, %v1582
    %v1584 = vrot.slane %v1547, 4
    %v1585 = vadd.f32 %v1547, %v1584
    %v1586 = vrot.slane %v1585, 2
    %v1587 = vadd.f32 %v1585, %v1586
    %v1588 = vrot.slane %v1587, 1
    %v1589 = vadd.f32 %v1587, %v1588
    %v1590 = vrot.slane %v1550, 4
    %v1591 = vadd.f32 %v1550, %v1590
    %v1592 = vrot.slane %v1591, 2
    %v1593 = vadd.f32 %v1591, %v1592
    %v1594 = vrot.slane %v1593, 1
    %v1595 = vadd.f32 %v1593, %v1594
    %v1596 = vrot.slane %v1553, 4
    %v1597 = vadd.f32 %v1553, %v1596
    %v1598 = vrot.slane %v1597, 2
    %v1599 = vadd.f32 %v1597, %v1598
    %v1600 = vrot.slane %v1599, 1
    %v1601 = vadd.f32 %v1599, %v1600
    %vm1602 = vcmp.gt.f32.partialorder %v1487, 0.0
    %vm1603 = vcmp.gt.f32.partialorder %v1493, 0.0
    %vm1604 = vcmp.gt.f32.partialorder %v1499, 0.0
    %vm1605 = vcmp.gt.f32.partialorder %v1505, 0.0
    %vm1606 = vcmp.gt.f32.partialorder %v1511, 0.0
    %vm1607 = vcmp.gt.f32.partialorder %v1517, 0.0
    %vm1608 = vcmp.gt.f32.partialorder %v1523, 0.0
    %vm1609 = vcmp.gt.f32.partialorder %v1529, 0.0
    %v1610 = vsel %vm1602, %v1487, 1.0
    %v1611 = vsel %vm1603, %v1493, 1.0
    %v1612 = vsel %vm1604, %v1499, 1.0
    %v1613 = vsel %vm1605, %v1505, 1.0
    %v1614 = vsel %vm1606, %v1511, 1.0
    %v1615 = vsel %vm1607, %v1517, 1.0
    %v1616 = vsel %vm1608, %v1523, 1.0
    %v1617 = vsel %vm1609, %v1529, 1.0
    %v1618 = vrcp.pop %v1610
    %v1619 = vmul.f32 %v1559, %v1618
    %v1620 = vrcp.pop %v1611
    %v1621 = vmul.f32 %v1565, %v1620
    %v1622 = vrcp.pop %v1612
    %v1623 = vmul.f32 %v1571, %v1622
    %v1624 = vrcp.pop %v1613
    %v1625 = vmul.f32 %v1577, %v1624
    %v1626 = vrcp.pop %v1614
    %v1627 = vmul.f32 %v1583, %v1626
    %v1628 = vrcp.pop %v1615
    %v1629 = vmul.f32 %v1589, %v1628
    %v1630 = vrcp.pop %v1616
    %v1631 = vmul.f32 %v1595, %v1630
    %v1632 = vrcp.pop %v1617
    %v1633 = vmul.f32 %v1601, %v1632
    %v1634 = vmul.f32 %v1425, %v1619
    %v1635 = vmul.f32 %v1426, %v1621
    %v1636 = vmul.f32 %v1427, %v1623
    %v1637 = vmul.f32 %v1428, %v1625
    %v1638 = vmul.f32 %v1429, %v1627
    %v1639 = vmul.f32 %v1430, %v1629
    %v1640 = vmul.f32 %v1431, %v1631
    %v1641 = vmul.f32 %v1432, %v1633
    %v1642 = vld [vmem:[#allocation2] sm:$0xff]
    %v1643 = vld [vmem:[#allocation2 + $0x8] sm:$0xff]
    %v1644 = vld [vmem:[#allocation2 + $0x10] sm:$0xff]
    %v1645 = vld [vmem:[#allocation2 + $0x18] sm:$0xff]
    %v1646 = vld [vmem:[#allocation2 + $0x20] sm:$0xff]
    %v1647 = vld [vmem:[#allocation2 + $0x28] sm:$0xff]
    %v1648 = vld [vmem:[#allocation2 + $0x30] sm:$0xff]
    %v1649 = vld [vmem:[#allocation2 + $0x38] sm:$0xff]
    %v1650 = vmul.f32 %v1642, %v54
    %v1651 = vmul.f32 %v1643, %v59
    %v1652 = vmul.f32 %v1644, %v64
    %v1653 = vmul.f32 %v1645, %v69
    %v1654 = vmul.f32 %v1646, %v74
    %v1655 = vmul.f32 %v1647, %v79
    %v1656 = vmul.f32 %v1648, %v84
    %v1657 = vmul.f32 %v1649, %v89
    %v1658 = vcombine.low %v1650, %v1652
    %v1659 = vcombine.high %v1650, %v1652
    %v1661 = vunpack.c.l.s4 1983009808
    %v1662 = vunpack.c.0.s8 %v1661
    %v1663 = vlaneseq
    %v1664 = vshrl.u32 %v1663, 7
    %v1665 = vsub.s32 %v1662, %v1664
    %v1666 = vrot.slane %v1658, %v1665
    %v1668 = vunpack.c.l.s4 1983009808
    %v1669 = vunpack.c.0.s8 %v1668
    %v1670 = vlaneseq
    %v1671 = vshrl.u32 %v1670, 7
    %v1672 = vsub.s32 %v1669, %v1671
    %v1673 = vrot.slane %v1659, %v1672
    %v1674 = vcombine.low %v1651, %v1653
    %v1675 = vcombine.high %v1651, %v1653
    %v1677 = vunpack.c.l.s4 1983009808
    %v1678 = vunpack.c.0.s8 %v1677
    %v1679 = vlaneseq
    %v1680 = vshrl.u32 %v1679, 7
    %v1681 = vsub.s32 %v1678, %v1680
    %v1682 = vrot.slane %v1674, %v1681
    %v1684 = vunpack.c.l.s4 1983009808
    %v1685 = vunpack.c.0.s8 %v1684
    %v1686 = vlaneseq
    %v1687 = vshrl.u32 %v1686, 7
    %v1688 = vsub.s32 %v1685, %v1687
    %v1689 = vrot.slane %v1675, %v1688
    %v1690 = vcombine.low %v1654, %v1656
    %v1691 = vcombine.high %v1654, %v1656
    %v1693 = vunpack.c.l.s4 1983009808
    %v1694 = vunpack.c.0.s8 %v1693
    %v1695 = vlaneseq
    %v1696 = vshrl.u32 %v1695, 7
    %v1697 = vsub.s32 %v1694, %v1696
    %v1698 = vrot.slane %v1690, %v1697
    %v1700 = vunpack.c.l.s4 1983009808
    %v1701 = vunpack.c.0.s8 %v1700
    %v1702 = vlaneseq
    %v1703 = vshrl.u32 %v1702, 7
    %v1704 = vsub.s32 %v1701, %v1703
    %v1705 = vrot.slane %v1691, %v1704
    %v1706 = vcombine.low %v1655, %v1657
    %v1707 = vcombine.high %v1655, %v1657
    %v1709 = vunpack.c.l.s4 1983009808
    %v1710 = vunpack.c.0.s8 %v1709
    %v1711 = vlaneseq
    %v1712 = vshrl.u32 %v1711, 7
    %v1713 = vsub.s32 %v1710, %v1712
    %v1714 = vrot.slane %v1706, %v1713
    %v1716 = vunpack.c.l.s4 1983009808
    %v1717 = vunpack.c.0.s8 %v1716
    %v1718 = vlaneseq
    %v1719 = vshrl.u32 %v1718, 7
    %v1720 = vsub.s32 %v1717, %v1719
    %v1721 = vrot.slane %v1707, %v1720
    %v1722 = vcombine.low %v1666, %v1682
    %v1723 = vcombine.high %v1666, %v1682
    %v1725 = vunpack.c.l.s4 1934713408
    %v1726 = vunpack.c.0.s8 %v1725
    %v1727 = vlaneseq
    %v1728 = vshrl.u32 %v1727, 7
    %v1729 = vsub.s32 %v1726, %v1728
    %v1730 = vrot.slane %v1722, %v1729
    %v1732 = vunpack.c.l.s4 1934713408
    %v1733 = vunpack.c.0.s8 %v1732
    %v1734 = vlaneseq
    %v1735 = vshrl.u32 %v1734, 7
    %v1736 = vsub.s32 %v1733, %v1735
    %v1737 = vrot.slane %v1723, %v1736
    %v1738 = vcombine.low %v1673, %v1689
    %v1739 = vcombine.high %v1673, %v1689
    %v1741 = vunpack.c.l.s4 1934713408
    %v1742 = vunpack.c.0.s8 %v1741
    %v1743 = vlaneseq
    %v1744 = vshrl.u32 %v1743, 7
    %v1745 = vsub.s32 %v1742, %v1744
    %v1746 = vrot.slane %v1738, %v1745
    %v1748 = vunpack.c.l.s4 1934713408
    %v1749 = vunpack.c.0.s8 %v1748
    %v1750 = vlaneseq
    %v1751 = vshrl.u32 %v1750, 7
    %v1752 = vsub.s32 %v1749, %v1751
    %v1753 = vrot.slane %v1739, %v1752
    %v1754 = vcombine.low %v1698, %v1714
    %v1755 = vcombine.high %v1698, %v1714
    %v1757 = vunpack.c.l.s4 1934713408
    %v1758 = vunpack.c.0.s8 %v1757
    %v1759 = vlaneseq
    %v1760 = vshrl.u32 %v1759, 7
    %v1761 = vsub.s32 %v1758, %v1760
    %v1762 = vrot.slane %v1754, %v1761
    %v1764 = vunpack.c.l.s4 1934713408
    %v1765 = vunpack.c.0.s8 %v1764
    %v1766 = vlaneseq
    %v1767 = vshrl.u32 %v1766, 7
    %v1768 = vsub.s32 %v1765, %v1767
    %v1769 = vrot.slane %v1755, %v1768
    %v1770 = vcombine.low %v1705, %v1721
    %v1771 = vcombine.high %v1705, %v1721
    %v1773 = vunpack.c.l.s4 1934713408
    %v1774 = vunpack.c.0.s8 %v1773
    %v1775 = vlaneseq
    %v1776 = vshrl.u32 %v1775, 7
    %v1777 = vsub.s32 %v1774, %v1776
    %v1778 = vrot.slane %v1770, %v1777
    %v1780 = vunpack.c.l.s4 1934713408
    %v1781 = vunpack.c.0.s8 %v1780
    %v1782 = vlaneseq
    %v1783 = vshrl.u32 %v1782, 7
    %v1784 = vsub.s32 %v1781, %v1783
    %v1785 = vrot.slane %v1771, %v1784
    %v1786 = vcombine.low %v1730, %v1762
    %v1787 = vcombine.high %v1730, %v1762
    %v1788 = vcombine.low %v1737, %v1769
    %v1789 = vcombine.high %v1737, %v1769
    %v1790 = vcombine.low %v1746, %v1778
    %v1791 = vcombine.high %v1746, %v1778
    %v1792 = vcombine.low %v1753, %v1785
    %v1793 = vcombine.high %v1753, %v1785
    %v1794 = vpack.c.bf16 %v1786, %v1786
    %v1795 = vpack.c.bf16 %v1787, %v1787
    %v1796 = vpack.c.bf16 %v1788, %v1788
    %v1797 = vpack.c.bf16 %v1789, %v1789
    %v1798 = vpack.c.bf16 %v1790, %v1790
    %v1799 = vpack.c.bf16 %v1791, %v1791
    %v1800 = vpack.c.bf16 %v1792, %v1792
    %v1801 = vpack.c.bf16 %v1793, %v1793
    %v1803 = vsel %vm243, %v1794, 0
    %1805 = vmatprep.subr.bf16.mxu0 0
    %1806 = vmatpush1.bf16.xpose.msra.mxu0 %v1803
    %1807 = vmatprep.subr.bf16.mxu0 0
    %1808 = vmatpush1.bf16.xpose.msra.mxu0 0
    %1809 = vmatprep.subr.bf16.mxu0 0
    %1810 = vmatpush1.bf16.xpose.msra.mxu0 0
    %1811 = vmatprep.subr.bf16.mxu0 0
    %1812 = vmatpush1.bf16.xpose.msra.mxu0 0
    %1813 = vmatprep.subr.bf16.mxu0 0
    %1814 = vmatpush1.bf16.xpose.msra.mxu0 0
    %1815 = vmatprep.subr.bf16.mxu0 0
    %1816 = vmatpush1.bf16.xpose.msra.mxu0 0
    %1817 = vmatprep.subr.bf16.mxu0 0
    %1818 = vmatpush1.bf16.xpose.msra.mxu0 0
    %1819 = vmatprep.subr.bf16.mxu0 0
    %1820 = vmatpush1.bf16.xpose.msra.mxu0 0
    %1821 = vmatprep.subr.bf16.mxu0 0
    %1822 = vmatpush1.bf16.xpose.msra.mxu0 0
    %1823 = vmatprep.subr.bf16.mxu0 0
    %1824 = vmatpush1.bf16.xpose.msra.mxu0 0
    %1825 = vmatprep.subr.bf16.mxu0 0
    %1826 = vmatpush1.bf16.xpose.msra.mxu0 0
    %1827 = vmatprep.subr.bf16.mxu0 0
    %1828 = vmatpush1.bf16.xpose.msra.mxu0 0
    %1829 = vmatprep.subr.bf16.mxu0 0
    %1830 = vmatpush1.bf16.xpose.msra.mxu0 0
    %1831 = vmatprep.subr.bf16.mxu0 0
    %1832 = vmatpush1.bf16.xpose.msra.mxu0 0
    %1833 = vmatprep.subr.bf16.mxu0 0
    %1834 = vmatpush1.bf16.xpose.msra.mxu0 0
    %1835 = vmatprep.subr.bf16.mxu0 0
    %1836 = vmatpush1.bf16.xpose.msra.mxu0 0
    %1837 = vmatprep.mubr.bf16.mxu0 0
    %1838 = vmatmul.mubr.bf16.gmra.mrb[0].mxu0 %v1803
    %v1839 = vpop.f32.mrb[0].mxu0
    %v1840 = vadd.f32 0.0, %v1839
    %v1841 = vpop.f32.mrb[0].mxu0
    %v1842 = vpop.f32.mrb[0].mxu0
    %v1843 = vpop.f32.mrb[0].mxu0
    %1844 = vdwg.mxu0
    %v1846 = vsel %vm243, %v1795, 0
    %1848 = vmatprep.subr.bf16.mxu0 0
    %1849 = vmatpush1.bf16.xpose.msra.mxu0 %v1846
    %1850 = vmatprep.subr.bf16.mxu0 0
    %1851 = vmatpush1.bf16.xpose.msra.mxu0 0
    %1852 = vmatprep.subr.bf16.mxu0 0
    %1853 = vmatpush1.bf16.xpose.msra.mxu0 0
    %1854 = vmatprep.subr.bf16.mxu0 0
    %1855 = vmatpush1.bf16.xpose.msra.mxu0 0
    %1856 = vmatprep.subr.bf16.mxu0 0
    %1857 = vmatpush1.bf16.xpose.msra.mxu0 0
    %1858 = vmatprep.subr.bf16.mxu0 0
    %1859 = vmatpush1.bf16.xpose.msra.mxu0 0
    %1860 = vmatprep.subr.bf16.mxu0 0
    %1861 = vmatpush1.bf16.xpose.msra.mxu0 0
    %1862 = vmatprep.subr.bf16.mxu0 0
    %1863 = vmatpush1.bf16.xpose.msra.mxu0 0
    %1864 = vmatprep.subr.bf16.mxu0 0
    %1865 = vmatpush1.bf16.xpose.msra.mxu0 0
    %1866 = vmatprep.subr.bf16.mxu0 0
    %1867 = vmatpush1.bf16.xpose.msra.mxu0 0
    %1868 = vmatprep.subr.bf16.mxu0 0
    %1869 = vmatpush1.bf16.xpose.msra.mxu0 0
    %1870 = vmatprep.subr.bf16.mxu0 0
    %1871 = vmatpush1.bf16.xpose.msra.mxu0 0
    %1872 = vmatprep.subr.bf16.mxu0 0
    %1873 = vmatpush1.bf16.xpose.msra.mxu0 0
    %1874 = vmatprep.subr.bf16.mxu0 0
    %1875 = vmatpush1.bf16.xpose.msra.mxu0 0
    %1876 = vmatprep.subr.bf16.mxu0 0
    %1877 = vmatpush1.bf16.xpose.msra.mxu0 0
    %1878 = vmatprep.subr.bf16.mxu0 0
    %1879 = vmatpush1.bf16.xpose.msra.mxu0 0
    %1880 = vmatprep.mubr.bf16.mxu0 0
    %1881 = vmatmul.mubr.bf16.gmra.mrb[0].mxu0 %v1846
    %v1882 = vpop.f32.mrb[0].mxu0
    %v1883 = vadd.f32 0.0, %v1882
    %v1884 = vpop.f32.mrb[0].mxu0
    %v1885 = vpop.f32.mrb[0].mxu0
    %v1886 = vpop.f32.mrb[0].mxu0
    %1887 = vdwg.mxu0
    %v1889 = vsel %vm243, %v1796, 0
    %1891 = vmatprep.subr.bf16.mxu0 0
    %1892 = vmatpush1.bf16.xpose.msra.mxu0 %v1889
    %1893 = vmatprep.subr.bf16.mxu0 0
    %1894 = vmatpush1.bf16.xpose.msra.mxu0 0
    %1895 = vmatprep.subr.bf16.mxu0 0
    %1896 = vmatpush1.bf16.xpose.msra.mxu0 0
    %1897 = vmatprep.subr.bf16.mxu0 0
    %1898 = vmatpush1.bf16.xpose.msra.mxu0 0
    %1899 = vmatprep.subr.bf16.mxu0 0
    %1900 = vmatpush1.bf16.xpose.msra.mxu0 0
    %1901 = vmatprep.subr.bf16.mxu0 0
    %1902 = vmatpush1.bf16.xpose.msra.mxu0 0
    %1903 = vmatprep.subr.bf16.mxu0 0
    %1904 = vmatpush1.bf16.xpose.msra.mxu0 0
    %1905 = vmatprep.subr.bf16.mxu0 0
    %1906 = vmatpush1.bf16.xpose.msra.mxu0 0
    %1907 = vmatprep.subr.bf16.mxu0 0
    %1908 = vmatpush1.bf16.xpose.msra.mxu0 0
    %1909 = vmatprep.subr.bf16.mxu0 0
    %1910 = vmatpush1.bf16.xpose.msra.mxu0 0
    %1911 = vmatprep.subr.bf16.mxu0 0
    %1912 = vmatpush1.bf16.xpose.msra.mxu0 0
    %1913 = vmatprep.subr.bf16.mxu0 0
    %1914 = vmatpush1.bf16.xpose.msra.mxu0 0
    %1915 = vmatprep.subr.bf16.mxu0 0
    %1916 = vmatpush1.bf16.xpose.msra.mxu0 0
    %1917 = vmatprep.subr.bf16.mxu0 0
    %1918 = vmatpush1.bf16.xpose.msra.mxu0 0
    %1919 = vmatprep.subr.bf16.mxu0 0
    %1920 = vmatpush1.bf16.xpose.msra.mxu0 0
    %1921 = vmatprep.subr.bf16.mxu0 0
    %1922 = vmatpush1.bf16.xpose.msra.mxu0 0
    %1923 = vmatprep.mubr.bf16.mxu0 0
    %1924 = vmatmul.mubr.bf16.gmra.mrb[0].mxu0 %v1889
    %v1925 = vpop.f32.mrb[0].mxu0
    %v1926 = vadd.f32 0.0, %v1925
    %v1927 = vpop.f32.mrb[0].mxu0
    %v1928 = vpop.f32.mrb[0].mxu0
    %v1929 = vpop.f32.mrb[0].mxu0
    %1930 = vdwg.mxu0
    %v1932 = vsel %vm243, %v1797, 0
    %1934 = vmatprep.subr.bf16.mxu0 0
    %1935 = vmatpush1.bf16.xpose.msra.mxu0 %v1932
    %1936 = vmatprep.subr.bf16.mxu0 0
    %1937 = vmatpush1.bf16.xpose.msra.mxu0 0
    %1938 = vmatprep.subr.bf16.mxu0 0
    %1939 = vmatpush1.bf16.xpose.msra.mxu0 0
    %1940 = vmatprep.subr.bf16.mxu0 0
    %1941 = vmatpush1.bf16.xpose.msra.mxu0 0
    %1942 = vmatprep.subr.bf16.mxu0 0
    %1943 = vmatpush1.bf16.xpose.msra.mxu0 0
    %1944 = vmatprep.subr.bf16.mxu0 0
    %1945 = vmatpush1.bf16.xpose.msra.mxu0 0
    %1946 = vmatprep.subr.bf16.mxu0 0
    %1947 = vmatpush1.bf16.xpose.msra.mxu0 0
    %1948 = vmatprep.subr.bf16.mxu0 0
    %1949 = vmatpush1.bf16.xpose.msra.mxu0 0
    %1950 = vmatprep.subr.bf16.mxu0 0
    %1951 = vmatpush1.bf16.xpose.msra.mxu0 0
    %1952 = vmatprep.subr.bf16.mxu0 0
    %1953 = vmatpush1.bf16.xpose.msra.mxu0 0
    %1954 = vmatprep.subr.bf16.mxu0 0
    %1955 = vmatpush1.bf16.xpose.msra.mxu0 0
    %1956 = vmatprep.subr.bf16.mxu0 0
    %1957 = vmatpush1.bf16.xpose.msra.mxu0 0
    %1958 = vmatprep.subr.bf16.mxu0 0
    %1959 = vmatpush1.bf16.xpose.msra.mxu0 0
    %1960 = vmatprep.subr.bf16.mxu0 0
    %1961 = vmatpush1.bf16.xpose.msra.mxu0 0
    %1962 = vmatprep.subr.bf16.mxu0 0
    %1963 = vmatpush1.bf16.xpose.msra.mxu0 0
    %1964 = vmatprep.subr.bf16.mxu0 0
    %1965 = vmatpush1.bf16.xpose.msra.mxu0 0
    %1966 = vmatprep.mubr.bf16.mxu0 0
    %1967 = vmatmul.mubr.bf16.gmra.mrb[0].mxu0 %v1932
    %v1968 = vpop.f32.mrb[0].mxu0
    %v1969 = vadd.f32 0.0, %v1968
    %v1970 = vpop.f32.mrb[0].mxu0
    %v1971 = vpop.f32.mrb[0].mxu0
    %v1972 = vpop.f32.mrb[0].mxu0
    %1973 = vdwg.mxu0
    %v1975 = vsel %vm243, %v1798, 0
    %1977 = vmatprep.subr.bf16.mxu0 0
    %1978 = vmatpush1.bf16.xpose.msra.mxu0 %v1975
    %1979 = vmatprep.subr.bf16.mxu0 0
    %1980 = vmatpush1.bf16.xpose.msra.mxu0 0
    %1981 = vmatprep.subr.bf16.mxu0 0
    %1982 = vmatpush1.bf16.xpose.msra.mxu0 0
    %1983 = vmatprep.subr.bf16.mxu0 0
    %1984 = vmatpush1.bf16.xpose.msra.mxu0 0
    %1985 = vmatprep.subr.bf16.mxu0 0
    %1986 = vmatpush1.bf16.xpose.msra.mxu0 0
    %1987 = vmatprep.subr.bf16.mxu0 0
    %1988 = vmatpush1.bf16.xpose.msra.mxu0 0
    %1989 = vmatprep.subr.bf16.mxu0 0
    %1990 = vmatpush1.bf16.xpose.msra.mxu0 0
    %1991 = vmatprep.subr.bf16.mxu0 0
    %1992 = vmatpush1.bf16.xpose.msra.mxu0 0
    %1993 = vmatprep.subr.bf16.mxu0 0
    %1994 = vmatpush1.bf16.xpose.msra.mxu0 0
    %1995 = vmatprep.subr.bf16.mxu0 0
    %1996 = vmatpush1.bf16.xpose.msra.mxu0 0
    %1997 = vmatprep.subr.bf16.mxu0 0
    %1998 = vmatpush1.bf16.xpose.msra.mxu0 0
    %1999 = vmatprep.subr.bf16.mxu0 0
    %2000 = vmatpush1.bf16.xpose.msra.mxu0 0
    %2001 = vmatprep.subr.bf16.mxu0 0
    %2002 = vmatpush1.bf16.xpose.msra.mxu0 0
    %2003 = vmatprep.subr.bf16.mxu0 0
    %2004 = vmatpush1.bf16.xpose.msra.mxu0 0
    %2005 = vmatprep.subr.bf16.mxu0 0
    %2006 = vmatpush1.bf16.xpose.msra.mxu0 0
    %2007 = vmatprep.subr.bf16.mxu0 0
    %2008 = vmatpush1.bf16.xpose.msra.mxu0 0
    %2009 = vmatprep.mubr.bf16.mxu0 0
    %2010 = vmatmul.mubr.bf16.gmra.mrb[0].mxu0 %v1975
    %v2011 = vpop.f32.mrb[0].mxu0
    %v2012 = vadd.f32 0.0, %v2011
    %v2013 = vpop.f32.mrb[0].mxu0
    %v2014 = vpop.f32.mrb[0].mxu0
    %v2015 = vpop.f32.mrb[0].mxu0
    %2016 = vdwg.mxu0
    %v2018 = vsel %vm243, %v1799, 0
    %2020 = vmatprep.subr.bf16.mxu0 0
    %2021 = vmatpush1.bf16.xpose.msra.mxu0 %v2018
    %2022 = vmatprep.subr.bf16.mxu0 0
    %2023 = vmatpush1.bf16.xpose.msra.mxu0 0
    %2024 = vmatprep.subr.bf16.mxu0 0
    %2025 = vmatpush1.bf16.xpose.msra.mxu0 0
    %2026 = vmatprep.subr.bf16.mxu0 0
    %2027 = vmatpush1.bf16.xpose.msra.mxu0 0
    %2028 = vmatprep.subr.bf16.mxu0 0
    %2029 = vmatpush1.bf16.xpose.msra.mxu0 0
    %2030 = vmatprep.subr.bf16.mxu0 0
    %2031 = vmatpush1.bf16.xpose.msra.mxu0 0
    %2032 = vmatprep.subr.bf16.mxu0 0
    %2033 = vmatpush1.bf16.xpose.msra.mxu0 0
    %2034 = vmatprep.subr.bf16.mxu0 0
    %2035 = vmatpush1.bf16.xpose.msra.mxu0 0
    %2036 = vmatprep.subr.bf16.mxu0 0
    %2037 = vmatpush1.bf16.xpose.msra.mxu0 0
    %2038 = vmatprep.subr.bf16.mxu0 0
    %2039 = vmatpush1.bf16.xpose.msra.mxu0 0
    %2040 = vmatprep.subr.bf16.mxu0 0
    %2041 = vmatpush1.bf16.xpose.msra.mxu0 0
    %2042 = vmatprep.subr.bf16.mxu0 0
    %2043 = vmatpush1.bf16.xpose.msra.mxu0 0
    %2044 = vmatprep.subr.bf16.mxu0 0
    %2045 = vmatpush1.bf16.xpose.msra.mxu0 0
    %2046 = vmatprep.subr.bf16.mxu0 0
    %2047 = vmatpush1.bf16.xpose.msra.mxu0 0
    %2048 = vmatprep.subr.bf16.mxu0 0
    %2049 = vmatpush1.bf16.xpose.msra.mxu0 0
    %2050 = vmatprep.subr.bf16.mxu0 0
    %2051 = vmatpush1.bf16.xpose.msra.mxu0 0
    %2052 = vmatprep.mubr.bf16.mxu0 0
    %2053 = vmatmul.mubr.bf16.gmra.mrb[0].mxu0 %v2018
    %v2054 = vpop.f32.mrb[0].mxu0
    %v2055 = vadd.f32 0.0, %v2054
    %v2056 = vpop.f32.mrb[0].mxu0
    %v2057 = vpop.f32.mrb[0].mxu0
    %v2058 = vpop.f32.mrb[0].mxu0
    %2059 = vdwg.mxu0
    %v2061 = vsel %vm243, %v1800, 0
    %2063 = vmatprep.subr.bf16.mxu0 0
    %2064 = vmatpush1.bf16.xpose.msra.mxu0 %v2061
    %2065 = vmatprep.subr.bf16.mxu0 0
    %2066 = vmatpush1.bf16.xpose.msra.mxu0 0
    %2067 = vmatprep.subr.bf16.mxu0 0
    %2068 = vmatpush1.bf16.xpose.msra.mxu0 0
    %2069 = vmatprep.subr.bf16.mxu0 0
    %2070 = vmatpush1.bf16.xpose.msra.mxu0 0
    %2071 = vmatprep.subr.bf16.mxu0 0
    %2072 = vmatpush1.bf16.xpose.msra.mxu0 0
    %2073 = vmatprep.subr.bf16.mxu0 0
    %2074 = vmatpush1.bf16.xpose.msra.mxu0 0
    %2075 = vmatprep.subr.bf16.mxu0 0
    %2076 = vmatpush1.bf16.xpose.msra.mxu0 0
    %2077 = vmatprep.subr.bf16.mxu0 0
    %2078 = vmatpush1.bf16.xpose.msra.mxu0 0
    %2079 = vmatprep.subr.bf16.mxu0 0
    %2080 = vmatpush1.bf16.xpose.msra.mxu0 0
    %2081 = vmatprep.subr.bf16.mxu0 0
    %2082 = vmatpush1.bf16.xpose.msra.mxu0 0
    %2083 = vmatprep.subr.bf16.mxu0 0
    %2084 = vmatpush1.bf16.xpose.msra.mxu0 0
    %2085 = vmatprep.subr.bf16.mxu0 0
    %2086 = vmatpush1.bf16.xpose.msra.mxu0 0
    %2087 = vmatprep.subr.bf16.mxu0 0
    %2088 = vmatpush1.bf16.xpose.msra.mxu0 0
    %2089 = vmatprep.subr.bf16.mxu0 0
    %2090 = vmatpush1.bf16.xpose.msra.mxu0 0
    %2091 = vmatprep.subr.bf16.mxu0 0
    %2092 = vmatpush1.bf16.xpose.msra.mxu0 0
    %2093 = vmatprep.subr.bf16.mxu0 0
    %2094 = vmatpush1.bf16.xpose.msra.mxu0 0
    %2095 = vmatprep.mubr.bf16.mxu0 0
    %2096 = vmatmul.mubr.bf16.gmra.mrb[0].mxu0 %v2061
    %v2097 = vpop.f32.mrb[0].mxu0
    %v2098 = vadd.f32 0.0, %v2097
    %v2099 = vpop.f32.mrb[0].mxu0
    %v2100 = vpop.f32.mrb[0].mxu0
    %v2101 = vpop.f32.mrb[0].mxu0
    %2102 = vdwg.mxu0
    %v2104 = vsel %vm243, %v1801, 0
    %2106 = vmatprep.subr.bf16.mxu0 0
    %2107 = vmatpush1.bf16.xpose.msra.mxu0 %v2104
    %2108 = vmatprep.subr.bf16.mxu0 0
    %2109 = vmatpush1.bf16.xpose.msra.mxu0 0
    %2110 = vmatprep.subr.bf16.mxu0 0
    %2111 = vmatpush1.bf16.xpose.msra.mxu0 0
    %2112 = vmatprep.subr.bf16.mxu0 0
    %2113 = vmatpush1.bf16.xpose.msra.mxu0 0
    %2114 = vmatprep.subr.bf16.mxu0 0
    %2115 = vmatpush1.bf16.xpose.msra.mxu0 0
    %2116 = vmatprep.subr.bf16.mxu0 0
    %2117 = vmatpush1.bf16.xpose.msra.mxu0 0
    %2118 = vmatprep.subr.bf16.mxu0 0
    %2119 = vmatpush1.bf16.xpose.msra.mxu0 0
    %2120 = vmatprep.subr.bf16.mxu0 0
    %2121 = vmatpush1.bf16.xpose.msra.mxu0 0
    %2122 = vmatprep.subr.bf16.mxu0 0
    %2123 = vmatpush1.bf16.xpose.msra.mxu0 0
    %2124 = vmatprep.subr.bf16.mxu0 0
    %2125 = vmatpush1.bf16.xpose.msra.mxu0 0
    %2126 = vmatprep.subr.bf16.mxu0 0
    %2127 = vmatpush1.bf16.xpose.msra.mxu0 0
    %2128 = vmatprep.subr.bf16.mxu0 0
    %2129 = vmatpush1.bf16.xpose.msra.mxu0 0
    %2130 = vmatprep.subr.bf16.mxu0 0
    %2131 = vmatpush1.bf16.xpose.msra.mxu0 0
    %2132 = vmatprep.subr.bf16.mxu0 0
    %2133 = vmatpush1.bf16.xpose.msra.mxu0 0
    %2134 = vmatprep.subr.bf16.mxu0 0
    %2135 = vmatpush1.bf16.xpose.msra.mxu0 0
    %2136 = vmatprep.subr.bf16.mxu0 0
    %2137 = vmatpush1.bf16.xpose.msra.mxu0 0
    %2138 = vmatprep.mubr.bf16.mxu0 0
    %2139 = vmatmul.mubr.bf16.gmra.mrb[0].mxu0 %v2104
    %v2140 = vpop.f32.mrb[0].mxu0
    %v2141 = vadd.f32 0.0, %v2140
    %v2142 = vpop.f32.mrb[0].mxu0
    %v2143 = vpop.f32.mrb[0].mxu0
    %v2144 = vpop.f32.mrb[0].mxu0
    %2145 = vdwg.mxu0
    %v2146 = vmul.f32 %v1786, %v1786
    %v2147 = vmul.f32 %v1787, %v1787
    %v2148 = vmul.f32 %v1788, %v1788
    %v2149 = vmul.f32 %v1789, %v1789
    %v2150 = vmul.f32 %v1790, %v1790
    %v2151 = vmul.f32 %v1791, %v1791
    %v2152 = vmul.f32 %v1792, %v1792
    %v2153 = vmul.f32 %v1793, %v1793
    %v2154 = vsel %vm243, %v2146, 0.0
    %2155 = vadd.xlane.f32.xlu0 %v2154
    %v2156 = vpop.xlane.xlu0 %2155
    %v2157 = vsel %vm243, %v2147, 0.0
    %2158 = vadd.xlane.f32.xlu0 %v2157
    %v2159 = vpop.xlane.xlu0 %2158
    %v2160 = vsel %vm243, %v2148, 0.0
    %2161 = vadd.xlane.f32.xlu0 %v2160
    %v2162 = vpop.xlane.xlu0 %2161
    %v2163 = vsel %vm243, %v2149, 0.0
    %2164 = vadd.xlane.f32.xlu0 %v2163
    %v2165 = vpop.xlane.xlu0 %2164
    %v2166 = vsel %vm243, %v2150, 0.0
    %2167 = vadd.xlane.f32.xlu0 %v2166
    %v2168 = vpop.xlane.xlu0 %2167
    %v2169 = vsel %vm243, %v2151, 0.0
    %2170 = vadd.xlane.f32.xlu0 %v2169
    %v2171 = vpop.xlane.xlu0 %2170
    %v2172 = vsel %vm243, %v2152, 0.0
    %2173 = vadd.xlane.f32.xlu0 %v2172
    %v2174 = vpop.xlane.xlu0 %2173
    %v2175 = vsel %vm243, %v2153, 0.0
    %2176 = vadd.xlane.f32.xlu0 %v2175
    %v2177 = vpop.xlane.xlu0 %2176
    %v2179 = vsel %vm243, %v2146, 0
    %2181 = vmatprep.subr.mxu0 0.0
    %2182 = vmatpush1.xpose.msra.mxu0 %v2179
    %2183 = vmatprep.subr.mxu0 0.0
    %2184 = vmatpush1.xpose.msra.mxu0 0.0
    %2185 = vmatprep.subr.mxu0 0.0
    %2186 = vmatpush1.xpose.msra.mxu0 0.0
    %2187 = vmatprep.subr.mxu0 0.0
    %2188 = vmatpush1.xpose.msra.mxu0 0.0
    %2189 = vmatprep.subr.mxu0 0.0
    %2190 = vmatpush1.xpose.msra.mxu0 0.0
    %2191 = vmatprep.subr.mxu0 0.0
    %2192 = vmatpush1.xpose.msra.mxu0 0.0
    %2193 = vmatprep.subr.mxu0 0.0
    %2194 = vmatpush1.xpose.msra.mxu0 0.0
    %2195 = vmatprep.subr.mxu0 0.0
    %2196 = vmatpush1.xpose.msra.mxu0 0.0
    %2197 = vmatprep.subr.mxu0 0.0
    %2198 = vmatpush1.xpose.msra.mxu0 0.0
    %2199 = vmatprep.subr.mxu0 0.0
    %2200 = vmatpush1.xpose.msra.mxu0 0.0
    %2201 = vmatprep.subr.mxu0 0.0
    %2202 = vmatpush1.xpose.msra.mxu0 0.0
    %2203 = vmatprep.subr.mxu0 0.0
    %2204 = vmatpush1.xpose.msra.mxu0 0.0
    %2205 = vmatprep.subr.mxu0 0.0
    %2206 = vmatpush1.xpose.msra.mxu0 0.0
    %2207 = vmatprep.subr.mxu0 0.0
    %2208 = vmatpush1.xpose.msra.mxu0 0.0
    %2209 = vmatprep.subr.mxu0 0.0
    %2210 = vmatpush1.xpose.msra.mxu0 0.0
    %2211 = vmatprep.subr.mxu0 0.0
    %2212 = vmatpush1.xpose.msra.mxu0 0.0
    %2213 = vmatprep.subr.mxu0 0.0
    %2214 = vmatpush1.xpose.msra.mxu0 0.0
    %2215 = vmatprep.subr.mxu0 0.0
    %2216 = vmatpush1.xpose.msra.mxu0 0.0
    %2217 = vmatprep.subr.mxu0 0.0
    %2218 = vmatpush1.xpose.msra.mxu0 0.0
    %2219 = vmatprep.subr.mxu0 0.0
    %2220 = vmatpush1.xpose.msra.mxu0 0.0
    %2221 = vmatprep.subr.mxu0 0.0
    %2222 = vmatpush1.xpose.msra.mxu0 0.0
    %2223 = vmatprep.subr.mxu0 0.0
    %2224 = vmatpush1.xpose.msra.mxu0 0.0
    %2225 = vmatprep.subr.mxu0 0.0
    %2226 = vmatpush1.xpose.msra.mxu0 0.0
    %2227 = vmatprep.subr.mxu0 0.0
    %2228 = vmatpush1.xpose.msra.mxu0 0.0
    %2229 = vmatprep.subr.mxu0 0.0
    %2230 = vmatpush1.xpose.msra.mxu0 0.0
    %2231 = vmatprep.subr.mxu0 0.0
    %2232 = vmatpush1.xpose.msra.mxu0 0.0
    %2233 = vmatprep.subr.mxu0 0.0
    %2234 = vmatpush1.xpose.msra.mxu0 0.0
    %2235 = vmatprep.subr.mxu0 0.0
    %2236 = vmatpush1.xpose.msra.mxu0 0.0
    %2237 = vmatprep.subr.mxu0 0.0
    %2238 = vmatpush1.xpose.msra.mxu0 0.0
    %2239 = vmatprep.subr.mxu0 0.0
    %2240 = vmatpush1.xpose.msra.mxu0 0.0
    %2241 = vmatprep.subr.mxu0 0.0
    %2242 = vmatpush1.xpose.msra.mxu0 0.0
    %2243 = vmatprep.subr.mxu0 0.0
    %2244 = vmatpush1.xpose.msra.mxu0 0.0
    %2245 = vmatprep.mubr.f32.mxu0 0.0
    %2246 = vmatmul.mubr.f32.gmra.mrb[0].mxu0 %v621
    %v2247 = vpop.f32.mrb[0].mxu0
    %v2248 = vadd.f32 0.0, %v2247
    %v2249 = vpop.f32.mrb[0].mxu0
    %2250 = vdwg.mxu0
    %v2252 = vsel %vm243, %v2147, 0
    %2254 = vmatprep.subr.mxu0 0.0
    %2255 = vmatpush1.xpose.msra.mxu0 %v2252
    %2256 = vmatprep.subr.mxu0 0.0
    %2257 = vmatpush1.xpose.msra.mxu0 0.0
    %2258 = vmatprep.subr.mxu0 0.0
    %2259 = vmatpush1.xpose.msra.mxu0 0.0
    %2260 = vmatprep.subr.mxu0 0.0
    %2261 = vmatpush1.xpose.msra.mxu0 0.0
    %2262 = vmatprep.subr.mxu0 0.0
    %2263 = vmatpush1.xpose.msra.mxu0 0.0
    %2264 = vmatprep.subr.mxu0 0.0
    %2265 = vmatpush1.xpose.msra.mxu0 0.0
    %2266 = vmatprep.subr.mxu0 0.0
    %2267 = vmatpush1.xpose.msra.mxu0 0.0
    %2268 = vmatprep.subr.mxu0 0.0
    %2269 = vmatpush1.xpose.msra.mxu0 0.0
    %2270 = vmatprep.subr.mxu0 0.0
    %2271 = vmatpush1.xpose.msra.mxu0 0.0
    %2272 = vmatprep.subr.mxu0 0.0
    %2273 = vmatpush1.xpose.msra.mxu0 0.0
    %2274 = vmatprep.subr.mxu0 0.0
    %2275 = vmatpush1.xpose.msra.mxu0 0.0
    %2276 = vmatprep.subr.mxu0 0.0
    %2277 = vmatpush1.xpose.msra.mxu0 0.0
    %2278 = vmatprep.subr.mxu0 0.0
    %2279 = vmatpush1.xpose.msra.mxu0 0.0
    %2280 = vmatprep.subr.mxu0 0.0
    %2281 = vmatpush1.xpose.msra.mxu0 0.0
    %2282 = vmatprep.subr.mxu0 0.0
    %2283 = vmatpush1.xpose.msra.mxu0 0.0
    %2284 = vmatprep.subr.mxu0 0.0
    %2285 = vmatpush1.xpose.msra.mxu0 0.0
    %2286 = vmatprep.subr.mxu0 0.0
    %2287 = vmatpush1.xpose.msra.mxu0 0.0
    %2288 = vmatprep.subr.mxu0 0.0
    %2289 = vmatpush1.xpose.msra.mxu0 0.0
    %2290 = vmatprep.subr.mxu0 0.0
    %2291 = vmatpush1.xpose.msra.mxu0 0.0
    %2292 = vmatprep.subr.mxu0 0.0
    %2293 = vmatpush1.xpose.msra.mxu0 0.0
    %2294 = vmatprep.subr.mxu0 0.0
    %2295 = vmatpush1.xpose.msra.mxu0 0.0
    %2296 = vmatprep.subr.mxu0 0.0
    %2297 = vmatpush1.xpose.msra.mxu0 0.0
    %2298 = vmatprep.subr.mxu0 0.0
    %2299 = vmatpush1.xpose.msra.mxu0 0.0
    %2300 = vmatprep.subr.mxu0 0.0
    %2301 = vmatpush1.xpose.msra.mxu0 0.0
    %2302 = vmatprep.subr.mxu0 0.0
    %2303 = vmatpush1.xpose.msra.mxu0 0.0
    %2304 = vmatprep.subr.mxu0 0.0
    %2305 = vmatpush1.xpose.msra.mxu0 0.0
    %2306 = vmatprep.subr.mxu0 0.0
    %2307 = vmatpush1.xpose.msra.mxu0 0.0
    %2308 = vmatprep.subr.mxu0 0.0
    %2309 = vmatpush1.xpose.msra.mxu0 0.0
    %2310 = vmatprep.subr.mxu0 0.0
    %2311 = vmatpush1.xpose.msra.mxu0 0.0
    %2312 = vmatprep.subr.mxu0 0.0
    %2313 = vmatpush1.xpose.msra.mxu0 0.0
    %2314 = vmatprep.subr.mxu0 0.0
    %2315 = vmatpush1.xpose.msra.mxu0 0.0
    %2316 = vmatprep.subr.mxu0 0.0
    %2317 = vmatpush1.xpose.msra.mxu0 0.0
    %2318 = vmatprep.mubr.f32.mxu0 0.0
    %2319 = vmatmul.mubr.f32.gmra.mrb[0].mxu0 %v621
    %v2320 = vpop.f32.mrb[0].mxu0
    %v2321 = vadd.f32 0.0, %v2320
    %v2322 = vpop.f32.mrb[0].mxu0
    %2323 = vdwg.mxu0
    %v2325 = vsel %vm243, %v2148, 0
    %2327 = vmatprep.subr.mxu0 0.0
    %2328 = vmatpush1.xpose.msra.mxu0 %v2325
    %2329 = vmatprep.subr.mxu0 0.0
    %2330 = vmatpush1.xpose.msra.mxu0 0.0
    %2331 = vmatprep.subr.mxu0 0.0
    %2332 = vmatpush1.xpose.msra.mxu0 0.0
    %2333 = vmatprep.subr.mxu0 0.0
    %2334 = vmatpush1.xpose.msra.mxu0 0.0
    %2335 = vmatprep.subr.mxu0 0.0
    %2336 = vmatpush1.xpose.msra.mxu0 0.0
    %2337 = vmatprep.subr.mxu0 0.0
    %2338 = vmatpush1.xpose.msra.mxu0 0.0
    %2339 = vmatprep.subr.mxu0 0.0
    %2340 = vmatpush1.xpose.msra.mxu0 0.0
    %2341 = vmatprep.subr.mxu0 0.0
    %2342 = vmatpush1.xpose.msra.mxu0 0.0
    %2343 = vmatprep.subr.mxu0 0.0
    %2344 = vmatpush1.xpose.msra.mxu0 0.0
    %2345 = vmatprep.subr.mxu0 0.0
    %2346 = vmatpush1.xpose.msra.mxu0 0.0
    %2347 = vmatprep.subr.mxu0 0.0
    %2348 = vmatpush1.xpose.msra.mxu0 0.0
    %2349 = vmatprep.subr.mxu0 0.0
    %2350 = vmatpush1.xpose.msra.mxu0 0.0
    %2351 = vmatprep.subr.mxu0 0.0
    %2352 = vmatpush1.xpose.msra.mxu0 0.0
    %2353 = vmatprep.subr.mxu0 0.0
    %2354 = vmatpush1.xpose.msra.mxu0 0.0
    %2355 = vmatprep.subr.mxu0 0.0
    %2356 = vmatpush1.xpose.msra.mxu0 0.0
    %2357 = vmatprep.subr.mxu0 0.0
    %2358 = vmatpush1.xpose.msra.mxu0 0.0
    %2359 = vmatprep.subr.mxu0 0.0
    %2360 = vmatpush1.xpose.msra.mxu0 0.0
    %2361 = vmatprep.subr.mxu0 0.0
    %2362 = vmatpush1.xpose.msra.mxu0 0.0
    %2363 = vmatprep.subr.mxu0 0.0
    %2364 = vmatpush1.xpose.msra.mxu0 0.0
    %2365 = vmatprep.subr.mxu0 0.0
    %2366 = vmatpush1.xpose.msra.mxu0 0.0
    %2367 = vmatprep.subr.mxu0 0.0
    %2368 = vmatpush1.xpose.msra.mxu0 0.0
    %2369 = vmatprep.subr.mxu0 0.0
    %2370 = vmatpush1.xpose.msra.mxu0 0.0
    %2371 = vmatprep.subr.mxu0 0.0
    %2372 = vmatpush1.xpose.msra.mxu0 0.0
    %2373 = vmatprep.subr.mxu0 0.0
    %2374 = vmatpush1.xpose.msra.mxu0 0.0
    %2375 = vmatprep.subr.mxu0 0.0
    %2376 = vmatpush1.xpose.msra.mxu0 0.0
    %2377 = vmatprep.subr.mxu0 0.0
    %2378 = vmatpush1.xpose.msra.mxu0 0.0
    %2379 = vmatprep.subr.mxu0 0.0
    %2380 = vmatpush1.xpose.msra.mxu0 0.0
    %2381 = vmatprep.subr.mxu0 0.0
    %2382 = vmatpush1.xpose.msra.mxu0 0.0
    %2383 = vmatprep.subr.mxu0 0.0
    %2384 = vmatpush1.xpose.msra.mxu0 0.0
    %2385 = vmatprep.subr.mxu0 0.0
    %2386 = vmatpush1.xpose.msra.mxu0 0.0
    %2387 = vmatprep.subr.mxu0 0.0
    %2388 = vmatpush1.xpose.msra.mxu0 0.0
    %2389 = vmatprep.subr.mxu0 0.0
    %2390 = vmatpush1.xpose.msra.mxu0 0.0
    %2391 = vmatprep.mubr.f32.mxu0 0.0
    %2392 = vmatmul.mubr.f32.gmra.mrb[0].mxu0 %v621
    %v2393 = vpop.f32.mrb[0].mxu0
    %v2394 = vadd.f32 0.0, %v2393
    %v2395 = vpop.f32.mrb[0].mxu0
    %2396 = vdwg.mxu0
    %v2398 = vsel %vm243, %v2149, 0
    %2400 = vmatprep.subr.mxu0 0.0
    %2401 = vmatpush1.xpose.msra.mxu0 %v2398
    %2402 = vmatprep.subr.mxu0 0.0
    %2403 = vmatpush1.xpose.msra.mxu0 0.0
    %2404 = vmatprep.subr.mxu0 0.0
    %2405 = vmatpush1.xpose.msra.mxu0 0.0
    %2406 = vmatprep.subr.mxu0 0.0
    %2407 = vmatpush1.xpose.msra.mxu0 0.0
    %2408 = vmatprep.subr.mxu0 0.0
    %2409 = vmatpush1.xpose.msra.mxu0 0.0
    %2410 = vmatprep.subr.mxu0 0.0
    %2411 = vmatpush1.xpose.msra.mxu0 0.0
    %2412 = vmatprep.subr.mxu0 0.0
    %2413 = vmatpush1.xpose.msra.mxu0 0.0
    %2414 = vmatprep.subr.mxu0 0.0
    %2415 = vmatpush1.xpose.msra.mxu0 0.0
    %2416 = vmatprep.subr.mxu0 0.0
    %2417 = vmatpush1.xpose.msra.mxu0 0.0
    %2418 = vmatprep.subr.mxu0 0.0
    %2419 = vmatpush1.xpose.msra.mxu0 0.0
    %2420 = vmatprep.subr.mxu0 0.0
    %2421 = vmatpush1.xpose.msra.mxu0 0.0
    %2422 = vmatprep.subr.mxu0 0.0
    %2423 = vmatpush1.xpose.msra.mxu0 0.0
    %2424 = vmatprep.subr.mxu0 0.0
    %2425 = vmatpush1.xpose.msra.mxu0 0.0
    %2426 = vmatprep.subr.mxu0 0.0
    %2427 = vmatpush1.xpose.msra.mxu0 0.0
    %2428 = vmatprep.subr.mxu0 0.0
    %2429 = vmatpush1.xpose.msra.mxu0 0.0
    %2430 = vmatprep.subr.mxu0 0.0
    %2431 = vmatpush1.xpose.msra.mxu0 0.0
    %2432 = vmatprep.subr.mxu0 0.0
    %2433 = vmatpush1.xpose.msra.mxu0 0.0
    %2434 = vmatprep.subr.mxu0 0.0
    %2435 = vmatpush1.xpose.msra.mxu0 0.0
    %2436 = vmatprep.subr.mxu0 0.0
    %2437 = vmatpush1.xpose.msra.mxu0 0.0
    %2438 = vmatprep.subr.mxu0 0.0
    %2439 = vmatpush1.xpose.msra.mxu0 0.0
    %2440 = vmatprep.subr.mxu0 0.0
    %2441 = vmatpush1.xpose.msra.mxu0 0.0
    %2442 = vmatprep.subr.mxu0 0.0
    %2443 = vmatpush1.xpose.msra.mxu0 0.0
    %2444 = vmatprep.subr.mxu0 0.0
    %2445 = vmatpush1.xpose.msra.mxu0 0.0
    %2446 = vmatprep.subr.mxu0 0.0
    %2447 = vmatpush1.xpose.msra.mxu0 0.0
    %2448 = vmatprep.subr.mxu0 0.0
    %2449 = vmatpush1.xpose.msra.mxu0 0.0
    %2450 = vmatprep.subr.mxu0 0.0
    %2451 = vmatpush1.xpose.msra.mxu0 0.0
    %2452 = vmatprep.subr.mxu0 0.0
    %2453 = vmatpush1.xpose.msra.mxu0 0.0
    %2454 = vmatprep.subr.mxu0 0.0
    %2455 = vmatpush1.xpose.msra.mxu0 0.0
    %2456 = vmatprep.subr.mxu0 0.0
    %2457 = vmatpush1.xpose.msra.mxu0 0.0
    %2458 = vmatprep.subr.mxu0 0.0
    %2459 = vmatpush1.xpose.msra.mxu0 0.0
    %2460 = vmatprep.subr.mxu0 0.0
    %2461 = vmatpush1.xpose.msra.mxu0 0.0
    %2462 = vmatprep.subr.mxu0 0.0
    %2463 = vmatpush1.xpose.msra.mxu0 0.0
    %2464 = vmatprep.mubr.f32.mxu0 0.0
    %2465 = vmatmul.mubr.f32.gmra.mrb[0].mxu0 %v621
    %v2466 = vpop.f32.mrb[0].mxu0
    %v2467 = vadd.f32 0.0, %v2466
    %v2468 = vpop.f32.mrb[0].mxu0
    %2469 = vdwg.mxu0
    %v2471 = vsel %vm243, %v2150, 0
    %2473 = vmatprep.subr.mxu0 0.0
    %2474 = vmatpush1.xpose.msra.mxu0 %v2471
    %2475 = vmatprep.subr.mxu0 0.0
    %2476 = vmatpush1.xpose.msra.mxu0 0.0
    %2477 = vmatprep.subr.mxu0 0.0
    %2478 = vmatpush1.xpose.msra.mxu0 0.0
    %2479 = vmatprep.subr.mxu0 0.0
    %2480 = vmatpush1.xpose.msra.mxu0 0.0
    %2481 = vmatprep.subr.mxu0 0.0
    %2482 = vmatpush1.xpose.msra.mxu0 0.0
    %2483 = vmatprep.subr.mxu0 0.0
    %2484 = vmatpush1.xpose.msra.mxu0 0.0
    %2485 = vmatprep.subr.mxu0 0.0
    %2486 = vmatpush1.xpose.msra.mxu0 0.0
    %2487 = vmatprep.subr.mxu0 0.0
    %2488 = vmatpush1.xpose.msra.mxu0 0.0
    %2489 = vmatprep.subr.mxu0 0.0
    %2490 = vmatpush1.xpose.msra.mxu0 0.0
    %2491 = vmatprep.subr.mxu0 0.0
    %2492 = vmatpush1.xpose.msra.mxu0 0.0
    %2493 = vmatprep.subr.mxu0 0.0
    %2494 = vmatpush1.xpose.msra.mxu0 0.0
    %2495 = vmatprep.subr.mxu0 0.0
    %2496 = vmatpush1.xpose.msra.mxu0 0.0
    %2497 = vmatprep.subr.mxu0 0.0
    %2498 = vmatpush1.xpose.msra.mxu0 0.0
    %2499 = vmatprep.subr.mxu0 0.0
    %2500 = vmatpush1.xpose.msra.mxu0 0.0
    %2501 = vmatprep.subr.mxu0 0.0
    %2502 = vmatpush1.xpose.msra.mxu0 0.0
    %2503 = vmatprep.subr.mxu0 0.0
    %2504 = vmatpush1.xpose.msra.mxu0 0.0
    %2505 = vmatprep.subr.mxu0 0.0
    %2506 = vmatpush1.xpose.msra.mxu0 0.0
    %2507 = vmatprep.subr.mxu0 0.0
    %2508 = vmatpush1.xpose.msra.mxu0 0.0
    %2509 = vmatprep.subr.mxu0 0.0
    %2510 = vmatpush1.xpose.msra.mxu0 0.0
    %2511 = vmatprep.subr.mxu0 0.0
    %2512 = vmatpush1.xpose.msra.mxu0 0.0
    %2513 = vmatprep.subr.mxu0 0.0
    %2514 = vmatpush1.xpose.msra.mxu0 0.0
    %2515 = vmatprep.subr.mxu0 0.0
    %2516 = vmatpush1.xpose.msra.mxu0 0.0
    %2517 = vmatprep.subr.mxu0 0.0
    %2518 = vmatpush1.xpose.msra.mxu0 0.0
    %2519 = vmatprep.subr.mxu0 0.0
    %2520 = vmatpush1.xpose.msra.mxu0 0.0
    %2521 = vmatprep.subr.mxu0 0.0
    %2522 = vmatpush1.xpose.msra.mxu0 0.0
    %2523 = vmatprep.subr.mxu0 0.0
    %2524 = vmatpush1.xpose.msra.mxu0 0.0
    %2525 = vmatprep.subr.mxu0 0.0
    %2526 = vmatpush1.xpose.msra.mxu0 0.0
    %2527 = vmatprep.subr.mxu0 0.0
    %2528 = vmatpush1.xpose.msra.mxu0 0.0
    %2529 = vmatprep.subr.mxu0 0.0
    %2530 = vmatpush1.xpose.msra.mxu0 0.0
    %2531 = vmatprep.subr.mxu0 0.0
    %2532 = vmatpush1.xpose.msra.mxu0 0.0
    %2533 = vmatprep.subr.mxu0 0.0
    %2534 = vmatpush1.xpose.msra.mxu0 0.0
    %2535 = vmatprep.subr.mxu0 0.0
    %2536 = vmatpush1.xpose.msra.mxu0 0.0
    %2537 = vmatprep.mubr.f32.mxu0 0.0
    %2538 = vmatmul.mubr.f32.gmra.mrb[0].mxu0 %v621
    %v2539 = vpop.f32.mrb[0].mxu0
    %v2540 = vadd.f32 0.0, %v2539
    %v2541 = vpop.f32.mrb[0].mxu0
    %2542 = vdwg.mxu0
    %v2544 = vsel %vm243, %v2151, 0
    %2546 = vmatprep.subr.mxu0 0.0
    %2547 = vmatpush1.xpose.msra.mxu0 %v2544
    %2548 = vmatprep.subr.mxu0 0.0
    %2549 = vmatpush1.xpose.msra.mxu0 0.0
    %2550 = vmatprep.subr.mxu0 0.0
    %2551 = vmatpush1.xpose.msra.mxu0 0.0
    %2552 = vmatprep.subr.mxu0 0.0
    %2553 = vmatpush1.xpose.msra.mxu0 0.0
    %2554 = vmatprep.subr.mxu0 0.0
    %2555 = vmatpush1.xpose.msra.mxu0 0.0
    %2556 = vmatprep.subr.mxu0 0.0
    %2557 = vmatpush1.xpose.msra.mxu0 0.0
    %2558 = vmatprep.subr.mxu0 0.0
    %2559 = vmatpush1.xpose.msra.mxu0 0.0
    %2560 = vmatprep.subr.mxu0 0.0
    %2561 = vmatpush1.xpose.msra.mxu0 0.0
    %2562 = vmatprep.subr.mxu0 0.0
    %2563 = vmatpush1.xpose.msra.mxu0 0.0
    %2564 = vmatprep.subr.mxu0 0.0
    %2565 = vmatpush1.xpose.msra.mxu0 0.0
    %2566 = vmatprep.subr.mxu0 0.0
    %2567 = vmatpush1.xpose.msra.mxu0 0.0
    %2568 = vmatprep.subr.mxu0 0.0
    %2569 = vmatpush1.xpose.msra.mxu0 0.0
    %2570 = vmatprep.subr.mxu0 0.0
    %2571 = vmatpush1.xpose.msra.mxu0 0.0
    %2572 = vmatprep.subr.mxu0 0.0
    %2573 = vmatpush1.xpose.msra.mxu0 0.0
    %2574 = vmatprep.subr.mxu0 0.0
    %2575 = vmatpush1.xpose.msra.mxu0 0.0
    %2576 = vmatprep.subr.mxu0 0.0
    %2577 = vmatpush1.xpose.msra.mxu0 0.0
    %2578 = vmatprep.subr.mxu0 0.0
    %2579 = vmatpush1.xpose.msra.mxu0 0.0
    %2580 = vmatprep.subr.mxu0 0.0
    %2581 = vmatpush1.xpose.msra.mxu0 0.0
    %2582 = vmatprep.subr.mxu0 0.0
    %2583 = vmatpush1.xpose.msra.mxu0 0.0
    %2584 = vmatprep.subr.mxu0 0.0
    %2585 = vmatpush1.xpose.msra.mxu0 0.0
    %2586 = vmatprep.subr.mxu0 0.0
    %2587 = vmatpush1.xpose.msra.mxu0 0.0
    %2588 = vmatprep.subr.mxu0 0.0
    %2589 = vmatpush1.xpose.msra.mxu0 0.0
    %2590 = vmatprep.subr.mxu0 0.0
    %2591 = vmatpush1.xpose.msra.mxu0 0.0
    %2592 = vmatprep.subr.mxu0 0.0
    %2593 = vmatpush1.xpose.msra.mxu0 0.0
    %2594 = vmatprep.subr.mxu0 0.0
    %2595 = vmatpush1.xpose.msra.mxu0 0.0
    %2596 = vmatprep.subr.mxu0 0.0
    %2597 = vmatpush1.xpose.msra.mxu0 0.0
    %2598 = vmatprep.subr.mxu0 0.0
    %2599 = vmatpush1.xpose.msra.mxu0 0.0
    %2600 = vmatprep.subr.mxu0 0.0
    %2601 = vmatpush1.xpose.msra.mxu0 0.0
    %2602 = vmatprep.subr.mxu0 0.0
    %2603 = vmatpush1.xpose.msra.mxu0 0.0
    %2604 = vmatprep.subr.mxu0 0.0
    %2605 = vmatpush1.xpose.msra.mxu0 0.0
    %2606 = vmatprep.subr.mxu0 0.0
    %2607 = vmatpush1.xpose.msra.mxu0 0.0
    %2608 = vmatprep.subr.mxu0 0.0
    %2609 = vmatpush1.xpose.msra.mxu0 0.0
    %2610 = vmatprep.mubr.f32.mxu0 0.0
    %2611 = vmatmul.mubr.f32.gmra.mrb[0].mxu0 %v621
    %v2612 = vpop.f32.mrb[0].mxu0
    %v2613 = vadd.f32 0.0, %v2612
    %v2614 = vpop.f32.mrb[0].mxu0
    %2615 = vdwg.mxu0
    %v2617 = vsel %vm243, %v2152, 0
    %2619 = vmatprep.subr.mxu0 0.0
    %2620 = vmatpush1.xpose.msra.mxu0 %v2617
    %2621 = vmatprep.subr.mxu0 0.0
    %2622 = vmatpush1.xpose.msra.mxu0 0.0
    %2623 = vmatprep.subr.mxu0 0.0
    %2624 = vmatpush1.xpose.msra.mxu0 0.0
    %2625 = vmatprep.subr.mxu0 0.0
    %2626 = vmatpush1.xpose.msra.mxu0 0.0
    %2627 = vmatprep.subr.mxu0 0.0
    %2628 = vmatpush1.xpose.msra.mxu0 0.0
    %2629 = vmatprep.subr.mxu0 0.0
    %2630 = vmatpush1.xpose.msra.mxu0 0.0
    %2631 = vmatprep.subr.mxu0 0.0
    %2632 = vmatpush1.xpose.msra.mxu0 0.0
    %2633 = vmatprep.subr.mxu0 0.0
    %2634 = vmatpush1.xpose.msra.mxu0 0.0
    %2635 = vmatprep.subr.mxu0 0.0
    %2636 = vmatpush1.xpose.msra.mxu0 0.0
    %2637 = vmatprep.subr.mxu0 0.0
    %2638 = vmatpush1.xpose.msra.mxu0 0.0
    %2639 = vmatprep.subr.mxu0 0.0
    %2640 = vmatpush1.xpose.msra.mxu0 0.0
    %2641 = vmatprep.subr.mxu0 0.0
    %2642 = vmatpush1.xpose.msra.mxu0 0.0
    %2643 = vmatprep.subr.mxu0 0.0
    %2644 = vmatpush1.xpose.msra.mxu0 0.0
    %2645 = vmatprep.subr.mxu0 0.0
    %2646 = vmatpush1.xpose.msra.mxu0 0.0
    %2647 = vmatprep.subr.mxu0 0.0
    %2648 = vmatpush1.xpose.msra.mxu0 0.0
    %2649 = vmatprep.subr.mxu0 0.0
    %2650 = vmatpush1.xpose.msra.mxu0 0.0
    %2651 = vmatprep.subr.mxu0 0.0
    %2652 = vmatpush1.xpose.msra.mxu0 0.0
    %2653 = vmatprep.subr.mxu0 0.0
    %2654 = vmatpush1.xpose.msra.mxu0 0.0
    %2655 = vmatprep.subr.mxu0 0.0
    %2656 = vmatpush1.xpose.msra.mxu0 0.0
    %2657 = vmatprep.subr.mxu0 0.0
    %2658 = vmatpush1.xpose.msra.mxu0 0.0
    %2659 = vmatprep.subr.mxu0 0.0
    %2660 = vmatpush1.xpose.msra.mxu0 0.0
    %2661 = vmatprep.subr.mxu0 0.0
    %2662 = vmatpush1.xpose.msra.mxu0 0.0
    %2663 = vmatprep.subr.mxu0 0.0
    %2664 = vmatpush1.xpose.msra.mxu0 0.0
    %2665 = vmatprep.subr.mxu0 0.0
    %2666 = vmatpush1.xpose.msra.mxu0 0.0
    %2667 = vmatprep.subr.mxu0 0.0
    %2668 = vmatpush1.xpose.msra.mxu0 0.0
    %2669 = vmatprep.subr.mxu0 0.0
    %2670 = vmatpush1.xpose.msra.mxu0 0.0
    %2671 = vmatprep.subr.mxu0 0.0
    %2672 = vmatpush1.xpose.msra.mxu0 0.0
    %2673 = vmatprep.subr.mxu0 0.0
    %2674 = vmatpush1.xpose.msra.mxu0 0.0
    %2675 = vmatprep.subr.mxu0 0.0
    %2676 = vmatpush1.xpose.msra.mxu0 0.0
    %2677 = vmatprep.subr.mxu0 0.0
    %2678 = vmatpush1.xpose.msra.mxu0 0.0
    %2679 = vmatprep.subr.mxu0 0.0
    %2680 = vmatpush1.xpose.msra.mxu0 0.0
    %2681 = vmatprep.subr.mxu0 0.0
    %2682 = vmatpush1.xpose.msra.mxu0 0.0
    %2683 = vmatprep.mubr.f32.mxu0 0.0
    %2684 = vmatmul.mubr.f32.gmra.mrb[0].mxu0 %v621
    %v2685 = vpop.f32.mrb[0].mxu0
    %v2686 = vadd.f32 0.0, %v2685
    %v2687 = vpop.f32.mrb[0].mxu0
    %2688 = vdwg.mxu0
    %v2690 = vsel %vm243, %v2153, 0
    %2692 = vmatprep.subr.mxu0 0.0
    %2693 = vmatpush1.xpose.msra.mxu0 %v2690
    %2694 = vmatprep.subr.mxu0 0.0
    %2695 = vmatpush1.xpose.msra.mxu0 0.0
    %2696 = vmatprep.subr.mxu0 0.0
    %2697 = vmatpush1.xpose.msra.mxu0 0.0
    %2698 = vmatprep.subr.mxu0 0.0
    %2699 = vmatpush1.xpose.msra.mxu0 0.0
    %2700 = vmatprep.subr.mxu0 0.0
    %2701 = vmatpush1.xpose.msra.mxu0 0.0
    %2702 = vmatprep.subr.mxu0 0.0
    %2703 = vmatpush1.xpose.msra.mxu0 0.0
    %2704 = vmatprep.subr.mxu0 0.0
    %2705 = vmatpush1.xpose.msra.mxu0 0.0
    %2706 = vmatprep.subr.mxu0 0.0
    %2707 = vmatpush1.xpose.msra.mxu0 0.0
    %2708 = vmatprep.subr.mxu0 0.0
    %2709 = vmatpush1.xpose.msra.mxu0 0.0
    %2710 = vmatprep.subr.mxu0 0.0
    %2711 = vmatpush1.xpose.msra.mxu0 0.0
    %2712 = vmatprep.subr.mxu0 0.0
    %2713 = vmatpush1.xpose.msra.mxu0 0.0
    %2714 = vmatprep.subr.mxu0 0.0
    %2715 = vmatpush1.xpose.msra.mxu0 0.0
    %2716 = vmatprep.subr.mxu0 0.0
    %2717 = vmatpush1.xpose.msra.mxu0 0.0
    %2718 = vmatprep.subr.mxu0 0.0
    %2719 = vmatpush1.xpose.msra.mxu0 0.0
    %2720 = vmatprep.subr.mxu0 0.0
    %2721 = vmatpush1.xpose.msra.mxu0 0.0
    %2722 = vmatprep.subr.mxu0 0.0
    %2723 = vmatpush1.xpose.msra.mxu0 0.0
    %2724 = vmatprep.subr.mxu0 0.0
    %2725 = vmatpush1.xpose.msra.mxu0 0.0
    %2726 = vmatprep.subr.mxu0 0.0
    %2727 = vmatpush1.xpose.msra.mxu0 0.0
    %2728 = vmatprep.subr.mxu0 0.0
    %2729 = vmatpush1.xpose.msra.mxu0 0.0
    %2730 = vmatprep.subr.mxu0 0.0
    %2731 = vmatpush1.xpose.msra.mxu0 0.0
    %2732 = vmatprep.subr.mxu0 0.0
    %2733 = vmatpush1.xpose.msra.mxu0 0.0
    %2734 = vmatprep.subr.mxu0 0.0
    %2735 = vmatpush1.xpose.msra.mxu0 0.0
    %2736 = vmatprep.subr.mxu0 0.0
    %2737 = vmatpush1.xpose.msra.mxu0 0.0
    %2738 = vmatprep.subr.mxu0 0.0
    %2739 = vmatpush1.xpose.msra.mxu0 0.0
    %2740 = vmatprep.subr.mxu0 0.0
    %2741 = vmatpush1.xpose.msra.mxu0 0.0
    %2742 = vmatprep.subr.mxu0 0.0
    %2743 = vmatpush1.xpose.msra.mxu0 0.0
    %2744 = vmatprep.subr.mxu0 0.0
    %2745 = vmatpush1.xpose.msra.mxu0 0.0
    %2746 = vmatprep.subr.mxu0 0.0
    %2747 = vmatpush1.xpose.msra.mxu0 0.0
    %2748 = vmatprep.subr.mxu0 0.0
    %2749 = vmatpush1.xpose.msra.mxu0 0.0
    %2750 = vmatprep.subr.mxu0 0.0
    %2751 = vmatpush1.xpose.msra.mxu0 0.0
    %2752 = vmatprep.subr.mxu0 0.0
    %2753 = vmatpush1.xpose.msra.mxu0 0.0
    %2754 = vmatprep.subr.mxu0 0.0
    %2755 = vmatpush1.xpose.msra.mxu0 0.0
    %2756 = vmatprep.mubr.f32.mxu0 0.0
    %2757 = vmatmul.mubr.f32.gmra.mrb[0].mxu0 %v621
    %v2758 = vpop.f32.mrb[0].mxu0
    %v2759 = vadd.f32 0.0, %v2758
    %v2760 = vpop.f32.mrb[0].mxu0
    %2761 = vdwg.mxu0
    %v2762 = vlaneseq
    %v2763 = vshrl.u32 %v2762, 7
    %v2764 = vsub.s32 0, %v2763
    %v2765 = vrot.slane %v2248, %v2764
    %v2766 = vlaneseq
    %v2767 = vshrl.u32 %v2766, 7
    %v2768 = vsub.s32 0, %v2767
    %v2769 = vrot.slane %v2321, %v2768
    %v2770 = vlaneseq
    %v2771 = vshrl.u32 %v2770, 7
    %v2772 = vsub.s32 0, %v2771
    %v2773 = vrot.slane %v2394, %v2772
    %v2774 = vlaneseq
    %v2775 = vshrl.u32 %v2774, 7
    %v2776 = vsub.s32 0, %v2775
    %v2777 = vrot.slane %v2467, %v2776
    %v2778 = vlaneseq
    %v2779 = vshrl.u32 %v2778, 7
    %v2780 = vsub.s32 0, %v2779
    %v2781 = vrot.slane %v2540, %v2780
    %v2782 = vlaneseq
    %v2783 = vshrl.u32 %v2782, 7
    %v2784 = vsub.s32 0, %v2783
    %v2785 = vrot.slane %v2613, %v2784
    %v2786 = vlaneseq
    %v2787 = vshrl.u32 %v2786, 7
    %v2788 = vsub.s32 0, %v2787
    %v2789 = vrot.slane %v2686, %v2788
    %v2790 = vlaneseq
    %v2791 = vshrl.u32 %v2790, 7
    %v2792 = vsub.s32 0, %v2791
    %v2793 = vrot.slane %v2759, %v2792
    %v2794 = vadd.f32 %v2156, %v2765
    %v2795 = vadd.f32 %v2159, %v2769
    %v2796 = vadd.f32 %v2162, %v2773
    %v2797 = vadd.f32 %v2165, %v2777
    %v2798 = vadd.f32 %v2168, %v2781
    %v2799 = vadd.f32 %v2171, %v2785
    %v2800 = vadd.f32 %v2174, %v2789
    %v2801 = vadd.f32 %v2177, %v2793
    %v2802 = vmul.f32 %v1840, 2.0
    %v2803 = vmul.f32 %v1883, 2.0
    %v2804 = vmul.f32 %v1926, 2.0
    %v2805 = vmul.f32 %v1969, 2.0
    %v2806 = vmul.f32 %v2012, 2.0
    %v2807 = vmul.f32 %v2055, 2.0
    %v2808 = vmul.f32 %v2098, 2.0
    %v2809 = vmul.f32 %v2141, 2.0
    %v2810 = vsub.f32 %v2794, %v2802
    %v2811 = vsub.f32 %v2795, %v2803
    %v2812 = vsub.f32 %v2796, %v2804
    %v2813 = vsub.f32 %v2797, %v2805
    %v2814 = vsub.f32 %v2798, %v2806
    %v2815 = vsub.f32 %v2799, %v2807
    %v2816 = vsub.f32 %v2800, %v2808
    %v2817 = vsub.f32 %v2801, %v2809
    %v2818 = vmax.f32 %v2810, 0.0
    %v2819 = vmax.f32 %v2811, 0.0
    %v2820 = vmax.f32 %v2812, 0.0
    %v2821 = vmax.f32 %v2813, 0.0
    %v2822 = vmax.f32 %v2814, 0.0
    %v2823 = vmax.f32 %v2815, 0.0
    %v2824 = vmax.f32 %v2816, 0.0
    %v2825 = vmax.f32 %v2817, 0.0
    %vm2826 = vcmp.gt.f32.partialorder %v2156, 0.0
    %vm2827 = vcmp.gt.f32.partialorder %v2159, 0.0
    %vm2828 = vcmp.gt.f32.partialorder %v2162, 0.0
    %vm2829 = vcmp.gt.f32.partialorder %v2165, 0.0
    %vm2830 = vcmp.gt.f32.partialorder %v2168, 0.0
    %vm2831 = vcmp.gt.f32.partialorder %v2171, 0.0
    %vm2832 = vcmp.gt.f32.partialorder %v2174, 0.0
    %vm2833 = vcmp.gt.f32.partialorder %v2177, 0.0
    %vm2834 = vcmp.gt.f32.partialorder %v2248, 0.0
    %vm2835 = vcmp.gt.f32.partialorder %v2321, 0.0
    %vm2836 = vcmp.gt.f32.partialorder %v2394, 0.0
    %vm2837 = vcmp.gt.f32.partialorder %v2467, 0.0
    %vm2838 = vcmp.gt.f32.partialorder %v2540, 0.0
    %vm2839 = vcmp.gt.f32.partialorder %v2613, 0.0
    %vm2840 = vcmp.gt.f32.partialorder %v2686, 0.0
    %vm2841 = vcmp.gt.f32.partialorder %v2759, 0.0
    %v2842 = vsel %vm2826, 1, 0
    %v2843 = vsel %vm2827, 1, 0
    %v2844 = vsel %vm2828, 1, 0
    %v2845 = vsel %vm2829, 1, 0
    %v2846 = vsel %vm2830, 1, 0
    %v2847 = vsel %vm2831, 1, 0
    %v2848 = vsel %vm2832, 1, 0
    %v2849 = vsel %vm2833, 1, 0
    %vm2850 = vcmp.eq.s32.totalorder %v2842, 1
    %vm2851 = vcmp.eq.s32.totalorder %v2843, 1
    %vm2852 = vcmp.eq.s32.totalorder %v2844, 1
    %vm2853 = vcmp.eq.s32.totalorder %v2845, 1
    %vm2854 = vcmp.eq.s32.totalorder %v2846, 1
    %vm2855 = vcmp.eq.s32.totalorder %v2847, 1
    %vm2856 = vcmp.eq.s32.totalorder %v2848, 1
    %vm2857 = vcmp.eq.s32.totalorder %v2849, 1
    %v2858 = vsel %vm2834, 1, 0
    %v2859 = vsel %vm2835, 1, 0
    %v2860 = vsel %vm2836, 1, 0
    %v2861 = vsel %vm2837, 1, 0
    %v2862 = vsel %vm2838, 1, 0
    %v2863 = vsel %vm2839, 1, 0
    %v2864 = vsel %vm2840, 1, 0
    %v2865 = vsel %vm2841, 1, 0
    %v2866 = vlaneseq
    %v2867 = vshrl.u32 %v2866, 7
    %v2868 = vsub.s32 0, %v2867
    %v2869 = vrot.slane %v2858, %v2868
    %v2870 = vlaneseq
    %v2871 = vshrl.u32 %v2870, 7
    %v2872 = vsub.s32 0, %v2871
    %v2873 = vrot.slane %v2859, %v2872
    %v2874 = vlaneseq
    %v2875 = vshrl.u32 %v2874, 7
    %v2876 = vsub.s32 0, %v2875
    %v2877 = vrot.slane %v2860, %v2876
    %v2878 = vlaneseq
    %v2879 = vshrl.u32 %v2878, 7
    %v2880 = vsub.s32 0, %v2879
    %v2881 = vrot.slane %v2861, %v2880
    %v2882 = vlaneseq
    %v2883 = vshrl.u32 %v2882, 7
    %v2884 = vsub.s32 0, %v2883
    %v2885 = vrot.slane %v2862, %v2884
    %v2886 = vlaneseq
    %v2887 = vshrl.u32 %v2886, 7
    %v2888 = vsub.s32 0, %v2887
    %v2889 = vrot.slane %v2863, %v2888
    %v2890 = vlaneseq
    %v2891 = vshrl.u32 %v2890, 7
    %v2892 = vsub.s32 0, %v2891
    %v2893 = vrot.slane %v2864, %v2892
    %v2894 = vlaneseq
    %v2895 = vshrl.u32 %v2894, 7
    %v2896 = vsub.s32 0, %v2895
    %v2897 = vrot.slane %v2865, %v2896
    %vm2898 = vcmp.eq.s32.totalorder %v2869, 1
    %vm2899 = vcmp.eq.s32.totalorder %v2873, 1
    %vm2900 = vcmp.eq.s32.totalorder %v2877, 1
    %vm2901 = vcmp.eq.s32.totalorder %v2881, 1
    %vm2902 = vcmp.eq.s32.totalorder %v2885, 1
    %vm2903 = vcmp.eq.s32.totalorder %v2889, 1
    %vm2904 = vcmp.eq.s32.totalorder %v2893, 1
    %vm2905 = vcmp.eq.s32.totalorder %v2897, 1
    %vm2906 = vmand %vm2850, %vm2898
    %vm2907 = vmand %vm2851, %vm2899
    %vm2908 = vmand %vm2852, %vm2900
    %vm2909 = vmand %vm2853, %vm2901
    %vm2910 = vmand %vm2854, %vm2902
    %vm2911 = vmand %vm2855, %vm2903
    %vm2912 = vmand %vm2856, %vm2904
    %vm2913 = vmand %vm2857, %vm2905
    %vm2914 = vmand %vm2906, %vm1360
    %vm2915 = vmand %vm2907, %vm1360
    %vm2916 = vmand %vm2908, %vm1360
    %vm2917 = vmand %vm2909, %vm1360
    %vm2918 = vmand %vm2910, %vm1360
    %vm2919 = vmand %vm2911, %vm1360
    %vm2920 = vmand %vm2912, %vm1360
    %vm2921 = vmand %vm2913, %vm1360
    %v2922 = vrsqrt.pop %v2818
    %v2923 = vmul.f32 %v2818, %v2922
    %vm2924 = vcmp.eq.f32.partialorder %v2818, inf
    %v2925 = vsel %vm2924, %v2818, %v2923
    %vm2926 = vcmp.eq.f32.partialorder %v2818, 0.0
    %v2927 = vand.u32 %v2818, 2147483648
    %v2928 = vsel %vm2926, %v2927, %v2925
    %v2929 = vrsqrt.pop %v2819
    %v2930 = vmul.f32 %v2819, %v2929
    %vm2931 = vcmp.eq.f32.partialorder %v2819, inf
    %v2932 = vsel %vm2931, %v2819, %v2930
    %vm2933 = vcmp.eq.f32.partialorder %v2819, 0.0
    %v2934 = vand.u32 %v2819, 2147483648
    %v2935 = vsel %vm2933, %v2934, %v2932
    %v2936 = vrsqrt.pop %v2820
    %v2937 = vmul.f32 %v2820, %v2936
    %vm2938 = vcmp.eq.f32.partialorder %v2820, inf
    %v2939 = vsel %vm2938, %v2820, %v2937
    %vm2940 = vcmp.eq.f32.partialorder %v2820, 0.0
    %v2941 = vand.u32 %v2820, 2147483648
    %v2942 = vsel %vm2940, %v2941, %v2939
    %v2943 = vrsqrt.pop %v2821
    %v2944 = vmul.f32 %v2821, %v2943
    %vm2945 = vcmp.eq.f32.partialorder %v2821, inf
    %v2946 = vsel %vm2945, %v2821, %v2944
    %vm2947 = vcmp.eq.f32.partialorder %v2821, 0.0
    %v2948 = vand.u32 %v2821, 2147483648
    %v2949 = vsel %vm2947, %v2948, %v2946
    %v2950 = vrsqrt.pop %v2822
    %v2951 = vmul.f32 %v2822, %v2950
    %vm2952 = vcmp.eq.f32.partialorder %v2822, inf
    %v2953 = vsel %vm2952, %v2822, %v2951
    %vm2954 = vcmp.eq.f32.partialorder %v2822, 0.0
    %v2955 = vand.u32 %v2822, 2147483648
    %v2956 = vsel %vm2954, %v2955, %v2953
    %v2957 = vrsqrt.pop %v2823
    %v2958 = vmul.f32 %v2823, %v2957
    %vm2959 = vcmp.eq.f32.partialorder %v2823, inf
    %v2960 = vsel %vm2959, %v2823, %v2958
    %vm2961 = vcmp.eq.f32.partialorder %v2823, 0.0
    %v2962 = vand.u32 %v2823, 2147483648
    %v2963 = vsel %vm2961, %v2962, %v2960
    %v2964 = vrsqrt.pop %v2824
    %v2965 = vmul.f32 %v2824, %v2964
    %vm2966 = vcmp.eq.f32.partialorder %v2824, inf
    %v2967 = vsel %vm2966, %v2824, %v2965
    %vm2968 = vcmp.eq.f32.partialorder %v2824, 0.0
    %v2969 = vand.u32 %v2824, 2147483648
    %v2970 = vsel %vm2968, %v2969, %v2967
    %v2971 = vrsqrt.pop %v2825
    %v2972 = vmul.f32 %v2825, %v2971
    %vm2973 = vcmp.eq.f32.partialorder %v2825, inf
    %v2974 = vsel %vm2973, %v2825, %v2972
    %vm2975 = vcmp.eq.f32.partialorder %v2825, 0.0
    %v2976 = vand.u32 %v2825, 2147483648
    %v2977 = vsel %vm2975, %v2976, %v2974
    %v2978 = vsel %vm2914, %v2928, 0.0
    %v2979 = vsel %vm2915, %v2935, 0.0
    %v2980 = vsel %vm2916, %v2942, 0.0
    %v2981 = vsel %vm2917, %v2949, 0.0
    %v2982 = vsel %vm2918, %v2956, 0.0
    %v2983 = vsel %vm2919, %v2963, 0.0
    %v2984 = vsel %vm2920, %v2970, 0.0
    %v2985 = vsel %vm2921, %v2977, 0.0
    %vm2986 = vcmp.gt.f32.partialorder %v2978, 0.0
    %vm2987 = vcmp.gt.f32.partialorder %v2979, 0.0
    %vm2988 = vcmp.gt.f32.partialorder %v2980, 0.0
    %vm2989 = vcmp.gt.f32.partialorder %v2981, 0.0
    %vm2990 = vcmp.gt.f32.partialorder %v2982, 0.0
    %vm2991 = vcmp.gt.f32.partialorder %v2983, 0.0
    %vm2992 = vcmp.gt.f32.partialorder %v2984, 0.0
    %vm2993 = vcmp.gt.f32.partialorder %v2985, 0.0
    %v2994 = vsel %vm2986, 1, 0
    %v2995 = vsel %vm2987, 1, 0
    %v2996 = vsel %vm2988, 1, 0
    %v2997 = vsel %vm2989, 1, 0
    %v2998 = vsel %vm2990, 1, 0
    %v2999 = vsel %vm2991, 1, 0
    %v3000 = vsel %vm2992, 1, 0
    %v3001 = vsel %vm2993, 1, 0
    %v3002 = vcvt.s32.f32 %v2994
    %v3003 = vcvt.s32.f32 %v2995
    %v3004 = vcvt.s32.f32 %v2996
    %v3005 = vcvt.s32.f32 %v2997
    %v3006 = vcvt.s32.f32 %v2998
    %v3007 = vcvt.s32.f32 %v2999
    %v3008 = vcvt.s32.f32 %v3000
    %v3009 = vcvt.s32.f32 %v3001
    %v3010 = vsel %vm1457, %v2978, 0.0
    %3011 = vadd.xlane.f32.xlu0 %v3010
    %v3012 = vpop.xlane.xlu0 %3011
    %v3013 = vsel %vm1457, %v2979, 0.0
    %3014 = vadd.xlane.f32.xlu0 %v3013
    %v3015 = vpop.xlane.xlu0 %3014
    %v3016 = vsel %vm1457, %v2980, 0.0
    %3017 = vadd.xlane.f32.xlu0 %v3016
    %v3018 = vpop.xlane.xlu0 %3017
    %v3019 = vsel %vm1457, %v2981, 0.0
    %3020 = vadd.xlane.f32.xlu0 %v3019
    %v3021 = vpop.xlane.xlu0 %3020
    %v3022 = vsel %vm1457, %v2982, 0.0
    %3023 = vadd.xlane.f32.xlu0 %v3022
    %v3024 = vpop.xlane.xlu0 %3023
    %v3025 = vsel %vm1457, %v2983, 0.0
    %3026 = vadd.xlane.f32.xlu0 %v3025
    %v3027 = vpop.xlane.xlu0 %3026
    %v3028 = vsel %vm1457, %v2984, 0.0
    %3029 = vadd.xlane.f32.xlu0 %v3028
    %v3030 = vpop.xlane.xlu0 %3029
    %v3031 = vsel %vm1457, %v2985, 0.0
    %3032 = vadd.xlane.f32.xlu0 %v3031
    %v3033 = vpop.xlane.xlu0 %3032
    %v3034 = vrot.slane %v3012, 4
    %v3035 = vadd.f32 %v3012, %v3034
    %v3036 = vrot.slane %v3035, 2
    %v3037 = vadd.f32 %v3035, %v3036
    %v3038 = vrot.slane %v3037, 1
    %v3039 = vadd.f32 %v3037, %v3038
    %v3040 = vrot.slane %v3015, 4
    %v3041 = vadd.f32 %v3015, %v3040
    %v3042 = vrot.slane %v3041, 2
    %v3043 = vadd.f32 %v3041, %v3042
    %v3044 = vrot.slane %v3043, 1
    %v3045 = vadd.f32 %v3043, %v3044
    %v3046 = vrot.slane %v3018, 4
    %v3047 = vadd.f32 %v3018, %v3046
    %v3048 = vrot.slane %v3047, 2
    %v3049 = vadd.f32 %v3047, %v3048
    %v3050 = vrot.slane %v3049, 1
    %v3051 = vadd.f32 %v3049, %v3050
    %v3052 = vrot.slane %v3021, 4
    %v3053 = vadd.f32 %v3021, %v3052
    %v3054 = vrot.slane %v3053, 2
    %v3055 = vadd.f32 %v3053, %v3054
    %v3056 = vrot.slane %v3055, 1
    %v3057 = vadd.f32 %v3055, %v3056
    %v3058 = vrot.slane %v3024, 4
    %v3059 = vadd.f32 %v3024, %v3058
    %v3060 = vrot.slane %v3059, 2
    %v3061 = vadd.f32 %v3059, %v3060
    %v3062 = vrot.slane %v3061, 1
    %v3063 = vadd.f32 %v3061, %v3062
    %v3064 = vrot.slane %v3027, 4
    %v3065 = vadd.f32 %v3027, %v3064
    %v3066 = vrot.slane %v3065, 2
    %v3067 = vadd.f32 %v3065, %v3066
    %v3068 = vrot.slane %v3067, 1
    %v3069 = vadd.f32 %v3067, %v3068
    %v3070 = vrot.slane %v3030, 4
    %v3071 = vadd.f32 %v3030, %v3070
    %v3072 = vrot.slane %v3071, 2
    %v3073 = vadd.f32 %v3071, %v3072
    %v3074 = vrot.slane %v3073, 1
    %v3075 = vadd.f32 %v3073, %v3074
    %v3076 = vrot.slane %v3033, 4
    %v3077 = vadd.f32 %v3033, %v3076
    %v3078 = vrot.slane %v3077, 2
    %v3079 = vadd.f32 %v3077, %v3078
    %v3080 = vrot.slane %v3079, 1
    %v3081 = vadd.f32 %v3079, %v3080
    %v3082 = vsel %vm1457, %v3002, 0.0
    %3083 = vadd.xlane.f32.xlu0 %v3082
    %v3084 = vpop.xlane.xlu0 %3083
    %v3085 = vsel %vm1457, %v3003, 0.0
    %3086 = vadd.xlane.f32.xlu0 %v3085
    %v3087 = vpop.xlane.xlu0 %3086
    %v3088 = vsel %vm1457, %v3004, 0.0
    %3089 = vadd.xlane.f32.xlu0 %v3088
    %v3090 = vpop.xlane.xlu0 %3089
    %v3091 = vsel %vm1457, %v3005, 0.0
    %3092 = vadd.xlane.f32.xlu0 %v3091
    %v3093 = vpop.xlane.xlu0 %3092
    %v3094 = vsel %vm1457, %v3006, 0.0
    %3095 = vadd.xlane.f32.xlu0 %v3094
    %v3096 = vpop.xlane.xlu0 %3095
    %v3097 = vsel %vm1457, %v3007, 0.0
    %3098 = vadd.xlane.f32.xlu0 %v3097
    %v3099 = vpop.xlane.xlu0 %3098
    %v3100 = vsel %vm1457, %v3008, 0.0
    %3101 = vadd.xlane.f32.xlu0 %v3100
    %v3102 = vpop.xlane.xlu0 %3101
    %v3103 = vsel %vm1457, %v3009, 0.0
    %3104 = vadd.xlane.f32.xlu0 %v3103
    %v3105 = vpop.xlane.xlu0 %3104
    %v3106 = vrot.slane %v3084, 4
    %v3107 = vadd.f32 %v3084, %v3106
    %v3108 = vrot.slane %v3107, 2
    %v3109 = vadd.f32 %v3107, %v3108
    %v3110 = vrot.slane %v3109, 1
    %v3111 = vadd.f32 %v3109, %v3110
    %v3112 = vrot.slane %v3087, 4
    %v3113 = vadd.f32 %v3087, %v3112
    %v3114 = vrot.slane %v3113, 2
    %v3115 = vadd.f32 %v3113, %v3114
    %v3116 = vrot.slane %v3115, 1
    %v3117 = vadd.f32 %v3115, %v3116
    %v3118 = vrot.slane %v3090, 4
    %v3119 = vadd.f32 %v3090, %v3118
    %v3120 = vrot.slane %v3119, 2
    %v3121 = vadd.f32 %v3119, %v3120
    %v3122 = vrot.slane %v3121, 1
    %v3123 = vadd.f32 %v3121, %v3122
    %v3124 = vrot.slane %v3093, 4
    %v3125 = vadd.f32 %v3093, %v3124
    %v3126 = vrot.slane %v3125, 2
    %v3127 = vadd.f32 %v3125, %v3126
    %v3128 = vrot.slane %v3127, 1
    %v3129 = vadd.f32 %v3127, %v3128
    %v3130 = vrot.slane %v3096, 4
    %v3131 = vadd.f32 %v3096, %v3130
    %v3132 = vrot.slane %v3131, 2
    %v3133 = vadd.f32 %v3131, %v3132
    %v3134 = vrot.slane %v3133, 1
    %v3135 = vadd.f32 %v3133, %v3134
    %v3136 = vrot.slane %v3099, 4
    %v3137 = vadd.f32 %v3099, %v3136
    %v3138 = vrot.slane %v3137, 2
    %v3139 = vadd.f32 %v3137, %v3138
    %v3140 = vrot.slane %v3139, 1
    %v3141 = vadd.f32 %v3139, %v3140
    %v3142 = vrot.slane %v3102, 4
    %v3143 = vadd.f32 %v3102, %v3142
    %v3144 = vrot.slane %v3143, 2
    %v3145 = vadd.f32 %v3143, %v3144
    %v3146 = vrot.slane %v3145, 1
    %v3147 = vadd.f32 %v3145, %v3146
    %v3148 = vrot.slane %v3105, 4
    %v3149 = vadd.f32 %v3105, %v3148
    %v3150 = vrot.slane %v3149, 2
    %v3151 = vadd.f32 %v3149, %v3150
    %v3152 = vrot.slane %v3151, 1
    %v3153 = vadd.f32 %v3151, %v3152
    %vm3154 = vcmp.gt.f32.partialorder %v3039, 0.0
    %vm3155 = vcmp.gt.f32.partialorder %v3045, 0.0
    %vm3156 = vcmp.gt.f32.partialorder %v3051, 0.0
    %vm3157 = vcmp.gt.f32.partialorder %v3057, 0.0
    %vm3158 = vcmp.gt.f32.partialorder %v3063, 0.0
    %vm3159 = vcmp.gt.f32.partialorder %v3069, 0.0
    %vm3160 = vcmp.gt.f32.partialorder %v3075, 0.0
    %vm3161 = vcmp.gt.f32.partialorder %v3081, 0.0
    %v3162 = vsel %vm3154, %v3039, 1.0
    %v3163 = vsel %vm3155, %v3045, 1.0
    %v3164 = vsel %vm3156, %v3051, 1.0
    %v3165 = vsel %vm3157, %v3057, 1.0
    %v3166 = vsel %vm3158, %v3063, 1.0
    %v3167 = vsel %vm3159, %v3069, 1.0
    %v3168 = vsel %vm3160, %v3075, 1.0
    %v3169 = vsel %vm3161, %v3081, 1.0
    %v3170 = vrcp.pop %v3162
    %v3171 = vmul.f32 %v3111, %v3170
    %v3172 = vrcp.pop %v3163
    %v3173 = vmul.f32 %v3117, %v3172
    %v3174 = vrcp.pop %v3164
    %v3175 = vmul.f32 %v3123, %v3174
    %v3176 = vrcp.pop %v3165
    %v3177 = vmul.f32 %v3129, %v3176
    %v3178 = vrcp.pop %v3166
    %v3179 = vmul.f32 %v3135, %v3178
    %v3180 = vrcp.pop %v3167
    %v3181 = vmul.f32 %v3141, %v3180
    %v3182 = vrcp.pop %v3168
    %v3183 = vmul.f32 %v3147, %v3182
    %v3184 = vrcp.pop %v3169
    %v3185 = vmul.f32 %v3153, %v3184
    %v3186 = vmul.f32 %v2978, %v3171
    %v3187 = vmul.f32 %v2979, %v3173
    %v3188 = vmul.f32 %v2980, %v3175
    %v3189 = vmul.f32 %v2981, %v3177
    %v3190 = vmul.f32 %v2982, %v3179
    %v3191 = vmul.f32 %v2983, %v3181
    %v3192 = vmul.f32 %v2984, %v3183
    %v3193 = vmul.f32 %v2985, %v3185
    %v3194 = vsub.f32 %v1634, %v3186
    %v3195 = vsub.f32 %v1635, %v3187
    %v3196 = vsub.f32 %v1636, %v3188
    %v3197 = vsub.f32 %v1637, %v3189
    %v3198 = vsub.f32 %v1638, %v3190
    %v3199 = vsub.f32 %v1639, %v3191
    %v3200 = vsub.f32 %v1640, %v3192
    %v3201 = vsub.f32 %v1641, %v3193
    %v3202 = vand.u32 2147483647, %v3194
    %v3203 = vand.u32 2147483647, %v3195
    %v3204 = vand.u32 2147483647, %v3196
    %v3205 = vand.u32 2147483647, %v3197
    %v3206 = vand.u32 2147483647, %v3198
    %v3207 = vand.u32 2147483647, %v3199
    %v3208 = vand.u32 2147483647, %v3200
    %v3209 = vand.u32 2147483647, %v3201
    %vm3210 = vcmp.lt.f32.partialorder %v3202, 1.0
    %vm3211 = vcmp.lt.f32.partialorder %v3203, 1.0
    %vm3212 = vcmp.lt.f32.partialorder %v3204, 1.0
    %vm3213 = vcmp.lt.f32.partialorder %v3205, 1.0
    %vm3214 = vcmp.lt.f32.partialorder %v3206, 1.0
    %vm3215 = vcmp.lt.f32.partialorder %v3207, 1.0
    %vm3216 = vcmp.lt.f32.partialorder %v3208, 1.0
    %vm3217 = vcmp.lt.f32.partialorder %v3209, 1.0
    %v3218 = vmul.f32 %v3194, 0.5
    %v3219 = vmul.f32 %v3195, 0.5
    %v3220 = vmul.f32 %v3196, 0.5
    %v3221 = vmul.f32 %v3197, 0.5
    %v3222 = vmul.f32 %v3198, 0.5
    %v3223 = vmul.f32 %v3199, 0.5
    %v3224 = vmul.f32 %v3200, 0.5
    %v3225 = vmul.f32 %v3201, 0.5
    %v3226 = vmul.f32 %v3218, %v3194
    %v3227 = vmul.f32 %v3219, %v3195
    %v3228 = vmul.f32 %v3220, %v3196
    %v3229 = vmul.f32 %v3221, %v3197
    %v3230 = vmul.f32 %v3222, %v3198
    %v3231 = vmul.f32 %v3223, %v3199
    %v3232 = vmul.f32 %v3224, %v3200
    %v3233 = vmul.f32 %v3225, %v3201
    %v3234 = vsub.f32 %v3202, 0.5
    %v3235 = vsub.f32 %v3203, 0.5
    %v3236 = vsub.f32 %v3204, 0.5
    %v3237 = vsub.f32 %v3205, 0.5
    %v3238 = vsub.f32 %v3206, 0.5
    %v3239 = vsub.f32 %v3207, 0.5
    %v3240 = vsub.f32 %v3208, 0.5
    %v3241 = vsub.f32 %v3209, 0.5
    %v3242 = vsel %vm3210, %v3226, %v3234
    %v3243 = vsel %vm3211, %v3227, %v3235
    %v3244 = vsel %vm3212, %v3228, %v3236
    %v3245 = vsel %vm3213, %v3229, %v3237
    %v3246 = vsel %vm3214, %v3230, %v3238
    %v3247 = vsel %vm3215, %v3231, %v3239
    %v3248 = vsel %vm3216, %v3232, %v3240
    %v3249 = vsel %vm3217, %v3233, %v3241
    %v3250 = vsel %vm1457, %v3242, 0.0
    %3251 = vadd.xlane.f32.xlu0 %v3250
    %v3252 = vpop.xlane.xlu0 %3251
    %v3253 = vsel %vm1457, %v3243, 0.0
    %3254 = vadd.xlane.f32.xlu0 %v3253
    %v3255 = vpop.xlane.xlu0 %3254
    %v3256 = vsel %vm1457, %v3244, 0.0
    %3257 = vadd.xlane.f32.xlu0 %v3256
    %v3258 = vpop.xlane.xlu0 %3257
    %v3259 = vsel %vm1457, %v3245, 0.0
    %3260 = vadd.xlane.f32.xlu0 %v3259
    %v3261 = vpop.xlane.xlu0 %3260
    %v3262 = vsel %vm1457, %v3246, 0.0
    %3263 = vadd.xlane.f32.xlu0 %v3262
    %v3264 = vpop.xlane.xlu0 %3263
    %v3265 = vsel %vm1457, %v3247, 0.0
    %3266 = vadd.xlane.f32.xlu0 %v3265
    %v3267 = vpop.xlane.xlu0 %3266
    %v3268 = vsel %vm1457, %v3248, 0.0
    %3269 = vadd.xlane.f32.xlu0 %v3268
    %v3270 = vpop.xlane.xlu0 %3269
    %v3271 = vsel %vm1457, %v3249, 0.0
    %3272 = vadd.xlane.f32.xlu0 %v3271
    %v3273 = vpop.xlane.xlu0 %3272
    %v3274 = vrot.slane %v3252, 4
    %v3275 = vadd.f32 %v3252, %v3274
    %v3276 = vrot.slane %v3275, 2
    %v3277 = vadd.f32 %v3275, %v3276
    %v3278 = vrot.slane %v3277, 1
    %v3279 = vadd.f32 %v3277, %v3278
    %v3280 = vrot.slane %v3255, 4
    %v3281 = vadd.f32 %v3255, %v3280
    %v3282 = vrot.slane %v3281, 2
    %v3283 = vadd.f32 %v3281, %v3282
    %v3284 = vrot.slane %v3283, 1
    %v3285 = vadd.f32 %v3283, %v3284
    %v3286 = vrot.slane %v3258, 4
    %v3287 = vadd.f32 %v3258, %v3286
    %v3288 = vrot.slane %v3287, 2
    %v3289 = vadd.f32 %v3287, %v3288
    %v3290 = vrot.slane %v3289, 1
    %v3291 = vadd.f32 %v3289, %v3290
    %v3292 = vrot.slane %v3261, 4
    %v3293 = vadd.f32 %v3261, %v3292
    %v3294 = vrot.slane %v3293, 2
    %v3295 = vadd.f32 %v3293, %v3294
    %v3296 = vrot.slane %v3295, 1
    %v3297 = vadd.f32 %v3295, %v3296
    %v3298 = vrot.slane %v3264, 4
    %v3299 = vadd.f32 %v3264, %v3298
    %v3300 = vrot.slane %v3299, 2
    %v3301 = vadd.f32 %v3299, %v3300
    %v3302 = vrot.slane %v3301, 1
    %v3303 = vadd.f32 %v3301, %v3302
    %v3304 = vrot.slane %v3267, 4
    %v3305 = vadd.f32 %v3267, %v3304
    %v3306 = vrot.slane %v3305, 2
    %v3307 = vadd.f32 %v3305, %v3306
    %v3308 = vrot.slane %v3307, 1
    %v3309 = vadd.f32 %v3307, %v3308
    %v3310 = vrot.slane %v3270, 4
    %v3311 = vadd.f32 %v3270, %v3310
    %v3312 = vrot.slane %v3311, 2
    %v3313 = vadd.f32 %v3311, %v3312
    %v3314 = vrot.slane %v3313, 1
    %v3315 = vadd.f32 %v3313, %v3314
    %v3316 = vrot.slane %v3273, 4
    %v3317 = vadd.f32 %v3273, %v3316
    %v3318 = vrot.slane %v3317, 2
    %v3319 = vadd.f32 %v3317, %v3318
    %v3320 = vrot.slane %v3319, 1
    %v3321 = vadd.f32 %v3319, %v3320
    %vm3322 = vmand %vm1271, %vm2826
    %vm3323 = vmand %vm1272, %vm2827
    %vm3324 = vmand %vm1273, %vm2828
    %vm3325 = vmand %vm1274, %vm2829
    %vm3326 = vmand %vm1275, %vm2830
    %vm3327 = vmand %vm1276, %vm2831
    %vm3328 = vmand %vm1277, %vm2832
    %vm3329 = vmand %vm1278, %vm2833
    %v3330 = vsel %vm3322, 1, 0
    %v3331 = vsel %vm3323, 1, 0
    %v3332 = vsel %vm3324, 1, 0
    %v3333 = vsel %vm3325, 1, 0
    %v3334 = vsel %vm3326, 1, 0
    %v3335 = vsel %vm3327, 1, 0
    %v3336 = vsel %vm3328, 1, 0
    %v3337 = vsel %vm3329, 1, 0
    %v3338 = vcvt.s32.f32 %v3330
    %v3339 = vcvt.s32.f32 %v3331
    %v3340 = vcvt.s32.f32 %v3332
    %v3341 = vcvt.s32.f32 %v3333
    %v3342 = vcvt.s32.f32 %v3334
    %v3343 = vcvt.s32.f32 %v3335
    %v3344 = vcvt.s32.f32 %v3336
    %v3345 = vcvt.s32.f32 %v3337
    %v3346 = vrot.slane %v3338, 4
    %v3347 = vadd.f32 %v3338, %v3346
    %v3348 = vrot.slane %v3347, 2
    %v3349 = vadd.f32 %v3347, %v3348
    %v3350 = vrot.slane %v3349, 1
    %v3351 = vadd.f32 %v3349, %v3350
    %v3352 = vrot.slane %v3339, 4
    %v3353 = vadd.f32 %v3339, %v3352
    %v3354 = vrot.slane %v3353, 2
    %v3355 = vadd.f32 %v3353, %v3354
    %v3356 = vrot.slane %v3355, 1
    %v3357 = vadd.f32 %v3355, %v3356
    %v3358 = vrot.slane %v3340, 4
    %v3359 = vadd.f32 %v3340, %v3358
    %v3360 = vrot.slane %v3359, 2
    %v3361 = vadd.f32 %v3359, %v3360
    %v3362 = vrot.slane %v3361, 1
    %v3363 = vadd.f32 %v3361, %v3362
    %v3364 = vrot.slane %v3341, 4
    %v3365 = vadd.f32 %v3341, %v3364
    %v3366 = vrot.slane %v3365, 2
    %v3367 = vadd.f32 %v3365, %v3366
    %v3368 = vrot.slane %v3367, 1
    %v3369 = vadd.f32 %v3367, %v3368
    %v3370 = vrot.slane %v3342, 4
    %v3371 = vadd.f32 %v3342, %v3370
    %v3372 = vrot.slane %v3371, 2
    %v3373 = vadd.f32 %v3371, %v3372
    %v3374 = vrot.slane %v3373, 1
    %v3375 = vadd.f32 %v3373, %v3374
    %v3376 = vrot.slane %v3343, 4
    %v3377 = vadd.f32 %v3343, %v3376
    %v3378 = vrot.slane %v3377, 2
    %v3379 = vadd.f32 %v3377, %v3378
    %v3380 = vrot.slane %v3379, 1
    %v3381 = vadd.f32 %v3379, %v3380
    %v3382 = vrot.slane %v3344, 4
    %v3383 = vadd.f32 %v3344, %v3382
    %v3384 = vrot.slane %v3383, 2
    %v3385 = vadd.f32 %v3383, %v3384
    %v3386 = vrot.slane %v3385, 1
    %v3387 = vadd.f32 %v3385, %v3386
    %v3388 = vrot.slane %v3345, 4
    %v3389 = vadd.f32 %v3345, %v3388
    %v3390 = vrot.slane %v3389, 2
    %v3391 = vadd.f32 %v3389, %v3390
    %v3392 = vrot.slane %v3391, 1
    %v3393 = vadd.f32 %v3391, %v3392
    %v3394 = vmul.f32 %v3351, %v3351
    %v3395 = vmul.f32 %v3357, %v3357
    %v3396 = vmul.f32 %v3363, %v3363
    %v3397 = vmul.f32 %v3369, %v3369
    %v3398 = vmul.f32 %v3375, %v3375
    %v3399 = vmul.f32 %v3381, %v3381
    %v3400 = vmul.f32 %v3387, %v3387
    %v3401 = vmul.f32 %v3393, %v3393
    %v3402 = vmax.f32 %v3394, 1.0
    %v3403 = vmax.f32 %v3395, 1.0
    %v3404 = vmax.f32 %v3396, 1.0
    %v3405 = vmax.f32 %v3397, 1.0
    %v3406 = vmax.f32 %v3398, 1.0
    %v3407 = vmax.f32 %v3399, 1.0
    %v3408 = vmax.f32 %v3400, 1.0
    %v3409 = vmax.f32 %v3401, 1.0
    %v3410 = vrcp.pop %v3402
    %v3411 = vmul.f32 %v3279, %v3410
    %v3412 = vrcp.pop %v3403
    %v3413 = vmul.f32 %v3285, %v3412
    %v3414 = vrcp.pop %v3404
    %v3415 = vmul.f32 %v3291, %v3414
    %v3416 = vrcp.pop %v3405
    %v3417 = vmul.f32 %v3297, %v3416
    %v3418 = vrcp.pop %v3406
    %v3419 = vmul.f32 %v3303, %v3418
    %v3420 = vrcp.pop %v3407
    %v3421 = vmul.f32 %v3309, %v3420
    %v3422 = vrcp.pop %v3408
    %v3423 = vmul.f32 %v3315, %v3422
    %v3424 = vrcp.pop %v3409
    %v3425 = vmul.f32 %v3321, %v3424
    %v3426 = vadd.f32 %v3411, %v3413
    %v3427 = vadd.f32 %v3426, %v3415
    %v3428 = vadd.f32 %v3427, %v3417
    %v3429 = vadd.f32 %v3428, %v3419
    %v3430 = vadd.f32 %v3429, %v3421
    %v3431 = vadd.f32 %v3430, %v3423
    %v3432 = vadd.f32 %v3431, %v3425
    %vm3433 = vcmask 0
    %3434 = vst.msk [vmem:[#allocation5] sm:$0x1] %vm3433, %v3432
    // Predicated region
    $region18: #{tpu_custom_call.1} parent=1 // pred_check
      _
    $region19: #{tpu_custom_call.1} parent=1 // pred_check_branch
      %3436 = sbr.rel (0) target = $region21
    $region20: #{tpu_custom_call.1} parent=1 // pred_region
      %s3438 = ssub.s32 16, 16
      %3439 = vsyncadd [#allocation4], %s3438
      %s3441 = sshll.u32 [#allocation5], 4
      %s3442 = int_to_ptr.vmem [resolvable:$true] %s3441
      %3444 = dma.vmem_to_hbm [thread:$0]  %s3442, 16, %s3, [#allocation4]
    $region21: #{tpu_custom_call.1} parent=1 // pred_fallthru
      _
    // Predicated region
    $region22: #{tpu_custom_call.1} parent=1 // pred_check
      _
    $region23: #{tpu_custom_call.1} parent=1 // pred_check_branch
      %3446 = sbr.rel (0) target = $region25
    $region24: #{tpu_custom_call.1} parent=1 // pred_region
      %3447 = dma.done [#allocation4], 16
    $region25: #{tpu_custom_call.1} parent=1 // pred_fallthru
      _
    %3448 = vsyncpa [#allocation3], 1
    %3449 = vsyncpa [#allocation4], 1

</llo_original>
